<compile_context>
chip_gen: v5e
topology: v5e:2x2
jax: 0.10.0
libtpu: 0.0.40
codegen_flags: <defaults>
</compile_context>

<pallas_src>
import functools
import math

import jax
import jax.numpy as jnp
from jax.experimental import pallas as pl
from jax.experimental.pallas import tpu as pltpu

# bf16 MXU operands (f32 accumulation).  Set to jnp.float32 for bit-closer
# agreement with an all-f32 reference.
MATMUL_DTYPE = jnp.bfloat16

# Per conv layer: (C_in, H_in, W_in, C_out, kernel).
_CONV_CFG = (
    (3, 32, 32, 6, 9),     # conv1  : 32x32 -> 24x24
    (6, 24, 24, 6, 9),     # conv1b : 24x24 -> 16x16  (+ReLU)
    (6, 16, 16, 16, 7),    # conv2  : 16x16 -> 10x10
    (16, 10, 10, 16, 7),   # conv2b : 10x10 ->  4x 4  (+ReLU)
)
_CONV_RELU = (False, True, False, True)


# ----------------------------------------------------------------------------
# Fused kernel: one batch tile per grid step, everything VMEM-resident.
# ----------------------------------------------------------------------------
def _fused_cnn_kernel(x_ref,
                      cw1, cb1, cw2, cb2, cw3, cb3, cw4, cb4,
                      fw1, fb1, fw2, fb2, fw3, fb3,
                      out_ref, *, batch_tile):
    conv_w = (cw1, cw2, cw3, cw4)
    conv_b = (cb1, cb2, cb3, cb4)

    x_blk = x_ref[...]                                   # (bt, H0, C0*W0) bf16
    fc_in = []
    for b in range(batch_tile):
        a = x_blk[b]                                     # (H, C*W), (c,w) minor
        for li, (C, H, W, OC, k) in enumerate(_CONV_CFG):
            OH, OW = H - k + 1, W - k + 1
            wband = conv_w[li][...]                      # (k, C*W, OC*OW) bf16
            acc = jnp.zeros((OH, OC * OW), jnp.float32)
            for kh in range(k):                          # k row-shifted matmuls
                acc = acc + jnp.dot(a[kh:kh + OH, :], wband[kh],
                                    preferred_element_type=jnp.float32)
            acc = acc + conv_b[li][...]                  # (1, OC*OW) bias row
            if _CONV_RELU[li]:
                acc = jnp.maximum(acc, 0.0)
            a = acc.astype(MATMUL_DTYPE)                 # next layer's input
        fc_in.append(a)                                  # (4, 16*4) = (4, 64)

    # Batch the fused FC chain over the tile.
    if batch_tile == 1:
        xf = fc_in[0][None]                              # (1, 4, 64)
    else:
        xf = jnp.stack(fc_in, axis=0)                    # (bt, 4, 64)

    # fc1 as a sum of 4 row-dots (avoids any in-kernel reshape).
    w1 = fw1[...]                                        # (4, 64, 120) bf16
    h = jnp.zeros((batch_tile, w1.shape[2]), jnp.float32)
    for r in range(w1.shape[0]):
        h = h + jnp.dot(xf[:, r, :], w1[r], preferred_element_type=jnp.float32)
    h = jnp.maximum(h + fb1[...], 0.0).astype(MATMUL_DTYPE)

    h = jnp.dot(h, fw2[...], preferred_element_type=jnp.float32) + fb2[...]
    h = jnp.maximum(h, 0.0).astype(MATMUL_DTYPE)

    logits = jnp.dot(h, fw3[...], preferred_element_type=jnp.float32) + fb3[...]
    out_ref[...] = logits[:, None, :].astype(out_ref.dtype)   # (bt, 1, 10)


# ----------------------------------------------------------------------------
# One-time weight packing (PyTorch layouts -> kernel layouts)
# ----------------------------------------------------------------------------
def pack_params(params):
    packed = {}
    for li, name in enumerate(("conv1", "conv1b", "conv2", "conv2b")):
        C, H, W, OC, k = _CONV_CFG[li]
        w = params[name + "_w"]                          # (OC, C, k, k)
        b = params[name + "_b"]                          # (OC,)
        OW = W - k + 1
        # sel[kw, w_in, ow] = 1 iff w_in == ow + kw   (valid cross-correlation)
        sel = (jnp.arange(W)[None, :, None]
               == jnp.arange(OW)[None, None, :] + jnp.arange(k)[:, None, None]
               ).astype(jnp.float32)                     # (k, W, OW)
        band = jnp.einsum("ochk,kWv->hcWov", w, sel)     # (k, C, W, OC, OW)
        packed[name + "_wband"] = band.reshape(k, C * W, OC * OW).astype(MATMUL_DTYPE)
        packed[name + "_brow"] = jnp.repeat(b, OW)[None, :].astype(jnp.float32)

    # fc1 permuted once so it accepts the kernel's (h, c, w) flatten order
    # instead of torch's (c, h, w); stored as (4, 64, 120) for 4 row-dots.
    w1 = params["fc1_w"].reshape(120, 16, 4, 4).transpose(2, 1, 3, 0)  # (h,c,w,out)
    packed["fc1_w"] = w1.reshape(4, 16 * 4, 120).astype(MATMUL_DTYPE)
    packed["fc1_b"] = params["fc1_b"][None, :].astype(jnp.float32)
    packed["fc2_w"] = params["fc2_w"].T.astype(MATMUL_DTYPE)           # (120, 84)
    packed["fc2_b"] = params["fc2_b"][None, :].astype(jnp.float32)
    packed["fc3_w"] = params["fc3_w"].T.astype(MATMUL_DTYPE)           # (84, 10)
    packed["fc3_b"] = params["fc3_b"][None, :].astype(jnp.float32)
    return packed


# ----------------------------------------------------------------------------
# Forward wrapper: grid over batch tiles, everything else whole-array VMEM.
# ----------------------------------------------------------------------------
def cifar_cnn_nopool_forward(packed, x, *, batch_tile=1):
    """x: (B, 3, 32, 32) float32 -> logits (B, 10) float32."""
    B, C0, H0, W0 = x.shape
    assert (C0, H0, W0) == (3, 32, 32), "CIFAR_CNN_nopool requires 3x32x32 input"
    bt = max(1, min(batch_tile, B))
    pad = (-B) % bt
    if pad:
        x = jnp.concatenate([x, jnp.zeros((pad, C0, H0, W0), x.dtype)], axis=0)
    Bp = B + pad

    # Single layout prep (cheap XLA op, no k^2 expansion):
    # NCHW -> (B, H, C*W) with (c, w) minor order, cast to matmul dtype.
    xp = x.transpose(0, 2, 1, 3).reshape(Bp, H0, C0 * W0).astype(MATMUL_DTYPE)

    weights = [
        packed["conv1_wband"], packed["conv1_brow"],
        packed["conv1b_wband"], packed["conv1b_brow"],
        packed["conv2_wband"], packed["conv2_brow"],
        packed["conv2b_wband"], packed["conv2b_brow"],
        packed["fc1_w"], packed["fc1_b"],
        packed["fc2_w"], packed["fc2_b"],
        packed["fc3_w"], packed["fc3_b"],
    ]

    in_specs = [pl.BlockSpec((bt, H0, C0 * W0), lambda i: (i, 0, 0))]
    in_specs += [pl.BlockSpec(w.shape, lambda i, n=w.ndim: (0,) * n)
                 for w in weights]

    out = pl.pallas_call(
        functools.partial(_fused_cnn_kernel, batch_tile=bt),
        out_shape=jax.ShapeDtypeStruct((Bp, 1, 10), jnp.float32),
        grid=(Bp // bt,),
        in_specs=in_specs,
        out_specs=pl.BlockSpec((bt, 1, 10), lambda i: (i, 0, 0)),
        compiler_params=pltpu.CompilerParams(
            dimension_semantics=("parallel",)),
    )(xp, *weights)
    return out.reshape(Bp, 10)[:B]


# ----------------------------------------------------------------------------
# Parameter init (deterministic, PyTorch-style uniform(-1/sqrt(fan_in), ...))
# ----------------------------------------------------------------------------
def _uniform(key, shape, bound):
    return jax.random.uniform(key, shape, jnp.float32, -bound, bound)


def init_params(key):
    keys = jax.random.split(key, 14)
    p = {}

    def conv_init(kw, kb, oc, ic, k):
        bound = 1.0 / math.sqrt(ic * k * k)
        return _uniform(kw, (oc, ic, k, k), bound), _uniform(kb, (oc,), bound)

    def fc_init(kw, kb, out_f, in_f):
        bound = 1.0 / math.sqrt(in_f)
        return _uniform(kw, (out_f, in_f), bound), _uniform(kb, (out_f,), bound)

    p["conv1_w"],  p["conv1_b"]  = conv_init(keys[0],  keys[1],  6,  3, 9)
    p["conv1b_w"], p["conv1b_b"] = conv_init(keys[2],  keys[3],  6,  6, 9)
    p["conv2_w"],  p["conv2_b"]  = conv_init(keys[4],  keys[5],  16, 6, 7)
    p["conv2b_w"], p["conv2b_b"] = conv_init(keys[6],  keys[7],  16, 16, 7)
    p["fc1_w"], p["fc1_b"] = fc_init(keys[8],  keys[9],  120, 16 * 4 * 4)
    p["fc2_w"], p["fc2_b"] = fc_init(keys[10], keys[11], 84, 120)
    p["fc3_w"], p["fc3_b"] = fc_init(keys[12], keys[13], 10, 84)
    return p


# ----------------------------------------------------------------------------
# Plain-XLA f32 reference (independent code path) for a sanity check.
# ----------------------------------------------------------------------------
def _reference_forward(params, x):
    def conv(x, w, b):
        y = jax.lax.conv_general_dilated(
            x, w, window_strides=(1, 1), padding="VALID",
            dimension_numbers=("NCHW", "OIHW", "NCHW"))
        return y + b[None, :, None, None]

    x = conv(x, params["conv1_w"], params["conv1_b"])
    x = jnp.maximum(conv(x, params["conv1b_w"], params["conv1b_b"]), 0.0)
    x = conv(x, params["conv2_w"], params["conv2_b"])
    x = jnp.maximum(conv(x, params["conv2b_w"], params["conv2b_b"]), 0.0)
    x = x.reshape(x.shape[0], -1)                       # NCHW flatten, like torch
    x = jnp.maximum(x @ params["fc1_w"].T + params["fc1_b"], 0.0)
    x = jnp.maximum(x @ params["fc2_w"].T + params["fc2_b"], 0.0)
    return x @ params["fc3_w"].T + params["fc3_b"]


if __name__ == "__main__":
    key = jax.random.PRNGKey(0)
    k_params, k_x = jax.random.split(key)
    params = init_params(k_params)
    packed = pack_params(params)

    # CIFAR-shaped input (3x32x32 required by the 16*4*4 flatten), batch=2.
    x = jax.random.normal(k_x, (2, 3, 32, 32), dtype=jnp.float32)

    fwd = jax.jit(functools.partial(cifar_cnn_nopool_forward, batch_tile=1))
    out = jax.block_until_ready(fwd(packed, x))
    assert out.shape == (2, 10), out.shape
    assert out.dtype == jnp.float32

    ref = _reference_forward(params, x)
    max_err = float(jnp.max(jnp.abs(out - ref)))
    assert max_err < 5e-2, f"max abs err {max_err}"

    print("KERNEL_OK")
</pallas_src>

<mosaic_0001>
module attributes {stable_mosaic.version = 11 : i64} {
  func.func @_fused_cnn_kernel(%arg0: i32, %arg1: memref<1x32x96xbf16, #tpu.memory_space<vmem>>, %arg2: memref<9x96x144xbf16, #tpu.memory_space<vmem>>, %arg3: memref<1x144xf32, #tpu.memory_space<vmem>>, %arg4: memref<9x144x96xbf16, #tpu.memory_space<vmem>>, %arg5: memref<1x96xf32, #tpu.memory_space<vmem>>, %arg6: memref<7x96x160xbf16, #tpu.memory_space<vmem>>, %arg7: memref<1x160xf32, #tpu.memory_space<vmem>>, %arg8: memref<7x160x64xbf16, #tpu.memory_space<vmem>>, %arg9: memref<1x64xf32, #tpu.memory_space<vmem>>, %arg10: memref<4x64x120xbf16, #tpu.memory_space<vmem>>, %arg11: memref<1x120xf32, #tpu.memory_space<vmem>>, %arg12: memref<120x84xbf16, #tpu.memory_space<vmem>>, %arg13: memref<1x84xf32, #tpu.memory_space<vmem>>, %arg14: memref<84x10xbf16, #tpu.memory_space<vmem>>, %arg15: memref<1x10xf32, #tpu.memory_space<vmem>>, %arg16: memref<1x1x10xf32, #tpu.memory_space<vmem>>) attributes {dimension_semantics = [#tpu.dimension_semantics<parallel>], iteration_bounds = array<i64: 2>, scalar_prefetch = 0 : i64, scratch_operands = 0 : i64, tpu.core_type = #tpu.core_type<tc>, window_params = [{transform_indices = @transform_0, window_bounds = array<i64: 1, 32, 96>}, {pipeline_mode = #tpu.pipeline_mode<synchronous>, transform_indices = @transform_1, window_bounds = array<i64: 9, 96, 144>}, {pipeline_mode = #tpu.pipeline_mode<synchronous>, transform_indices = @transform_2, window_bounds = array<i64: 1, 144>}, {pipeline_mode = #tpu.pipeline_mode<synchronous>, transform_indices = @transform_3, window_bounds = array<i64: 9, 144, 96>}, {pipeline_mode = #tpu.pipeline_mode<synchronous>, transform_indices = @transform_4, window_bounds = array<i64: 1, 96>}, {pipeline_mode = #tpu.pipeline_mode<synchronous>, transform_indices = @transform_5, window_bounds = array<i64: 7, 96, 160>}, {pipeline_mode = #tpu.pipeline_mode<synchronous>, transform_indices = @transform_6, window_bounds = array<i64: 1, 160>}, {pipeline_mode = #tpu.pipeline_mode<synchronous>, transform_indices = @transform_7, window_bounds = array<i64: 7, 160, 64>}, {pipeline_mode = #tpu.pipeline_mode<synchronous>, transform_indices = @transform_8, window_bounds = array<i64: 1, 64>}, {pipeline_mode = #tpu.pipeline_mode<synchronous>, transform_indices = @transform_9, window_bounds = array<i64: 4, 64, 120>}, {pipeline_mode = #tpu.pipeline_mode<synchronous>, transform_indices = @transform_10, window_bounds = array<i64: 1, 120>}, {pipeline_mode = #tpu.pipeline_mode<synchronous>, transform_indices = @transform_11, window_bounds = array<i64: 120, 84>}, {pipeline_mode = #tpu.pipeline_mode<synchronous>, transform_indices = @transform_12, window_bounds = array<i64: 1, 84>}, {pipeline_mode = #tpu.pipeline_mode<synchronous>, transform_indices = @transform_13, window_bounds = array<i64: 84, 10>}, {pipeline_mode = #tpu.pipeline_mode<synchronous>, transform_indices = @transform_14, window_bounds = array<i64: 1, 10>}, {transform_indices = @transform_15, window_bounds = array<i64: 1, 1, 10>}]} {
    %c0 = arith.constant 0 : index
    %c0_0 = arith.constant 0 : index
    %c0_1 = arith.constant 0 : index
    %0 = vector.load %arg1[%c0, %c0_0, %c0_1] : memref<1x32x96xbf16, #tpu.memory_space<vmem>>, vector<1x32x96xbf16>
    %1 = vector.shape_cast %0 : vector<1x32x96xbf16> to vector<32x96xbf16>
    %c0_2 = arith.constant 0 : index
    %c0_3 = arith.constant 0 : index
    %c0_4 = arith.constant 0 : index
    %2 = vector.load %arg2[%c0_2, %c0_3, %c0_4] : memref<9x96x144xbf16, #tpu.memory_space<vmem>>, vector<9x96x144xbf16>
    %cst = arith.constant 0.000000e+00 : f32
    %3 = vector.broadcast %cst : f32 to vector<24x144xf32>
    %4 = vector.extract_strided_slice %1 {offsets = [0, 0], sizes = [24, 96], strides = [1, 1]} : vector<32x96xbf16> to vector<24x96xbf16>
    %5 = vector.extract_strided_slice %2 {offsets = [0, 0, 0], sizes = [1, 96, 144], strides = [1, 1, 1]} : vector<9x96x144xbf16> to vector<1x96x144xbf16>
    %6 = vector.shape_cast %5 : vector<1x96x144xbf16> to vector<96x144xbf16>
    %cst_5 = arith.constant dense<0.000000e+00> : vector<24x144xf32>
    %7 = tpu.matmul %4, %6, %cst_5 {dimension_numbers = #tpu.dot_dimension_numbers<[1], [0], [0], [1], [0, 0, 1, 1], [], []>} : vector<24x96xbf16>, vector<96x144xbf16>, vector<24x144xf32> -> vector<24x144xf32>
    %8 = arith.addf %3, %7 : vector<24x144xf32>
    %9 = vector.extract_strided_slice %1 {offsets = [1, 0], sizes = [24, 96], strides = [1, 1]} : vector<32x96xbf16> to vector<24x96xbf16>
    %10 = vector.extract_strided_slice %2 {offsets = [1, 0, 0], sizes = [1, 96, 144], strides = [1, 1, 1]} : vector<9x96x144xbf16> to vector<1x96x144xbf16>
    %11 = vector.shape_cast %10 : vector<1x96x144xbf16> to vector<96x144xbf16>
    %cst_6 = arith.constant dense<0.000000e+00> : vector<24x144xf32>
    %12 = tpu.matmul %9, %11, %cst_6 {dimension_numbers = #tpu.dot_dimension_numbers<[1], [0], [0], [1], [0, 0, 1, 1], [], []>} : vector<24x96xbf16>, vector<96x144xbf16>, vector<24x144xf32> -> vector<24x144xf32>
    %13 = arith.addf %8, %12 : vector<24x144xf32>
    %14 = vector.extract_strided_slice %1 {offsets = [2, 0], sizes = [24, 96], strides = [1, 1]} : vector<32x96xbf16> to vector<24x96xbf16>
    %15 = vector.extract_strided_slice %2 {offsets = [2, 0, 0], sizes = [1, 96, 144], strides = [1, 1, 1]} : vector<9x96x144xbf16> to vector<1x96x144xbf16>
    %16 = vector.shape_cast %15 : vector<1x96x144xbf16> to vector<96x144xbf16>
    %cst_7 = arith.constant dense<0.000000e+00> : vector<24x144xf32>
    %17 = tpu.matmul %14, %16, %cst_7 {dimension_numbers = #tpu.dot_dimension_numbers<[1], [0], [0], [1], [0, 0, 1, 1], [], []>} : vector<24x96xbf16>, vector<96x144xbf16>, vector<24x144xf32> -> vector<24x144xf32>
    %18 = arith.addf %13, %17 : vector<24x144xf32>
    %19 = vector.extract_strided_slice %1 {offsets = [3, 0], sizes = [24, 96], strides = [1, 1]} : vector<32x96xbf16> to vector<24x96xbf16>
    %20 = vector.extract_strided_slice %2 {offsets = [3, 0, 0], sizes = [1, 96, 144], strides = [1, 1, 1]} : vector<9x96x144xbf16> to vector<1x96x144xbf16>
    %21 = vector.shape_cast %20 : vector<1x96x144xbf16> to vector<96x144xbf16>
    %cst_8 = arith.constant dense<0.000000e+00> : vector<24x144xf32>
    %22 = tpu.matmul %19, %21, %cst_8 {dimension_numbers = #tpu.dot_dimension_numbers<[1], [0], [0], [1], [0, 0, 1, 1], [], []>} : vector<24x96xbf16>, vector<96x144xbf16>, vector<24x144xf32> -> vector<24x144xf32>
    %23 = arith.addf %18, %22 : vector<24x144xf32>
    %24 = vector.extract_strided_slice %1 {offsets = [4, 0], sizes = [24, 96], strides = [1, 1]} : vector<32x96xbf16> to vector<24x96xbf16>
    %25 = vector.extract_strided_slice %2 {offsets = [4, 0, 0], sizes = [1, 96, 144], strides = [1, 1, 1]} : vector<9x96x144xbf16> to vector<1x96x144xbf16>
    %26 = vector.shape_cast %25 : vector<1x96x144xbf16> to vector<96x144xbf16>
    %cst_9 = arith.constant dense<0.000000e+00> : vector<24x144xf32>
    %27 = tpu.matmul %24, %26, %cst_9 {dimension_numbers = #tpu.dot_dimension_numbers<[1], [0], [0], [1], [0, 0, 1, 1], [], []>} : vector<24x96xbf16>, vector<96x144xbf16>, vector<24x144xf32> -> vector<24x144xf32>
    %28 = arith.addf %23, %27 : vector<24x144xf32>
    %29 = vector.extract_strided_slice %1 {offsets = [5, 0], sizes = [24, 96], strides = [1, 1]} : vector<32x96xbf16> to vector<24x96xbf16>
    %30 = vector.extract_strided_slice %2 {offsets = [5, 0, 0], sizes = [1, 96, 144], strides = [1, 1, 1]} : vector<9x96x144xbf16> to vector<1x96x144xbf16>
    %31 = vector.shape_cast %30 : vector<1x96x144xbf16> to vector<96x144xbf16>
    %cst_10 = arith.constant dense<0.000000e+00> : vector<24x144xf32>
    %32 = tpu.matmul %29, %31, %cst_10 {dimension_numbers = #tpu.dot_dimension_numbers<[1], [0], [0], [1], [0, 0, 1, 1], [], []>} : vector<24x96xbf16>, vector<96x144xbf16>, vector<24x144xf32> -> vector<24x144xf32>
    %33 = arith.addf %28, %32 : vector<24x144xf32>
    %34 = vector.extract_strided_slice %1 {offsets = [6, 0], sizes = [24, 96], strides = [1, 1]} : vector<32x96xbf16> to vector<24x96xbf16>
    %35 = vector.extract_strided_slice %2 {offsets = [6, 0, 0], sizes = [1, 96, 144], strides = [1, 1, 1]} : vector<9x96x144xbf16> to vector<1x96x144xbf16>
    %36 = vector.shape_cast %35 : vector<1x96x144xbf16> to vector<96x144xbf16>
    %cst_11 = arith.constant dense<0.000000e+00> : vector<24x144xf32>
    %37 = tpu.matmul %34, %36, %cst_11 {dimension_numbers = #tpu.dot_dimension_numbers<[1], [0], [0], [1], [0, 0, 1, 1], [], []>} : vector<24x96xbf16>, vector<96x144xbf16>, vector<24x144xf32> -> vector<24x144xf32>
    %38 = arith.addf %33, %37 : vector<24x144xf32>
    %39 = vector.extract_strided_slice %1 {offsets = [7, 0], sizes = [24, 96], strides = [1, 1]} : vector<32x96xbf16> to vector<24x96xbf16>
    %40 = vector.extract_strided_slice %2 {offsets = [7, 0, 0], sizes = [1, 96, 144], strides = [1, 1, 1]} : vector<9x96x144xbf16> to vector<1x96x144xbf16>
    %41 = vector.shape_cast %40 : vector<1x96x144xbf16> to vector<96x144xbf16>
    %cst_12 = arith.constant dense<0.000000e+00> : vector<24x144xf32>
    %42 = tpu.matmul %39, %41, %cst_12 {dimension_numbers = #tpu.dot_dimension_numbers<[1], [0], [0], [1], [0, 0, 1, 1], [], []>} : vector<24x96xbf16>, vector<96x144xbf16>, vector<24x144xf32> -> vector<24x144xf32>
    %43 = arith.addf %38, %42 : vector<24x144xf32>
    %44 = vector.extract_strided_slice %1 {offsets = [8, 0], sizes = [24, 96], strides = [1, 1]} : vector<32x96xbf16> to vector<24x96xbf16>
    %45 = vector.extract_strided_slice %2 {offsets = [8, 0, 0], sizes = [1, 96, 144], strides = [1, 1, 1]} : vector<9x96x144xbf16> to vector<1x96x144xbf16>
    %46 = vector.shape_cast %45 : vector<1x96x144xbf16> to vector<96x144xbf16>
    %cst_13 = arith.constant dense<0.000000e+00> : vector<24x144xf32>
    %47 = tpu.matmul %44, %46, %cst_13 {dimension_numbers = #tpu.dot_dimension_numbers<[1], [0], [0], [1], [0, 0, 1, 1], [], []>} : vector<24x96xbf16>, vector<96x144xbf16>, vector<24x144xf32> -> vector<24x144xf32>
    %48 = arith.addf %43, %47 : vector<24x144xf32>
    %c0_14 = arith.constant 0 : index
    %c0_15 = arith.constant 0 : index
    %49 = vector.load %arg3[%c0_14, %c0_15] : memref<1x144xf32, #tpu.memory_space<vmem>>, vector<1x144xf32>
    %50 = vector.broadcast %49 : vector<1x144xf32> to vector<24x144xf32>
    %51 = arith.addf %48, %50 : vector<24x144xf32>
    %52 = arith.truncf %51 : vector<24x144xf32> to vector<24x144xbf16>
    %c0_16 = arith.constant 0 : index
    %c0_17 = arith.constant 0 : index
    %c0_18 = arith.constant 0 : index
    %53 = vector.load %arg4[%c0_16, %c0_17, %c0_18] : memref<9x144x96xbf16, #tpu.memory_space<vmem>>, vector<9x144x96xbf16>
    %cst_19 = arith.constant 0.000000e+00 : f32
    %54 = vector.broadcast %cst_19 : f32 to vector<16x96xf32>
    %55 = vector.extract_strided_slice %52 {offsets = [0, 0], sizes = [16, 144], strides = [1, 1]} : vector<24x144xbf16> to vector<16x144xbf16>
    %56 = vector.extract_strided_slice %53 {offsets = [0, 0, 0], sizes = [1, 144, 96], strides = [1, 1, 1]} : vector<9x144x96xbf16> to vector<1x144x96xbf16>
    %57 = vector.shape_cast %56 : vector<1x144x96xbf16> to vector<144x96xbf16>
    %cst_20 = arith.constant dense<0.000000e+00> : vector<16x96xf32>
    %58 = tpu.matmul %55, %57, %cst_20 {dimension_numbers = #tpu.dot_dimension_numbers<[1], [0], [0], [1], [0, 0, 1, 1], [], []>} : vector<16x144xbf16>, vector<144x96xbf16>, vector<16x96xf32> -> vector<16x96xf32>
    %59 = arith.addf %54, %58 : vector<16x96xf32>
    %60 = vector.extract_strided_slice %52 {offsets = [1, 0], sizes = [16, 144], strides = [1, 1]} : vector<24x144xbf16> to vector<16x144xbf16>
    %61 = vector.extract_strided_slice %53 {offsets = [1, 0, 0], sizes = [1, 144, 96], strides = [1, 1, 1]} : vector<9x144x96xbf16> to vector<1x144x96xbf16>
    %62 = vector.shape_cast %61 : vector<1x144x96xbf16> to vector<144x96xbf16>
    %cst_21 = arith.constant dense<0.000000e+00> : vector<16x96xf32>
    %63 = tpu.matmul %60, %62, %cst_21 {dimension_numbers = #tpu.dot_dimension_numbers<[1], [0], [0], [1], [0, 0, 1, 1], [], []>} : vector<16x144xbf16>, vector<144x96xbf16>, vector<16x96xf32> -> vector<16x96xf32>
    %64 = arith.addf %59, %63 : vector<16x96xf32>
    %65 = vector.extract_strided_slice %52 {offsets = [2, 0], sizes = [16, 144], strides = [1, 1]} : vector<24x144xbf16> to vector<16x144xbf16>
    %66 = vector.extract_strided_slice %53 {offsets = [2, 0, 0], sizes = [1, 144, 96], strides = [1, 1, 1]} : vector<9x144x96xbf16> to vector<1x144x96xbf16>
    %67 = vector.shape_cast %66 : vector<1x144x96xbf16> to vector<144x96xbf16>
    %cst_22 = arith.constant dense<0.000000e+00> : vector<16x96xf32>
    %68 = tpu.matmul %65, %67, %cst_22 {dimension_numbers = #tpu.dot_dimension_numbers<[1], [0], [0], [1], [0, 0, 1, 1], [], []>} : vector<16x144xbf16>, vector<144x96xbf16>, vector<16x96xf32> -> vector<16x96xf32>
    %69 = arith.addf %64, %68 : vector<16x96xf32>
    %70 = vector.extract_strided_slice %52 {offsets = [3, 0], sizes = [16, 144], strides = [1, 1]} : vector<24x144xbf16> to vector<16x144xbf16>
    %71 = vector.extract_strided_slice %53 {offsets = [3, 0, 0], sizes = [1, 144, 96], strides = [1, 1, 1]} : vector<9x144x96xbf16> to vector<1x144x96xbf16>
    %72 = vector.shape_cast %71 : vector<1x144x96xbf16> to vector<144x96xbf16>
    %cst_23 = arith.constant dense<0.000000e+00> : vector<16x96xf32>
    %73 = tpu.matmul %70, %72, %cst_23 {dimension_numbers = #tpu.dot_dimension_numbers<[1], [0], [0], [1], [0, 0, 1, 1], [], []>} : vector<16x144xbf16>, vector<144x96xbf16>, vector<16x96xf32> -> vector<16x96xf32>
    %74 = arith.addf %69, %73 : vector<16x96xf32>
    %75 = vector.extract_strided_slice %52 {offsets = [4, 0], sizes = [16, 144], strides = [1, 1]} : vector<24x144xbf16> to vector<16x144xbf16>
    %76 = vector.extract_strided_slice %53 {offsets = [4, 0, 0], sizes = [1, 144, 96], strides = [1, 1, 1]} : vector<9x144x96xbf16> to vector<1x144x96xbf16>
    %77 = vector.shape_cast %76 : vector<1x144x96xbf16> to vector<144x96xbf16>
    %cst_24 = arith.constant dense<0.000000e+00> : vector<16x96xf32>
    %78 = tpu.matmul %75, %77, %cst_24 {dimension_numbers = #tpu.dot_dimension_numbers<[1], [0], [0], [1], [0, 0, 1, 1], [], []>} : vector<16x144xbf16>, vector<144x96xbf16>, vector<16x96xf32> -> vector<16x96xf32>
    %79 = arith.addf %74, %78 : vector<16x96xf32>
    %80 = vector.extract_strided_slice %52 {offsets = [5, 0], sizes = [16, 144], strides = [1, 1]} : vector<24x144xbf16> to vector<16x144xbf16>
    %81 = vector.extract_strided_slice %53 {offsets = [5, 0, 0], sizes = [1, 144, 96], strides = [1, 1, 1]} : vector<9x144x96xbf16> to vector<1x144x96xbf16>
    %82 = vector.shape_cast %81 : vector<1x144x96xbf16> to vector<144x96xbf16>
    %cst_25 = arith.constant dense<0.000000e+00> : vector<16x96xf32>
    %83 = tpu.matmul %80, %82, %cst_25 {dimension_numbers = #tpu.dot_dimension_numbers<[1], [0], [0], [1], [0, 0, 1, 1], [], []>} : vector<16x144xbf16>, vector<144x96xbf16>, vector<16x96xf32> -> vector<16x96xf32>
    %84 = arith.addf %79, %83 : vector<16x96xf32>
    %85 = vector.extract_strided_slice %52 {offsets = [6, 0], sizes = [16, 144], strides = [1, 1]} : vector<24x144xbf16> to vector<16x144xbf16>
    %86 = vector.extract_strided_slice %53 {offsets = [6, 0, 0], sizes = [1, 144, 96], strides = [1, 1, 1]} : vector<9x144x96xbf16> to vector<1x144x96xbf16>
    %87 = vector.shape_cast %86 : vector<1x144x96xbf16> to vector<144x96xbf16>
    %cst_26 = arith.constant dense<0.000000e+00> : vector<16x96xf32>
    %88 = tpu.matmul %85, %87, %cst_26 {dimension_numbers = #tpu.dot_dimension_numbers<[1], [0], [0], [1], [0, 0, 1, 1], [], []>} : vector<16x144xbf16>, vector<144x96xbf16>, vector<16x96xf32> -> vector<16x96xf32>
    %89 = arith.addf %84, %88 : vector<16x96xf32>
    %90 = vector.extract_strided_slice %52 {offsets = [7, 0], sizes = [16, 144], strides = [1, 1]} : vector<24x144xbf16> to vector<16x144xbf16>
    %91 = vector.extract_strided_slice %53 {offsets = [7, 0, 0], sizes = [1, 144, 96], strides = [1, 1, 1]} : vector<9x144x96xbf16> to vector<1x144x96xbf16>
    %92 = vector.shape_cast %91 : vector<1x144x96xbf16> to vector<144x96xbf16>
    %cst_27 = arith.constant dense<0.000000e+00> : vector<16x96xf32>
    %93 = tpu.matmul %90, %92, %cst_27 {dimension_numbers = #tpu.dot_dimension_numbers<[1], [0], [0], [1], [0, 0, 1, 1], [], []>} : vector<16x144xbf16>, vector<144x96xbf16>, vector<16x96xf32> -> vector<16x96xf32>
    %94 = arith.addf %89, %93 : vector<16x96xf32>
    %95 = vector.extract_strided_slice %52 {offsets = [8, 0], sizes = [16, 144], strides = [1, 1]} : vector<24x144xbf16> to vector<16x144xbf16>
    %96 = vector.extract_strided_slice %53 {offsets = [8, 0, 0], sizes = [1, 144, 96], strides = [1, 1, 1]} : vector<9x144x96xbf16> to vector<1x144x96xbf16>
    %97 = vector.shape_cast %96 : vector<1x144x96xbf16> to vector<144x96xbf16>
    %cst_28 = arith.constant dense<0.000000e+00> : vector<16x96xf32>
    %98 = tpu.matmul %95, %97, %cst_28 {dimension_numbers = #tpu.dot_dimension_numbers<[1], [0], [0], [1], [0, 0, 1, 1], [], []>} : vector<16x144xbf16>, vector<144x96xbf16>, vector<16x96xf32> -> vector<16x96xf32>
    %99 = arith.addf %94, %98 : vector<16x96xf32>
    %c0_29 = arith.constant 0 : index
    %c0_30 = arith.constant 0 : index
    %100 = vector.load %arg5[%c0_29, %c0_30] : memref<1x96xf32, #tpu.memory_space<vmem>>, vector<1x96xf32>
    %101 = vector.broadcast %100 : vector<1x96xf32> to vector<16x96xf32>
    %102 = arith.addf %99, %101 : vector<16x96xf32>
    %cst_31 = arith.constant 0.000000e+00 : f32
    %103 = vector.broadcast %cst_31 : f32 to vector<16x96xf32>
    %104 = arith.maximumf %102, %103 : vector<16x96xf32>
    %105 = arith.truncf %104 : vector<16x96xf32> to vector<16x96xbf16>
    %c0_32 = arith.constant 0 : index
    %c0_33 = arith.constant 0 : index
    %c0_34 = arith.constant 0 : index
    %106 = vector.load %arg6[%c0_32, %c0_33, %c0_34] : memref<7x96x160xbf16, #tpu.memory_space<vmem>>, vector<7x96x160xbf16>
    %cst_35 = arith.constant 0.000000e+00 : f32
    %107 = vector.broadcast %cst_35 : f32 to vector<10x160xf32>
    %108 = vector.extract_strided_slice %105 {offsets = [0, 0], sizes = [10, 96], strides = [1, 1]} : vector<16x96xbf16> to vector<10x96xbf16>
    %109 = vector.extract_strided_slice %106 {offsets = [0, 0, 0], sizes = [1, 96, 160], strides = [1, 1, 1]} : vector<7x96x160xbf16> to vector<1x96x160xbf16>
    %110 = vector.shape_cast %109 : vector<1x96x160xbf16> to vector<96x160xbf16>
    %cst_36 = arith.constant dense<0.000000e+00> : vector<10x160xf32>
    %111 = tpu.matmul %108, %110, %cst_36 {dimension_numbers = #tpu.dot_dimension_numbers<[1], [0], [0], [1], [0, 0, 1, 1], [], []>} : vector<10x96xbf16>, vector<96x160xbf16>, vector<10x160xf32> -> vector<10x160xf32>
    %112 = arith.addf %107, %111 : vector<10x160xf32>
    %113 = vector.extract_strided_slice %105 {offsets = [1, 0], sizes = [10, 96], strides = [1, 1]} : vector<16x96xbf16> to vector<10x96xbf16>
    %114 = vector.extract_strided_slice %106 {offsets = [1, 0, 0], sizes = [1, 96, 160], strides = [1, 1, 1]} : vector<7x96x160xbf16> to vector<1x96x160xbf16>
    %115 = vector.shape_cast %114 : vector<1x96x160xbf16> to vector<96x160xbf16>
    %cst_37 = arith.constant dense<0.000000e+00> : vector<10x160xf32>
    %116 = tpu.matmul %113, %115, %cst_37 {dimension_numbers = #tpu.dot_dimension_numbers<[1], [0], [0], [1], [0, 0, 1, 1], [], []>} : vector<10x96xbf16>, vector<96x160xbf16>, vector<10x160xf32> -> vector<10x160xf32>
    %117 = arith.addf %112, %116 : vector<10x160xf32>
    %118 = vector.extract_strided_slice %105 {offsets = [2, 0], sizes = [10, 96], strides = [1, 1]} : vector<16x96xbf16> to vector<10x96xbf16>
    %119 = vector.extract_strided_slice %106 {offsets = [2, 0, 0], sizes = [1, 96, 160], strides = [1, 1, 1]} : vector<7x96x160xbf16> to vector<1x96x160xbf16>
    %120 = vector.shape_cast %119 : vector<1x96x160xbf16> to vector<96x160xbf16>
    %cst_38 = arith.constant dense<0.000000e+00> : vector<10x160xf32>
    %121 = tpu.matmul %118, %120, %cst_38 {dimension_numbers = #tpu.dot_dimension_numbers<[1], [0], [0], [1], [0, 0, 1, 1], [], []>} : vector<10x96xbf16>, vector<96x160xbf16>, vector<10x160xf32> -> vector<10x160xf32>
    %122 = arith.addf %117, %121 : vector<10x160xf32>
    %123 = vector.extract_strided_slice %105 {offsets = [3, 0], sizes = [10, 96], strides = [1, 1]} : vector<16x96xbf16> to vector<10x96xbf16>
    %124 = vector.extract_strided_slice %106 {offsets = [3, 0, 0], sizes = [1, 96, 160], strides = [1, 1, 1]} : vector<7x96x160xbf16> to vector<1x96x160xbf16>
    %125 = vector.shape_cast %124 : vector<1x96x160xbf16> to vector<96x160xbf16>
    %cst_39 = arith.constant dense<0.000000e+00> : vector<10x160xf32>
    %126 = tpu.matmul %123, %125, %cst_39 {dimension_numbers = #tpu.dot_dimension_numbers<[1], [0], [0], [1], [0, 0, 1, 1], [], []>} : vector<10x96xbf16>, vector<96x160xbf16>, vector<10x160xf32> -> vector<10x160xf32>
    %127 = arith.addf %122, %126 : vector<10x160xf32>
    %128 = vector.extract_strided_slice %105 {offsets = [4, 0], sizes = [10, 96], strides = [1, 1]} : vector<16x96xbf16> to vector<10x96xbf16>
    %129 = vector.extract_strided_slice %106 {offsets = [4, 0, 0], sizes = [1, 96, 160], strides = [1, 1, 1]} : vector<7x96x160xbf16> to vector<1x96x160xbf16>
    %130 = vector.shape_cast %129 : vector<1x96x160xbf16> to vector<96x160xbf16>
    %cst_40 = arith.constant dense<0.000000e+00> : vector<10x160xf32>
    %131 = tpu.matmul %128, %130, %cst_40 {dimension_numbers = #tpu.dot_dimension_numbers<[1], [0], [0], [1], [0, 0, 1, 1], [], []>} : vector<10x96xbf16>, vector<96x160xbf16>, vector<10x160xf32> -> vector<10x160xf32>
    %132 = arith.addf %127, %131 : vector<10x160xf32>
    %133 = vector.extract_strided_slice %105 {offsets = [5, 0], sizes = [10, 96], strides = [1, 1]} : vector<16x96xbf16> to vector<10x96xbf16>
    %134 = vector.extract_strided_slice %106 {offsets = [5, 0, 0], sizes = [1, 96, 160], strides = [1, 1, 1]} : vector<7x96x160xbf16> to vector<1x96x160xbf16>
    %135 = vector.shape_cast %134 : vector<1x96x160xbf16> to vector<96x160xbf16>
    %cst_41 = arith.constant dense<0.000000e+00> : vector<10x160xf32>
    %136 = tpu.matmul %133, %135, %cst_41 {dimension_numbers = #tpu.dot_dimension_numbers<[1], [0], [0], [1], [0, 0, 1, 1], [], []>} : vector<10x96xbf16>, vector<96x160xbf16>, vector<10x160xf32> -> vector<10x160xf32>
    %137 = arith.addf %132, %136 : vector<10x160xf32>
    %138 = vector.extract_strided_slice %105 {offsets = [6, 0], sizes = [10, 96], strides = [1, 1]} : vector<16x96xbf16> to vector<10x96xbf16>
    %139 = vector.extract_strided_slice %106 {offsets = [6, 0, 0], sizes = [1, 96, 160], strides = [1, 1, 1]} : vector<7x96x160xbf16> to vector<1x96x160xbf16>
    %140 = vector.shape_cast %139 : vector<1x96x160xbf16> to vector<96x160xbf16>
    %cst_42 = arith.constant dense<0.000000e+00> : vector<10x160xf32>
    %141 = tpu.matmul %138, %140, %cst_42 {dimension_numbers = #tpu.dot_dimension_numbers<[1], [0], [0], [1], [0, 0, 1, 1], [], []>} : vector<10x96xbf16>, vector<96x160xbf16>, vector<10x160xf32> -> vector<10x160xf32>
    %142 = arith.addf %137, %141 : vector<10x160xf32>
    %c0_43 = arith.constant 0 : index
    %c0_44 = arith.constant 0 : index
    %143 = vector.load %arg7[%c0_43, %c0_44] : memref<1x160xf32, #tpu.memory_space<vmem>>, vector<1x160xf32>
    %144 = vector.broadcast %143 : vector<1x160xf32> to vector<10x160xf32>
    %145 = arith.addf %142, %144 : vector<10x160xf32>
    %146 = arith.truncf %145 : vector<10x160xf32> to vector<10x160xbf16>
    %c0_45 = arith.constant 0 : index
    %c0_46 = arith.constant 0 : index
    %c0_47 = arith.constant 0 : index
    %147 = vector.load %arg8[%c0_45, %c0_46, %c0_47] : memref<7x160x64xbf16, #tpu.memory_space<vmem>>, vector<7x160x64xbf16>
    %cst_48 = arith.constant 0.000000e+00 : f32
    %148 = vector.broadcast %cst_48 : f32 to vector<4x64xf32>
    %149 = vector.extract_strided_slice %146 {offsets = [0, 0], sizes = [4, 160], strides = [1, 1]} : vector<10x160xbf16> to vector<4x160xbf16>
    %150 = vector.extract_strided_slice %147 {offsets = [0, 0, 0], sizes = [1, 160, 64], strides = [1, 1, 1]} : vector<7x160x64xbf16> to vector<1x160x64xbf16>
    %151 = vector.shape_cast %150 : vector<1x160x64xbf16> to vector<160x64xbf16>
    %cst_49 = arith.constant dense<0.000000e+00> : vector<4x64xf32>
    %152 = tpu.matmul %149, %151, %cst_49 {dimension_numbers = #tpu.dot_dimension_numbers<[1], [0], [0], [1], [0, 0, 1, 1], [], []>} : vector<4x160xbf16>, vector<160x64xbf16>, vector<4x64xf32> -> vector<4x64xf32>
    %153 = arith.addf %148, %152 : vector<4x64xf32>
    %154 = vector.extract_strided_slice %146 {offsets = [1, 0], sizes = [4, 160], strides = [1, 1]} : vector<10x160xbf16> to vector<4x160xbf16>
    %155 = vector.extract_strided_slice %147 {offsets = [1, 0, 0], sizes = [1, 160, 64], strides = [1, 1, 1]} : vector<7x160x64xbf16> to vector<1x160x64xbf16>
    %156 = vector.shape_cast %155 : vector<1x160x64xbf16> to vector<160x64xbf16>
    %cst_50 = arith.constant dense<0.000000e+00> : vector<4x64xf32>
    %157 = tpu.matmul %154, %156, %cst_50 {dimension_numbers = #tpu.dot_dimension_numbers<[1], [0], [0], [1], [0, 0, 1, 1], [], []>} : vector<4x160xbf16>, vector<160x64xbf16>, vector<4x64xf32> -> vector<4x64xf32>
    %158 = arith.addf %153, %157 : vector<4x64xf32>
    %159 = vector.extract_strided_slice %146 {offsets = [2, 0], sizes = [4, 160], strides = [1, 1]} : vector<10x160xbf16> to vector<4x160xbf16>
    %160 = vector.extract_strided_slice %147 {offsets = [2, 0, 0], sizes = [1, 160, 64], strides = [1, 1, 1]} : vector<7x160x64xbf16> to vector<1x160x64xbf16>
    %161 = vector.shape_cast %160 : vector<1x160x64xbf16> to vector<160x64xbf16>
    %cst_51 = arith.constant dense<0.000000e+00> : vector<4x64xf32>
    %162 = tpu.matmul %159, %161, %cst_51 {dimension_numbers = #tpu.dot_dimension_numbers<[1], [0], [0], [1], [0, 0, 1, 1], [], []>} : vector<4x160xbf16>, vector<160x64xbf16>, vector<4x64xf32> -> vector<4x64xf32>
    %163 = arith.addf %158, %162 : vector<4x64xf32>
    %164 = vector.extract_strided_slice %146 {offsets = [3, 0], sizes = [4, 160], strides = [1, 1]} : vector<10x160xbf16> to vector<4x160xbf16>
    %165 = vector.extract_strided_slice %147 {offsets = [3, 0, 0], sizes = [1, 160, 64], strides = [1, 1, 1]} : vector<7x160x64xbf16> to vector<1x160x64xbf16>
    %166 = vector.shape_cast %165 : vector<1x160x64xbf16> to vector<160x64xbf16>
    %cst_52 = arith.constant dense<0.000000e+00> : vector<4x64xf32>
    %167 = tpu.matmul %164, %166, %cst_52 {dimension_numbers = #tpu.dot_dimension_numbers<[1], [0], [0], [1], [0, 0, 1, 1], [], []>} : vector<4x160xbf16>, vector<160x64xbf16>, vector<4x64xf32> -> vector<4x64xf32>
    %168 = arith.addf %163, %167 : vector<4x64xf32>
    %169 = vector.extract_strided_slice %146 {offsets = [4, 0], sizes = [4, 160], strides = [1, 1]} : vector<10x160xbf16> to vector<4x160xbf16>
    %170 = vector.extract_strided_slice %147 {offsets = [4, 0, 0], sizes = [1, 160, 64], strides = [1, 1, 1]} : vector<7x160x64xbf16> to vector<1x160x64xbf16>
    %171 = vector.shape_cast %170 : vector<1x160x64xbf16> to vector<160x64xbf16>
    %cst_53 = arith.constant dense<0.000000e+00> : vector<4x64xf32>
    %172 = tpu.matmul %169, %171, %cst_53 {dimension_numbers = #tpu.dot_dimension_numbers<[1], [0], [0], [1], [0, 0, 1, 1], [], []>} : vector<4x160xbf16>, vector<160x64xbf16>, vector<4x64xf32> -> vector<4x64xf32>
    %173 = arith.addf %168, %172 : vector<4x64xf32>
    %174 = vector.extract_strided_slice %146 {offsets = [5, 0], sizes = [4, 160], strides = [1, 1]} : vector<10x160xbf16> to vector<4x160xbf16>
    %175 = vector.extract_strided_slice %147 {offsets = [5, 0, 0], sizes = [1, 160, 64], strides = [1, 1, 1]} : vector<7x160x64xbf16> to vector<1x160x64xbf16>
    %176 = vector.shape_cast %175 : vector<1x160x64xbf16> to vector<160x64xbf16>
    %cst_54 = arith.constant dense<0.000000e+00> : vector<4x64xf32>
    %177 = tpu.matmul %174, %176, %cst_54 {dimension_numbers = #tpu.dot_dimension_numbers<[1], [0], [0], [1], [0, 0, 1, 1], [], []>} : vector<4x160xbf16>, vector<160x64xbf16>, vector<4x64xf32> -> vector<4x64xf32>
    %178 = arith.addf %173, %177 : vector<4x64xf32>
    %179 = vector.extract_strided_slice %146 {offsets = [6, 0], sizes = [4, 160], strides = [1, 1]} : vector<10x160xbf16> to vector<4x160xbf16>
    %180 = vector.extract_strided_slice %147 {offsets = [6, 0, 0], sizes = [1, 160, 64], strides = [1, 1, 1]} : vector<7x160x64xbf16> to vector<1x160x64xbf16>
    %181 = vector.shape_cast %180 : vector<1x160x64xbf16> to vector<160x64xbf16>
    %cst_55 = arith.constant dense<0.000000e+00> : vector<4x64xf32>
    %182 = tpu.matmul %179, %181, %cst_55 {dimension_numbers = #tpu.dot_dimension_numbers<[1], [0], [0], [1], [0, 0, 1, 1], [], []>} : vector<4x160xbf16>, vector<160x64xbf16>, vector<4x64xf32> -> vector<4x64xf32>
    %183 = arith.addf %178, %182 : vector<4x64xf32>
    %c0_56 = arith.constant 0 : index
    %c0_57 = arith.constant 0 : index
    %184 = vector.load %arg9[%c0_56, %c0_57] : memref<1x64xf32, #tpu.memory_space<vmem>>, vector<1x64xf32>
    %185 = vector.broadcast %184 : vector<1x64xf32> to vector<4x64xf32>
    %186 = arith.addf %183, %185 : vector<4x64xf32>
    %cst_58 = arith.constant 0.000000e+00 : f32
    %187 = vector.broadcast %cst_58 : f32 to vector<4x64xf32>
    %188 = arith.maximumf %186, %187 : vector<4x64xf32>
    %189 = arith.truncf %188 : vector<4x64xf32> to vector<4x64xbf16>
    %190 = vector.shape_cast %189 : vector<4x64xbf16> to vector<1x4x64xbf16>
    %c0_59 = arith.constant 0 : index
    %c0_60 = arith.constant 0 : index
    %c0_61 = arith.constant 0 : index
    %191 = vector.load %arg10[%c0_59, %c0_60, %c0_61] : memref<4x64x120xbf16, #tpu.memory_space<vmem>>, vector<4x64x120xbf16>
    %cst_62 = arith.constant 0.000000e+00 : f32
    %192 = vector.broadcast %cst_62 : f32 to vector<1x120xf32>
    %193 = vector.extract_strided_slice %190 {offsets = [0, 0, 0], sizes = [1, 1, 64], strides = [1, 1, 1]} : vector<1x4x64xbf16> to vector<1x1x64xbf16>
    %194 = vector.shape_cast %193 : vector<1x1x64xbf16> to vector<1x64xbf16>
    %195 = vector.extract_strided_slice %191 {offsets = [0, 0, 0], sizes = [1, 64, 120], strides = [1, 1, 1]} : vector<4x64x120xbf16> to vector<1x64x120xbf16>
    %196 = vector.shape_cast %195 : vector<1x64x120xbf16> to vector<64x120xbf16>
    %cst_63 = arith.constant dense<0.000000e+00> : vector<1x120xf32>
    %197 = tpu.matmul %194, %196, %cst_63 {dimension_numbers = #tpu.dot_dimension_numbers<[1], [0], [0], [1], [0, 0, 1, 1], [], []>} : vector<1x64xbf16>, vector<64x120xbf16>, vector<1x120xf32> -> vector<1x120xf32>
    %198 = arith.addf %192, %197 : vector<1x120xf32>
    %199 = vector.extract_strided_slice %190 {offsets = [0, 1, 0], sizes = [1, 1, 64], strides = [1, 1, 1]} : vector<1x4x64xbf16> to vector<1x1x64xbf16>
    %200 = vector.shape_cast %199 : vector<1x1x64xbf16> to vector<1x64xbf16>
    %201 = vector.extract_strided_slice %191 {offsets = [1, 0, 0], sizes = [1, 64, 120], strides = [1, 1, 1]} : vector<4x64x120xbf16> to vector<1x64x120xbf16>
    %202 = vector.shape_cast %201 : vector<1x64x120xbf16> to vector<64x120xbf16>
    %cst_64 = arith.constant dense<0.000000e+00> : vector<1x120xf32>
    %203 = tpu.matmul %200, %202, %cst_64 {dimension_numbers = #tpu.dot_dimension_numbers<[1], [0], [0], [1], [0, 0, 1, 1], [], []>} : vector<1x64xbf16>, vector<64x120xbf16>, vector<1x120xf32> -> vector<1x120xf32>
    %204 = arith.addf %198, %203 : vector<1x120xf32>
    %205 = vector.extract_strided_slice %190 {offsets = [0, 2, 0], sizes = [1, 1, 64], strides = [1, 1, 1]} : vector<1x4x64xbf16> to vector<1x1x64xbf16>
    %206 = vector.shape_cast %205 : vector<1x1x64xbf16> to vector<1x64xbf16>
    %207 = vector.extract_strided_slice %191 {offsets = [2, 0, 0], sizes = [1, 64, 120], strides = [1, 1, 1]} : vector<4x64x120xbf16> to vector<1x64x120xbf16>
    %208 = vector.shape_cast %207 : vector<1x64x120xbf16> to vector<64x120xbf16>
    %cst_65 = arith.constant dense<0.000000e+00> : vector<1x120xf32>
    %209 = tpu.matmul %206, %208, %cst_65 {dimension_numbers = #tpu.dot_dimension_numbers<[1], [0], [0], [1], [0, 0, 1, 1], [], []>} : vector<1x64xbf16>, vector<64x120xbf16>, vector<1x120xf32> -> vector<1x120xf32>
    %210 = arith.addf %204, %209 : vector<1x120xf32>
    %211 = vector.extract_strided_slice %190 {offsets = [0, 3, 0], sizes = [1, 1, 64], strides = [1, 1, 1]} : vector<1x4x64xbf16> to vector<1x1x64xbf16>
    %212 = vector.shape_cast %211 : vector<1x1x64xbf16> to vector<1x64xbf16>
    %213 = vector.extract_strided_slice %191 {offsets = [3, 0, 0], sizes = [1, 64, 120], strides = [1, 1, 1]} : vector<4x64x120xbf16> to vector<1x64x120xbf16>
    %214 = vector.shape_cast %213 : vector<1x64x120xbf16> to vector<64x120xbf16>
    %cst_66 = arith.constant dense<0.000000e+00> : vector<1x120xf32>
    %215 = tpu.matmul %212, %214, %cst_66 {dimension_numbers = #tpu.dot_dimension_numbers<[1], [0], [0], [1], [0, 0, 1, 1], [], []>} : vector<1x64xbf16>, vector<64x120xbf16>, vector<1x120xf32> -> vector<1x120xf32>
    %216 = arith.addf %210, %215 : vector<1x120xf32>
    %c0_67 = arith.constant 0 : index
    %c0_68 = arith.constant 0 : index
    %217 = vector.load %arg11[%c0_67, %c0_68] : memref<1x120xf32, #tpu.memory_space<vmem>>, vector<1x120xf32>
    %218 = arith.addf %216, %217 : vector<1x120xf32>
    %cst_69 = arith.constant 0.000000e+00 : f32
    %219 = vector.broadcast %cst_69 : f32 to vector<1x120xf32>
    %220 = arith.maximumf %218, %219 : vector<1x120xf32>
    %221 = arith.truncf %220 : vector<1x120xf32> to vector<1x120xbf16>
    %c0_70 = arith.constant 0 : index
    %c0_71 = arith.constant 0 : index
    %222 = vector.load %arg12[%c0_70, %c0_71] : memref<120x84xbf16, #tpu.memory_space<vmem>>, vector<120x84xbf16>
    %cst_72 = arith.constant dense<0.000000e+00> : vector<1x84xf32>
    %223 = tpu.matmul %221, %222, %cst_72 {dimension_numbers = #tpu.dot_dimension_numbers<[1], [0], [0], [1], [0, 0, 1, 1], [], []>} : vector<1x120xbf16>, vector<120x84xbf16>, vector<1x84xf32> -> vector<1x84xf32>
    %c0_73 = arith.constant 0 : index
    %c0_74 = arith.constant 0 : index
    %224 = vector.load %arg13[%c0_73, %c0_74] : memref<1x84xf32, #tpu.memory_space<vmem>>, vector<1x84xf32>
    %225 = arith.addf %223, %224 : vector<1x84xf32>
    %cst_75 = arith.constant 0.000000e+00 : f32
    %226 = vector.broadcast %cst_75 : f32 to vector<1x84xf32>
    %227 = arith.maximumf %225, %226 : vector<1x84xf32>
    %228 = arith.truncf %227 : vector<1x84xf32> to vector<1x84xbf16>
    %c0_76 = arith.constant 0 : index
    %c0_77 = arith.constant 0 : index
    %229 = vector.load %arg14[%c0_76, %c0_77] : memref<84x10xbf16, #tpu.memory_space<vmem>>, vector<84x10xbf16>
    %cst_78 = arith.constant dense<0.000000e+00> : vector<1x10xf32>
    %230 = tpu.matmul %228, %229, %cst_78 {dimension_numbers = #tpu.dot_dimension_numbers<[1], [0], [0], [1], [0, 0, 1, 1], [], []>} : vector<1x84xbf16>, vector<84x10xbf16>, vector<1x10xf32> -> vector<1x10xf32>
    %c0_79 = arith.constant 0 : index
    %c0_80 = arith.constant 0 : index
    %231 = vector.load %arg15[%c0_79, %c0_80] : memref<1x10xf32, #tpu.memory_space<vmem>>, vector<1x10xf32>
    %232 = arith.addf %230, %231 : vector<1x10xf32>
    %233 = vector.shape_cast %232 : vector<1x10xf32> to vector<1x1x10xf32>
    %c0_81 = arith.constant 0 : index
    %c0_82 = arith.constant 0 : index
    %c0_83 = arith.constant 0 : index
    %234 = vector.load %arg16[%c0_81, %c0_82, %c0_83] : memref<1x1x10xf32, #tpu.memory_space<vmem>>, vector<1x1x10xf32>
    tpu.vector_store %arg16[%c0_81, %c0_82, %c0_83], %233 {strides = array<i32>} : memref<1x1x10xf32, #tpu.memory_space<vmem>>, vector<1x1x10xf32>,
    return
  }
  func.func @transform_0(%arg0: i32) -> (i32, i32, i32) {
    %c0_i32 = arith.constant 0 : i32
    %c0_i32_0 = arith.constant 0 : i32
    %c0_i32_1 = arith.constant 0 : i32
    return %arg0, %c0_i32, %c0_i32_0 : i32, i32, i32
  }
  func.func @transform_1(%arg0: i32) -> (i32, i32, i32) {
    %c0_i32 = arith.constant 0 : i32
    %c0_i32_0 = arith.constant 0 : i32
    %c0_i32_1 = arith.constant 0 : i32
    %c0_i32_2 = arith.constant 0 : i32
    return %c0_i32, %c0_i32_0, %c0_i32_1 : i32, i32, i32
  }
  func.func @transform_2(%arg0: i32) -> (i32, i32) {
    %c0_i32 = arith.constant 0 : i32
    %c0_i32_0 = arith.constant 0 : i32
    %c0_i32_1 = arith.constant 0 : i32
    return %c0_i32, %c0_i32_0 : i32, i32
  }
  func.func @transform_3(%arg0: i32) -> (i32, i32, i32) {
    %c0_i32 = arith.constant 0 : i32
    %c0_i32_0 = arith.constant 0 : i32
    %c0_i32_1 = arith.constant 0 : i32
    %c0_i32_2 = arith.constant 0 : i32
    return %c0_i32, %c0_i32_0, %c0_i32_1 : i32, i32, i32
  }
  func.func @transform_4(%arg0: i32) -> (i32, i32) {
    %c0_i32 = arith.constant 0 : i32
    %c0_i32_0 = arith.constant 0 : i32
    %c0_i32_1 = arith.constant 0 : i32
    return %c0_i32, %c0_i32_0 : i32, i32
  }
  func.func @transform_5(%arg0: i32) -> (i32, i32, i32) {
    %c0_i32 = arith.constant 0 : i32
    %c0_i32_0 = arith.constant 0 : i32
    %c0_i32_1 = arith.constant 0 : i32
    %c0_i32_2 = arith.constant 0 : i32
    return %c0_i32, %c0_i32_0, %c0_i32_1 : i32, i32, i32
  }
  func.func @transform_6(%arg0: i32) -> (i32, i32) {
    %c0_i32 = arith.constant 0 : i32
    %c0_i32_0 = arith.constant 0 : i32
    %c0_i32_1 = arith.constant 0 : i32
    return %c0_i32, %c0_i32_0 : i32, i32
  }
  func.func @transform_7(%arg0: i32) -> (i32, i32, i32) {
    %c0_i32 = arith.constant 0 : i32
    %c0_i32_0 = arith.constant 0 : i32
    %c0_i32_1 = arith.constant 0 : i32
    %c0_i32_2 = arith.constant 0 : i32
    return %c0_i32, %c0_i32_0, %c0_i32_1 : i32, i32, i32
  }
  func.func @transform_8(%arg0: i32) -> (i32, i32) {
    %c0_i32 = arith.constant 0 : i32
    %c0_i32_0 = arith.constant 0 : i32
    %c0_i32_1 = arith.constant 0 : i32
    return %c0_i32, %c0_i32_0 : i32, i32
  }
  func.func @transform_9(%arg0: i32) -> (i32, i32, i32) {
    %c0_i32 = arith.constant 0 : i32
    %c0_i32_0 = arith.constant 0 : i32
    %c0_i32_1 = arith.constant 0 : i32
    %c0_i32_2 = arith.constant 0 : i32
    return %c0_i32, %c0_i32_0, %c0_i32_1 : i32, i32, i32
  }
  func.func @transform_10(%arg0: i32) -> (i32, i32) {
    %c0_i32 = arith.constant 0 : i32
    %c0_i32_0 = arith.constant 0 : i32
    %c0_i32_1 = arith.constant 0 : i32
    return %c0_i32, %c0_i32_0 : i32, i32
  }
  func.func @transform_11(%arg0: i32) -> (i32, i32) {
    %c0_i32 = arith.constant 0 : i32
    %c0_i32_0 = arith.constant 0 : i32
    %c0_i32_1 = arith.constant 0 : i32
    return %c0_i32, %c0_i32_0 : i32, i32
  }
  func.func @transform_12(%arg0: i32) -> (i32, i32) {
    %c0_i32 = arith.constant 0 : i32
    %c0_i32_0 = arith.constant 0 : i32
    %c0_i32_1 = arith.constant 0 : i32
    return %c0_i32, %c0_i32_0 : i32, i32
  }
  func.func @transform_13(%arg0: i32) -> (i32, i32) {
    %c0_i32 = arith.constant 0 : i32
    %c0_i32_0 = arith.constant 0 : i32
    %c0_i32_1 = arith.constant 0 : i32
    return %c0_i32, %c0_i32_0 : i32, i32
  }
  func.func @transform_14(%arg0: i32) -> (i32, i32) {
    %c0_i32 = arith.constant 0 : i32
    %c0_i32_0 = arith.constant 0 : i32
    %c0_i32_1 = arith.constant 0 : i32
    return %c0_i32, %c0_i32_0 : i32, i32
  }
  func.func @transform_15(%arg0: i32) -> (i32, i32, i32) {
    %c0_i32 = arith.constant 0 : i32
    %c0_i32_0 = arith.constant 0 : i32
    %c0_i32_1 = arith.constant 0 : i32
    return %arg0, %c0_i32, %c0_i32_0 : i32, i32, i32
  }
}

</mosaic_0001>

<llo_original>
// kernel: cifar_cnn_nopool_forward.1
$region0: #{cifar_cnn_nopool_forward.1}
  #allocation0 [shape = 'u32[]', space=smem, size = 0x4, offset = 0x4, fixed_abs, tag = 'smem constant byte address 0x4 - core index']
  #allocation1 [shape = 'u32[72,128]{1,0:T(1,128)}', space=vmem, size = 0x9000, scoped, tag = 'internal scratch']
  %s0 = inlined_call_operand.vmem [shape: bf16[2,32,96], index: 0, kind: input, shape index: {}]
  %s1 = inlined_call_operand.vmem [shape: bf16[9,96,144], index: 1, kind: input, shape index: {}]
  %s2 = inlined_call_operand.vmem [shape: f32[1,144], index: 2, kind: input, shape index: {}]
  %s3 = inlined_call_operand.vmem [shape: bf16[9,144,96], index: 3, kind: input, shape index: {}]
  %s4 = inlined_call_operand.vmem [shape: f32[1,96], index: 4, kind: input, shape index: {}]
  %s5 = inlined_call_operand.vmem [shape: bf16[7,96,160], index: 5, kind: input, shape index: {}]
  %s6 = inlined_call_operand.vmem [shape: f32[1,160], index: 6, kind: input, shape index: {}]
  %s7 = inlined_call_operand.vmem [shape: bf16[7,160,64], index: 7, kind: input, shape index: {}]
  %s8 = inlined_call_operand.vmem [shape: f32[1,64], index: 8, kind: input, shape index: {}]
  %s9 = inlined_call_operand.vmem [shape: bf16[4,64,120], index: 9, kind: input, shape index: {}]
  %s10 = inlined_call_operand.vmem [shape: f32[1,120], index: 10, kind: input, shape index: {}]
  %s11 = inlined_call_operand.vmem [shape: bf16[120,84], index: 11, kind: input, shape index: {}]
  %s12 = inlined_call_operand.vmem [shape: f32[1,84], index: 12, kind: input, shape index: {}]
  %s13 = inlined_call_operand.vmem [shape: bf16[84,10], index: 13, kind: input, shape index: {}]
  %s14 = inlined_call_operand.vmem [shape: f32[1,10], index: 14, kind: input, shape index: {}]
  %s15 = inlined_call_operand.hbm [shape: f32[2,1,10], index: 15, kind: output, shape index: {}]
  %s16 = sld [smem:[#allocation0]]
  $region93: #{cifar_cnn_nopool_forward.1} parent=0
    _
  %s18 = ssub.s32 1, %s16
  %s19 = scalar_select 0, %s18, %s16
  $region1: #{cifar_cnn_nopool_forward.1} parent=0
    #allocation2 [shape = 'u8[1024]{0}', space=vmem, size = 0x400, scoped, tag = 'output window, operand 0']
    #allocation3 [shape = 's32[2]{0}', space=sflag, size = 0x8, scoped, tag = 'scoped memory for cifar_cnn_nopool_forward.1']
    %20 = vsyncpa [#allocation3], 0
    %s21 = scalar_lea.sflag [#allocation3], 1
    %22 = vsyncpa %s21, 0
    loop: start=0, step=1, limit=4
    $region2: #{cifar_cnn_nopool_forward.1} parent=1 // loop_pre_header
      _
    $region3: #{cifar_cnn_nopool_forward.1} parent=1 // loop_header
      %s24 = sphi 0, %s28
      %p25 = scmp.ge.s32.totalorder %s24, 4
      %s34 = sphi 0, %s36
      %s37 = sphi 0, %s34
      %s38 = sphi 0, %s37
      %s54 = sphi 0, %s38
      %s58 = sphi 0, %s58
      %s60 = sphi 0, %s58
      %s61 = sphi 0, %s60
      %s75 = sphi 0, %s61
      %s79 = sphi 0, %s79
      %s81 = sphi 0, %s79
      %s82 = sphi 0, %s81
      %s96 = sphi 0, %s82
      %s100 = sphi 0, %s100
      %s102 = sphi 0, %s100
      %s103 = sphi 0, %s102
      %s117 = sphi 0, %s103
      %s121 = sphi 0, %s121
      %s123 = sphi 0, %s121
      %s124 = sphi 0, %s123
      %s138 = sphi 0, %s124
      %s142 = sphi 0, %s142
      %s144 = sphi 0, %s142
      %s145 = sphi 0, %s144
      %s159 = sphi 0, %s145
      %s163 = sphi 0, %s163
      %s165 = sphi 0, %s163
      %s166 = sphi 0, %s165
      %s180 = sphi 0, %s166
      %s184 = sphi 0, %s184
      %s186 = sphi 0, %s184
      %s187 = sphi 0, %s186
      %s201 = sphi 0, %s187
      %s205 = sphi 0, %s205
      %s207 = sphi 0, %s205
      %s208 = sphi 0, %s207
      %s222 = sphi 0, %s208
      %s226 = sphi 0, %s226
      %s228 = sphi 0, %s226
      %s229 = sphi 0, %s228
      %s243 = sphi 0, %s229
      %s247 = sphi 0, %s247
      %s249 = sphi 0, %s247
      %s250 = sphi 0, %s249
      %s264 = sphi 0, %s250
      %s268 = sphi 0, %s268
      %s270 = sphi 0, %s268
      %s271 = sphi 0, %s270
      %s285 = sphi 0, %s271
      %s289 = sphi 0, %s289
      %s291 = sphi 0, %s289
      %s292 = sphi 0, %s291
      %s306 = sphi 0, %s292
      %s310 = sphi 0, %s310
      %s312 = sphi 0, %s310
      %s313 = sphi 0, %s312
      %s327 = sphi 0, %s313
      %s331 = sphi 0, %s331
      %s333 = sphi 0, %s331
      %s334 = sphi 0, %s333
      %s348 = sphi 0, %s334
      %s354 = sphi 0, %s356
      %s357 = sphi 0, %s354
      %s358 = sphi 0, %s357
      %s374 = sphi 0, %s358
    $region4: #{cifar_cnn_nopool_forward.1} parent=1 // loop_header_branch
      %27 = sbr.rel (%p25) target = $region8
    $region5: #{cifar_cnn_nopool_forward.1} parent=1 // loop_body
      %s29 = ssub.s32 %s24, 1
      %s30 = ssub.s32 %s24, 2
      %s31 = sadd.s32 %s24, 1
      %s32 = ssub.s32 %s24, %s31
      %p33 = scmp.eq.s32.totalorder %s32, 0
      %s35 = sadd.s32 %s34, 1
      %s36 = scalar_select %p33, %s34, %s35
      %p39 = pneg %p33
      %p40 = scmp.eq.s32.totalorder %s24, 1
      %p41 = por %p39, %p40
      %p42 = scmp.ne.s32.totalorder %s34, %s37
      %p43 = scmp.eq.s32.totalorder %s24, 0
      %p44 = por %p42, %p43
      %p45 = scmp.ne.s32.totalorder %s34, %s37
      %p46 = scmp.eq.s32.totalorder %s29, 1
      %p47 = por %p45, %p46
      %p48 = scmp.ne.s32.totalorder %s37, %s38
      %p49 = scmp.eq.s32.totalorder %s29, 0
      %p50 = por %p48, %p49
      %p51 = scmp.ne.s32.totalorder %s37, %s38
      %p52 = scmp.eq.s32.totalorder %s30, 1
      %p53 = por %p51, %p52
      %p55 = scmp.ne.s32.totalorder %s38, %s54
      %p56 = scmp.eq.s32.totalorder %s30, 0
      %p57 = por %p55, %p56
      %s59 = sadd.s32 %s58, 1
      %p62 = scmp.eq.s32.totalorder %s24, 1
      %p63 = scmp.ne.s32.totalorder %s58, %s60
      %p64 = scmp.eq.s32.totalorder %s24, 0
      %p65 = por %p63, %p64
      %p66 = scmp.ne.s32.totalorder %s58, %s60
      %p67 = scmp.eq.s32.totalorder %s29, 1
      %p68 = por %p66, %p67
      %p69 = scmp.ne.s32.totalorder %s60, %s61
      %p70 = scmp.eq.s32.totalorder %s29, 0
      %p71 = por %p69, %p70
      %p72 = scmp.ne.s32.totalorder %s60, %s61
      %p73 = scmp.eq.s32.totalorder %s30, 1
      %p74 = por %p72, %p73
      %p76 = scmp.ne.s32.totalorder %s61, %s75
      %p77 = scmp.eq.s32.totalorder %s30, 0
      %p78 = por %p76, %p77
      %s80 = sadd.s32 %s79, 1
      %p83 = scmp.eq.s32.totalorder %s24, 1
      %p84 = scmp.ne.s32.totalorder %s79, %s81
      %p85 = scmp.eq.s32.totalorder %s24, 0
      %p86 = por %p84, %p85
      %p87 = scmp.ne.s32.totalorder %s79, %s81
      %p88 = scmp.eq.s32.totalorder %s29, 1
      %p89 = por %p87, %p88
      %p90 = scmp.ne.s32.totalorder %s81, %s82
      %p91 = scmp.eq.s32.totalorder %s29, 0
      %p92 = por %p90, %p91
      %p93 = scmp.ne.s32.totalorder %s81, %s82
      %p94 = scmp.eq.s32.totalorder %s30, 1
      %p95 = por %p93, %p94
      %p97 = scmp.ne.s32.totalorder %s82, %s96
      %p98 = scmp.eq.s32.totalorder %s30, 0
      %p99 = por %p97, %p98
      %s101 = sadd.s32 %s100, 1
      %p104 = scmp.eq.s32.totalorder %s24, 1
      %p105 = scmp.ne.s32.totalorder %s100, %s102
      %p106 = scmp.eq.s32.totalorder %s24, 0
      %p107 = por %p105, %p106
      %p108 = scmp.ne.s32.totalorder %s100, %s102
      %p109 = scmp.eq.s32.totalorder %s29, 1
      %p110 = por %p108, %p109
      %p111 = scmp.ne.s32.totalorder %s102, %s103
      %p112 = scmp.eq.s32.totalorder %s29, 0
      %p113 = por %p111, %p112
      %p114 = scmp.ne.s32.totalorder %s102, %s103
      %p115 = scmp.eq.s32.totalorder %s30, 1
      %p116 = por %p114, %p115
      %p118 = scmp.ne.s32.totalorder %s103, %s117
      %p119 = scmp.eq.s32.totalorder %s30, 0
      %p120 = por %p118, %p119
      %s122 = sadd.s32 %s121, 1
      %p125 = scmp.eq.s32.totalorder %s24, 1
      %p126 = scmp.ne.s32.totalorder %s121, %s123
      %p127 = scmp.eq.s32.totalorder %s24, 0
      %p128 = por %p126, %p127
      %p129 = scmp.ne.s32.totalorder %s121, %s123
      %p130 = scmp.eq.s32.totalorder %s29, 1
      %p131 = por %p129, %p130
      %p132 = scmp.ne.s32.totalorder %s123, %s124
      %p133 = scmp.eq.s32.totalorder %s29, 0
      %p134 = por %p132, %p133
      %p135 = scmp.ne.s32.totalorder %s123, %s124
      %p136 = scmp.eq.s32.totalorder %s30, 1
      %p137 = por %p135, %p136
      %p139 = scmp.ne.s32.totalorder %s124, %s138
      %p140 = scmp.eq.s32.totalorder %s30, 0
      %p141 = por %p139, %p140
      %s143 = sadd.s32 %s142, 1
      %p146 = scmp.eq.s32.totalorder %s24, 1
      %p147 = scmp.ne.s32.totalorder %s142, %s144
      %p148 = scmp.eq.s32.totalorder %s24, 0
      %p149 = por %p147, %p148
      %p150 = scmp.ne.s32.totalorder %s142, %s144
      %p151 = scmp.eq.s32.totalorder %s29, 1
      %p152 = por %p150, %p151
      %p153 = scmp.ne.s32.totalorder %s144, %s145
      %p154 = scmp.eq.s32.totalorder %s29, 0
      %p155 = por %p153, %p154
      %p156 = scmp.ne.s32.totalorder %s144, %s145
      %p157 = scmp.eq.s32.totalorder %s30, 1
      %p158 = por %p156, %p157
      %p160 = scmp.ne.s32.totalorder %s145, %s159
      %p161 = scmp.eq.s32.totalorder %s30, 0
      %p162 = por %p160, %p161
      %s164 = sadd.s32 %s163, 1
      %p167 = scmp.eq.s32.totalorder %s24, 1
      %p168 = scmp.ne.s32.totalorder %s163, %s165
      %p169 = scmp.eq.s32.totalorder %s24, 0
      %p170 = por %p168, %p169
      %p171 = scmp.ne.s32.totalorder %s163, %s165
      %p172 = scmp.eq.s32.totalorder %s29, 1
      %p173 = por %p171, %p172
      %p174 = scmp.ne.s32.totalorder %s165, %s166
      %p175 = scmp.eq.s32.totalorder %s29, 0
      %p176 = por %p174, %p175
      %p177 = scmp.ne.s32.totalorder %s165, %s166
      %p178 = scmp.eq.s32.totalorder %s30, 1
      %p179 = por %p177, %p178
      %p181 = scmp.ne.s32.totalorder %s166, %s180
      %p182 = scmp.eq.s32.totalorder %s30, 0
      %p183 = por %p181, %p182
      %s185 = sadd.s32 %s184, 1
      %p188 = scmp.eq.s32.totalorder %s24, 1
      %p189 = scmp.ne.s32.totalorder %s184, %s186
      %p190 = scmp.eq.s32.totalorder %s24, 0
      %p191 = por %p189, %p190
      %p192 = scmp.ne.s32.totalorder %s184, %s186
      %p193 = scmp.eq.s32.totalorder %s29, 1
      %p194 = por %p192, %p193
      %p195 = scmp.ne.s32.totalorder %s186, %s187
      %p196 = scmp.eq.s32.totalorder %s29, 0
      %p197 = por %p195, %p196
      %p198 = scmp.ne.s32.totalorder %s186, %s187
      %p199 = scmp.eq.s32.totalorder %s30, 1
      %p200 = por %p198, %p199
      %p202 = scmp.ne.s32.totalorder %s187, %s201
      %p203 = scmp.eq.s32.totalorder %s30, 0
      %p204 = por %p202, %p203
      %s206 = sadd.s32 %s205, 1
      %p209 = scmp.eq.s32.totalorder %s24, 1
      %p210 = scmp.ne.s32.totalorder %s205, %s207
      %p211 = scmp.eq.s32.totalorder %s24, 0
      %p212 = por %p210, %p211
      %p213 = scmp.ne.s32.totalorder %s205, %s207
      %p214 = scmp.eq.s32.totalorder %s29, 1
      %p215 = por %p213, %p214
      %p216 = scmp.ne.s32.totalorder %s207, %s208
      %p217 = scmp.eq.s32.totalorder %s29, 0
      %p218 = por %p216, %p217
      %p219 = scmp.ne.s32.totalorder %s207, %s208
      %p220 = scmp.eq.s32.totalorder %s30, 1
      %p221 = por %p219, %p220
      %p223 = scmp.ne.s32.totalorder %s208, %s222
      %p224 = scmp.eq.s32.totalorder %s30, 0
      %p225 = por %p223, %p224
      %s227 = sadd.s32 %s226, 1
      %p230 = scmp.eq.s32.totalorder %s24, 1
      %p231 = scmp.ne.s32.totalorder %s226, %s228
      %p232 = scmp.eq.s32.totalorder %s24, 0
      %p233 = por %p231, %p232
      %p234 = scmp.ne.s32.totalorder %s226, %s228
      %p235 = scmp.eq.s32.totalorder %s29, 1
      %p236 = por %p234, %p235
      %p237 = scmp.ne.s32.totalorder %s228, %s229
      %p238 = scmp.eq.s32.totalorder %s29, 0
      %p239 = por %p237, %p238
      %p240 = scmp.ne.s32.totalorder %s228, %s229
      %p241 = scmp.eq.s32.totalorder %s30, 1
      %p242 = por %p240, %p241
      %p244 = scmp.ne.s32.totalorder %s229, %s243
      %p245 = scmp.eq.s32.totalorder %s30, 0
      %p246 = por %p244, %p245
      %s248 = sadd.s32 %s247, 1
      %p251 = scmp.eq.s32.totalorder %s24, 1
      %p252 = scmp.ne.s32.totalorder %s247, %s249
      %p253 = scmp.eq.s32.totalorder %s24, 0
      %p254 = por %p252, %p253
      %p255 = scmp.ne.s32.totalorder %s247, %s249
      %p256 = scmp.eq.s32.totalorder %s29, 1
      %p257 = por %p255, %p256
      %p258 = scmp.ne.s32.totalorder %s249, %s250
      %p259 = scmp.eq.s32.totalorder %s29, 0
      %p260 = por %p258, %p259
      %p261 = scmp.ne.s32.totalorder %s249, %s250
      %p262 = scmp.eq.s32.totalorder %s30, 1
      %p263 = por %p261, %p262
      %p265 = scmp.ne.s32.totalorder %s250, %s264
      %p266 = scmp.eq.s32.totalorder %s30, 0
      %p267 = por %p265, %p266
      %s269 = sadd.s32 %s268, 1
      %p272 = scmp.eq.s32.totalorder %s24, 1
      %p273 = scmp.ne.s32.totalorder %s268, %s270
      %p274 = scmp.eq.s32.totalorder %s24, 0
      %p275 = por %p273, %p274
      %p276 = scmp.ne.s32.totalorder %s268, %s270
      %p277 = scmp.eq.s32.totalorder %s29, 1
      %p278 = por %p276, %p277
      %p279 = scmp.ne.s32.totalorder %s270, %s271
      %p280 = scmp.eq.s32.totalorder %s29, 0
      %p281 = por %p279, %p280
      %p282 = scmp.ne.s32.totalorder %s270, %s271
      %p283 = scmp.eq.s32.totalorder %s30, 1
      %p284 = por %p282, %p283
      %p286 = scmp.ne.s32.totalorder %s271, %s285
      %p287 = scmp.eq.s32.totalorder %s30, 0
      %p288 = por %p286, %p287
      %s290 = sadd.s32 %s289, 1
      %p293 = scmp.eq.s32.totalorder %s24, 1
      %p294 = scmp.ne.s32.totalorder %s289, %s291
      %p295 = scmp.eq.s32.totalorder %s24, 0
      %p296 = por %p294, %p295
      %p297 = scmp.ne.s32.totalorder %s289, %s291
      %p298 = scmp.eq.s32.totalorder %s29, 1
      %p299 = por %p297, %p298
      %p300 = scmp.ne.s32.totalorder %s291, %s292
      %p301 = scmp.eq.s32.totalorder %s29, 0
      %p302 = por %p300, %p301
      %p303 = scmp.ne.s32.totalorder %s291, %s292
      %p304 = scmp.eq.s32.totalorder %s30, 1
      %p305 = por %p303, %p304
      %p307 = scmp.ne.s32.totalorder %s292, %s306
      %p308 = scmp.eq.s32.totalorder %s30, 0
      %p309 = por %p307, %p308
      %s311 = sadd.s32 %s310, 1
      %p314 = scmp.eq.s32.totalorder %s24, 1
      %p315 = scmp.ne.s32.totalorder %s310, %s312
      %p316 = scmp.eq.s32.totalorder %s24, 0
      %p317 = por %p315, %p316
      %p318 = scmp.ne.s32.totalorder %s310, %s312
      %p319 = scmp.eq.s32.totalorder %s29, 1
      %p320 = por %p318, %p319
      %p321 = scmp.ne.s32.totalorder %s312, %s313
      %p322 = scmp.eq.s32.totalorder %s29, 0
      %p323 = por %p321, %p322
      %p324 = scmp.ne.s32.totalorder %s312, %s313
      %p325 = scmp.eq.s32.totalorder %s30, 1
      %p326 = por %p324, %p325
      %p328 = scmp.ne.s32.totalorder %s313, %s327
      %p329 = scmp.eq.s32.totalorder %s30, 0
      %p330 = por %p328, %p329
      %s332 = sadd.s32 %s331, 1
      %p335 = scmp.eq.s32.totalorder %s24, 1
      %p336 = scmp.ne.s32.totalorder %s331, %s333
      %p337 = scmp.eq.s32.totalorder %s24, 0
      %p338 = por %p336, %p337
      %p339 = scmp.ne.s32.totalorder %s331, %s333
      %p340 = scmp.eq.s32.totalorder %s29, 1
      %p341 = por %p339, %p340
      %p342 = scmp.ne.s32.totalorder %s333, %s334
      %p343 = scmp.eq.s32.totalorder %s29, 0
      %p344 = por %p342, %p343
      %p345 = scmp.ne.s32.totalorder %s333, %s334
      %p346 = scmp.eq.s32.totalorder %s30, 1
      %p347 = por %p345, %p346
      %p349 = scmp.ne.s32.totalorder %s334, %s348
      %p350 = scmp.eq.s32.totalorder %s30, 0
      %p351 = por %p349, %p350
      %s352 = ssub.s32 %s24, %s31
      %p353 = scmp.eq.s32.totalorder %s352, 0
      %s355 = sadd.s32 %s354, 1
      %s356 = scalar_select %p353, %s354, %s355
      %p359 = pneg %p353
      %p360 = scmp.eq.s32.totalorder %s24, 1
      %p361 = por %p359, %p360
      %p362 = scmp.ne.s32.totalorder %s354, %s357
      %p363 = scmp.eq.s32.totalorder %s24, 0
      %p364 = por %p362, %p363
      %p365 = scmp.ne.s32.totalorder %s354, %s357
      %p366 = scmp.eq.s32.totalorder %s29, 1
      %p367 = por %p365, %p366
      %p368 = scmp.ne.s32.totalorder %s357, %s358
      %p369 = scmp.eq.s32.totalorder %s29, 0
      %p370 = por %p368, %p369
      %p371 = scmp.ne.s32.totalorder %s357, %s358
      %p372 = scmp.eq.s32.totalorder %s30, 1
      %p373 = por %p371, %p372
      %p375 = scmp.ne.s32.totalorder %s358, %s374
      %p376 = scmp.eq.s32.totalorder %s30, 0
      %p377 = por %p375, %p376
      %p378 = scmp.le.s32.totalorder 1, %s24
      %p379 = scmp.lt.s32.totalorder %s24, 3
      %p380 = pnand %p378, %p379
      %p381 = pneg %p380
      // Predicated region
      $region9: #{cifar_cnn_nopool_forward.1} parent=5 // pred_check
        _
      $region10: #{cifar_cnn_nopool_forward.1} parent=5 // pred_check_branch
        %383 = sbr.rel (%p380) target = $region12
      $region11: #{cifar_cnn_nopool_forward.1} parent=5 // pred_region
        %s384 = ssub.s32 %s24, 1
        // Predicated region
        $region13: #{cifar_cnn_nopool_forward.1} parent=11 // pred_check
          %p385 = pneg %p71
        $region14: #{cifar_cnn_nopool_forward.1} parent=11 // pred_check_branch
          %387 = sbr.rel (%p385) target = $region16
        $region15: #{cifar_cnn_nopool_forward.1} parent=11 // pred_region
          _
        $region16: #{cifar_cnn_nopool_forward.1} parent=11 // pred_fallthru
          _
        // Predicated region
        $region17: #{cifar_cnn_nopool_forward.1} parent=11 // pred_check
          %p388 = pneg %p92
        $region18: #{cifar_cnn_nopool_forward.1} parent=11 // pred_check_branch
          %390 = sbr.rel (%p388) target = $region20
        $region19: #{cifar_cnn_nopool_forward.1} parent=11 // pred_region
          _
        $region20: #{cifar_cnn_nopool_forward.1} parent=11 // pred_fallthru
          _
        // Predicated region
        $region21: #{cifar_cnn_nopool_forward.1} parent=11 // pred_check
          %p391 = pneg %p113
        $region22: #{cifar_cnn_nopool_forward.1} parent=11 // pred_check_branch
          %393 = sbr.rel (%p391) target = $region24
        $region23: #{cifar_cnn_nopool_forward.1} parent=11 // pred_region
          _
        $region24: #{cifar_cnn_nopool_forward.1} parent=11 // pred_fallthru
          _
        // Predicated region
        $region25: #{cifar_cnn_nopool_forward.1} parent=11 // pred_check
          %p394 = pneg %p134
        $region26: #{cifar_cnn_nopool_forward.1} parent=11 // pred_check_branch
          %396 = sbr.rel (%p394) target = $region28
        $region27: #{cifar_cnn_nopool_forward.1} parent=11 // pred_region
          _
        $region28: #{cifar_cnn_nopool_forward.1} parent=11 // pred_fallthru
          _
        // Predicated region
        $region29: #{cifar_cnn_nopool_forward.1} parent=11 // pred_check
          %p397 = pneg %p155
        $region30: #{cifar_cnn_nopool_forward.1} parent=11 // pred_check_branch
          %399 = sbr.rel (%p397) target = $region32
        $region31: #{cifar_cnn_nopool_forward.1} parent=11 // pred_region
          _
        $region32: #{cifar_cnn_nopool_forward.1} parent=11 // pred_fallthru
          _
        // Predicated region
        $region33: #{cifar_cnn_nopool_forward.1} parent=11 // pred_check
          %p400 = pneg %p176
        $region34: #{cifar_cnn_nopool_forward.1} parent=11 // pred_check_branch
          %402 = sbr.rel (%p400) target = $region36
        $region35: #{cifar_cnn_nopool_forward.1} parent=11 // pred_region
          _
        $region36: #{cifar_cnn_nopool_forward.1} parent=11 // pred_fallthru
          _
        // Predicated region
        $region37: #{cifar_cnn_nopool_forward.1} parent=11 // pred_check
          %p403 = pneg %p197
        $region38: #{cifar_cnn_nopool_forward.1} parent=11 // pred_check_branch
          %405 = sbr.rel (%p403) target = $region40
        $region39: #{cifar_cnn_nopool_forward.1} parent=11 // pred_region
          _
        $region40: #{cifar_cnn_nopool_forward.1} parent=11 // pred_fallthru
          _
        // Predicated region
        $region41: #{cifar_cnn_nopool_forward.1} parent=11 // pred_check
          %p406 = pneg %p218
        $region42: #{cifar_cnn_nopool_forward.1} parent=11 // pred_check_branch
          %408 = sbr.rel (%p406) target = $region44
        $region43: #{cifar_cnn_nopool_forward.1} parent=11 // pred_region
          _
        $region44: #{cifar_cnn_nopool_forward.1} parent=11 // pred_fallthru
          _
        // Predicated region
        $region45: #{cifar_cnn_nopool_forward.1} parent=11 // pred_check
          %p409 = pneg %p239
        $region46: #{cifar_cnn_nopool_forward.1} parent=11 // pred_check_branch
          %411 = sbr.rel (%p409) target = $region48
        $region47: #{cifar_cnn_nopool_forward.1} parent=11 // pred_region
          _
        $region48: #{cifar_cnn_nopool_forward.1} parent=11 // pred_fallthru
          _
        // Predicated region
        $region49: #{cifar_cnn_nopool_forward.1} parent=11 // pred_check
          %p412 = pneg %p260
        $region50: #{cifar_cnn_nopool_forward.1} parent=11 // pred_check_branch
          %414 = sbr.rel (%p412) target = $region52
        $region51: #{cifar_cnn_nopool_forward.1} parent=11 // pred_region
          _
        $region52: #{cifar_cnn_nopool_forward.1} parent=11 // pred_fallthru
          _
        // Predicated region
        $region53: #{cifar_cnn_nopool_forward.1} parent=11 // pred_check
          %p415 = pneg %p281
        $region54: #{cifar_cnn_nopool_forward.1} parent=11 // pred_check_branch
          %417 = sbr.rel (%p415) target = $region56
        $region55: #{cifar_cnn_nopool_forward.1} parent=11 // pred_region
          _
        $region56: #{cifar_cnn_nopool_forward.1} parent=11 // pred_fallthru
          _
        // Predicated region
        $region57: #{cifar_cnn_nopool_forward.1} parent=11 // pred_check
          %p418 = pneg %p302
        $region58: #{cifar_cnn_nopool_forward.1} parent=11 // pred_check_branch
          %420 = sbr.rel (%p418) target = $region60
        $region59: #{cifar_cnn_nopool_forward.1} parent=11 // pred_region
          _
        $region60: #{cifar_cnn_nopool_forward.1} parent=11 // pred_fallthru
          _
        // Predicated region
        $region61: #{cifar_cnn_nopool_forward.1} parent=11 // pred_check
          %p421 = pneg %p323
        $region62: #{cifar_cnn_nopool_forward.1} parent=11 // pred_check_branch
          %423 = sbr.rel (%p421) target = $region64
        $region63: #{cifar_cnn_nopool_forward.1} parent=11 // pred_region
          _
        $region64: #{cifar_cnn_nopool_forward.1} parent=11 // pred_fallthru
          _
        // Predicated region
        $region65: #{cifar_cnn_nopool_forward.1} parent=11 // pred_check
          %p424 = pneg %p344
        $region66: #{cifar_cnn_nopool_forward.1} parent=11 // pred_check_branch
          %426 = sbr.rel (%p424) target = $region68
        $region67: #{cifar_cnn_nopool_forward.1} parent=11 // pred_region
          _
        $region68: #{cifar_cnn_nopool_forward.1} parent=11 // pred_fallthru
          _
      $region12: #{cifar_cnn_nopool_forward.1} parent=5 // pred_fallthru
        _
      %p427 = scmp.lt.s32.totalorder %s24, 2
      // Predicated region
      $region69: #{cifar_cnn_nopool_forward.1} parent=5 // pred_check
        %p428 = pneg %p427
      $region70: #{cifar_cnn_nopool_forward.1} parent=5 // pred_check_branch
        %430 = sbr.rel (%p428) target = $region72
      $region71: #{cifar_cnn_nopool_forward.1} parent=5 // pred_region
        // Predicated region
        $region73: #{cifar_cnn_nopool_forward.1} parent=71 // pred_check
          %p431 = pneg %p44
        $region74: #{cifar_cnn_nopool_forward.1} parent=71 // pred_check_branch
          %433 = sbr.rel (%p431) target = $region76
        $region75: #{cifar_cnn_nopool_forward.1} parent=71 // pred_region
          %p434 = scmp.lt.s32.totalorder %s24, 1
          %s435 = scalar_select %p434, %s24, 1
          %s436 = smul.addr %s435, 4
          %s437 = smul.addr %s436, 4
          %s438 = scalar_lea.vmem %s0, %s437
        $region76: #{cifar_cnn_nopool_forward.1} parent=71 // pred_fallthru
          _
      $region72: #{cifar_cnn_nopool_forward.1} parent=5 // pred_fallthru
        _
      %p439 = scmp.le.s32.totalorder 1, %s24
      %p440 = scmp.lt.s32.totalorder %s24, 3
      %p441 = pnand %p439, %p440
      %p442 = pneg %p441
      // Predicated region
      $region77: #{cifar_cnn_nopool_forward.1} parent=5 // pred_check
        _
      $region78: #{cifar_cnn_nopool_forward.1} parent=5 // pred_check_branch
        %444 = sbr.rel (%p441) target = $region80
      $region79: #{cifar_cnn_nopool_forward.1} parent=5 // pred_region
        %s445 = ssub.s32 %s24, 1
        %p446 = scmp.lt.s32.totalorder %s29, 1
        %s447 = scalar_select %p446, %s29, 1
        %s448 = smul.addr %s447, 4
        %s449 = smul.addr %s448, 4
        %s450 = scalar_lea.vmem %s0, %s449
        %p451 = pneg %p50
        %p452 = pneg %p47
        %p453 = pneg %p71
        %p454 = pneg %p68
        %p455 = pneg %p92
        %p456 = pneg %p89
        %p457 = pneg %p113
        %p458 = pneg %p110
        %p459 = pneg %p134
        %p460 = pneg %p131
        %p461 = pneg %p155
        %p462 = pneg %p152
        %p463 = pneg %p176
        %p464 = pneg %p173
        %p465 = pneg %p197
        %p466 = pneg %p194
        %p467 = pneg %p218
        %p468 = pneg %p215
        %p469 = pneg %p239
        %p470 = pneg %p236
        %p471 = pneg %p260
        %p472 = pneg %p257
        %p473 = pneg %p281
        %p474 = pneg %p278
        %p475 = pneg %p302
        %p476 = pneg %p299
        %p477 = pneg %p323
        %p478 = pneg %p320
        %p479 = pneg %p344
        %p480 = pneg %p341
        %p481 = pneg %p370
        %p482 = pneg %p367
        %s483 = sand.u32 %s357, 1
        %s484 = scalar_lea.sflag [#allocation3], %s483
        %s485 = sand.u32 %s357, 1
        %s486 = scalar_lea.vmem [#allocation2], %s485
        %p487 = scmp.lt.s32.totalorder %s29, 1
        %s488 = scalar_select %p487, %s29, 1
        %s489 = smul.addr %s488, 4
        %s490 = smul.addr %s489, 4
        %s491 = scalar_lea.vmem %s0, %s490
        %v493 = vld [vmem:[%s491] sm:$0xf]
        %v494 = vld [vmem:[%s491 + $0x4] sm:$0xf]
        %v495 = vld [vmem:[%s491 + $0x8] sm:$0xf]
        %v496 = vld [vmem:[%s491 + $0xc] sm:$0xf]
        %v497 = vld [vmem:[%s1] sm:$0xff]
        %v498 = vld [vmem:[%s1 + $0x8] sm:$0xff]
        %v499 = vld [vmem:[%s1 + $0x10] sm:$0xff]
        %v500 = vld [vmem:[%s1 + $0x18] sm:$0xff]
        %v501 = vld [vmem:[%s1 + $0x20] sm:$0xff]
        %v502 = vld [vmem:[%s1 + $0x28] sm:$0xff]
        %v503 = vld [vmem:[%s1 + $0x30] sm:$0xff]
        %v504 = vld [vmem:[%s1 + $0x38] sm:$0xff]
        %v505 = vld [vmem:[%s1 + $0x40] sm:$0xff]
        %v506 = vld [vmem:[%s1 + $0x48] sm:$0xff]
        %v507 = vld [vmem:[%s1 + $0x50] sm:$0xff]
        %v508 = vld [vmem:[%s1 + $0x58] sm:$0xff]
        %v509 = vld [vmem:[%s1 + $0x60] sm:$0xff]
        %v510 = vld [vmem:[%s1 + $0x68] sm:$0xff]
        %v511 = vld [vmem:[%s1 + $0x70] sm:$0xff]
        %v512 = vld [vmem:[%s1 + $0x78] sm:$0xff]
        %v513 = vld [vmem:[%s1 + $0x80] sm:$0xff]
        %v514 = vld [vmem:[%s1 + $0x88] sm:$0xff]
        %v515 = vld [vmem:[%s1 + $0x90] sm:$0xff]
        %v516 = vld [vmem:[%s1 + $0x98] sm:$0xff]
        %v517 = vld [vmem:[%s1 + $0xa0] sm:$0xff]
        %v518 = vld [vmem:[%s1 + $0xa8] sm:$0xff]
        %v519 = vld [vmem:[%s1 + $0xb0] sm:$0xff]
        %v520 = vld [vmem:[%s1 + $0xb8] sm:$0xff]
        %v521 = vld [vmem:[%s1 + $0xc0] sm:$0xff]
        %v522 = vld [vmem:[%s1 + $0xc8] sm:$0xff]
        %v523 = vld [vmem:[%s1 + $0xd0] sm:$0xff]
        %v524 = vld [vmem:[%s1 + $0xd8] sm:$0xff]
        %v525 = vld [vmem:[%s1 + $0xe0] sm:$0xff]
        %v526 = vld [vmem:[%s1 + $0xe8] sm:$0xff]
        %v527 = vld [vmem:[%s1 + $0xf0] sm:$0xff]
        %v528 = vld [vmem:[%s1 + $0xf8] sm:$0xff]
        %v529 = vld [vmem:[%s1 + $0x100] sm:$0xff]
        %v530 = vld [vmem:[%s1 + $0x108] sm:$0xff]
        %v531 = vld [vmem:[%s1 + $0x110] sm:$0xff]
        %v532 = vld [vmem:[%s1 + $0x118] sm:$0xff]
        %v533 = vld [vmem:[%s1 + $0x120] sm:$0xff]
        %v534 = vld [vmem:[%s1 + $0x128] sm:$0xff]
        %v535 = vld [vmem:[%s1 + $0x130] sm:$0xff]
        %v536 = vld [vmem:[%s1 + $0x138] sm:$0xff]
        %v537 = vld [vmem:[%s1 + $0x140] sm:$0xff]
        %v538 = vld [vmem:[%s1 + $0x148] sm:$0xff]
        %v539 = vld [vmem:[%s1 + $0x150] sm:$0xff]
        %v540 = vld [vmem:[%s1 + $0x158] sm:$0xff]
        %v541 = vld [vmem:[%s1 + $0x160] sm:$0xff]
        %v542 = vld [vmem:[%s1 + $0x168] sm:$0xff]
        %v543 = vld [vmem:[%s1 + $0x170] sm:$0xff]
        %v544 = vld [vmem:[%s1 + $0x178] sm:$0xff]
        %v545 = vld [vmem:[%s1 + $0x180] sm:$0xff]
        %v546 = vld [vmem:[%s1 + $0x188] sm:$0xff]
        %v547 = vld [vmem:[%s1 + $0x190] sm:$0xff]
        %v548 = vld [vmem:[%s1 + $0x198] sm:$0xff]
        %v549 = vld [vmem:[%s1 + $0x1a0] sm:$0xff]
        %v550 = vld [vmem:[%s1 + $0x1a8] sm:$0xff]
        %v551 = vld [vmem:[%s1 + $0x1b0] sm:$0xff]
        %v552 = vld [vmem:[%s1 + $0x1b8] sm:$0xff]
        %v553 = vld [vmem:[%s1 + $0x1c0] sm:$0xff]
        %v554 = vld [vmem:[%s1 + $0x1c8] sm:$0xff]
        %v555 = vld [vmem:[%s1 + $0x1d0] sm:$0xff]
        %v556 = vld [vmem:[%s1 + $0x1d8] sm:$0xff]
        %v557 = vld [vmem:[%s1 + $0x1e0] sm:$0xff]
        %v558 = vld [vmem:[%s1 + $0x1e8] sm:$0xff]
        %v559 = vld [vmem:[%s1 + $0x1f0] sm:$0xff]
        %v560 = vld [vmem:[%s1 + $0x1f8] sm:$0xff]
        %v561 = vld [vmem:[%s1 + $0x200] sm:$0xff]
        %v562 = vld [vmem:[%s1 + $0x208] sm:$0xff]
        %v563 = vld [vmem:[%s1 + $0x210] sm:$0xff]
        %v564 = vld [vmem:[%s1 + $0x218] sm:$0xff]
        %v565 = vld [vmem:[%s1 + $0x220] sm:$0xff]
        %v566 = vld [vmem:[%s1 + $0x228] sm:$0xff]
        %v567 = vld [vmem:[%s1 + $0x230] sm:$0xff]
        %v568 = vld [vmem:[%s1 + $0x238] sm:$0xff]
        %v569 = vld [vmem:[%s1 + $0x240] sm:$0xff]
        %v570 = vld [vmem:[%s1 + $0x248] sm:$0xff]
        %v571 = vld [vmem:[%s1 + $0x250] sm:$0xff]
        %v572 = vld [vmem:[%s1 + $0x258] sm:$0xff]
        %v573 = vld [vmem:[%s1 + $0x260] sm:$0xff]
        %v574 = vld [vmem:[%s1 + $0x268] sm:$0xff]
        %v575 = vld [vmem:[%s1 + $0x270] sm:$0xff]
        %v576 = vld [vmem:[%s1 + $0x278] sm:$0xff]
        %v577 = vld [vmem:[%s1 + $0x280] sm:$0xff]
        %v578 = vld [vmem:[%s1 + $0x288] sm:$0xff]
        %v579 = vld [vmem:[%s1 + $0x290] sm:$0xff]
        %v580 = vld [vmem:[%s1 + $0x298] sm:$0xff]
        %v581 = vld [vmem:[%s1 + $0x2a0] sm:$0xff]
        %v582 = vld [vmem:[%s1 + $0x2a8] sm:$0xff]
        %v583 = vld [vmem:[%s1 + $0x2b0] sm:$0xff]
        %v584 = vld [vmem:[%s1 + $0x2b8] sm:$0xff]
        %v585 = vld [vmem:[%s1 + $0x2c0] sm:$0xff]
        %v586 = vld [vmem:[%s1 + $0x2c8] sm:$0xff]
        %v587 = vld [vmem:[%s1 + $0x2d0] sm:$0xff]
        %v588 = vld [vmem:[%s1 + $0x2d8] sm:$0xff]
        %v589 = vld [vmem:[%s1 + $0x2e0] sm:$0xff]
        %v590 = vld [vmem:[%s1 + $0x2e8] sm:$0xff]
        %v591 = vld [vmem:[%s1 + $0x2f0] sm:$0xff]
        %v592 = vld [vmem:[%s1 + $0x2f8] sm:$0xff]
        %v593 = vld [vmem:[%s1 + $0x300] sm:$0xff]
        %v594 = vld [vmem:[%s1 + $0x308] sm:$0xff]
        %v595 = vld [vmem:[%s1 + $0x310] sm:$0xff]
        %v596 = vld [vmem:[%s1 + $0x318] sm:$0xff]
        %v597 = vld [vmem:[%s1 + $0x320] sm:$0xff]
        %v598 = vld [vmem:[%s1 + $0x328] sm:$0xff]
        %v599 = vld [vmem:[%s1 + $0x330] sm:$0xff]
        %v600 = vld [vmem:[%s1 + $0x338] sm:$0xff]
        %v601 = vld [vmem:[%s1 + $0x340] sm:$0xff]
        %v602 = vld [vmem:[%s1 + $0x348] sm:$0xff]
        %v603 = vld [vmem:[%s1 + $0x350] sm:$0xff]
        %v604 = vld [vmem:[%s1 + $0x358] sm:$0xff]
        %v609 = vunpack.c.l.b16 %v493
        %v610 = vunpack.c.l.b16 %v494
        %v611 = vunpack.c.l.b16 %v495
        %v612 = vunpack.c.l.b16 %v496
        %v613 = vpack.c.b16 %v610, %v609
        %v614 = vpack.c.b16 %v612, %v611
        %vm615 = vsmask.f32 7424
        %v617 = vshrl.u32 %v613, 16
        %v619 = vshll.u32 %v613, 16
        %v621 = vrot.slane %v619, 1
        %v622 = vor.u32 %v617, %v621
        %v624 = vshll.u32 %v614, 16
        %v626 = vrot.slane %v624, 1
        %v627 = vsel %vm615, %v622, %v626
        %v628 = vshrl.u32 %v614, 16
        %v630 = vor.u32 %v628, %v626
        %v643 = vunpack.c.l.b16 %v509
        %v644 = vunpack.c.h.b16 %v509
        %v645 = vunpack.c.l.b16 %v510
        %v646 = vunpack.c.h.b16 %v510
        %v647 = vunpack.c.l.b16 %v511
        %v648 = vunpack.c.h.b16 %v511
        %v649 = vunpack.c.l.b16 %v512
        %v650 = vunpack.c.h.b16 %v512
        %v651 = vunpack.c.l.b16 %v513
        %v652 = vunpack.c.h.b16 %v513
        %v653 = vunpack.c.l.b16 %v514
        %v654 = vunpack.c.h.b16 %v514
        %v655 = vunpack.c.l.b16 %v515
        %v656 = vunpack.c.h.b16 %v515
        %v657 = vunpack.c.l.b16 %v516
        %v658 = vunpack.c.h.b16 %v516
        %v659 = vunpack.c.l.b16 %v517
        %v660 = vunpack.c.h.b16 %v517
        %v661 = vunpack.c.l.b16 %v518
        %v662 = vunpack.c.h.b16 %v518
        %v663 = vunpack.c.l.b16 %v519
        %v664 = vunpack.c.h.b16 %v519
        %v665 = vunpack.c.l.b16 %v520
        %v666 = vunpack.c.h.b16 %v520
        %v667 = vpack.c.b16 %v645, %v643
        %v668 = vpack.c.b16 %v646, %v644
        %v669 = vpack.c.b16 %v649, %v647
        %v670 = vpack.c.b16 %v650, %v648
        %v671 = vpack.c.b16 %v653, %v651
        %v672 = vpack.c.b16 %v654, %v652
        %v673 = vpack.c.b16 %v657, %v655
        %v674 = vpack.c.b16 %v658, %v656
        %v675 = vpack.c.b16 %v661, %v659
        %v676 = vpack.c.b16 %v662, %v660
        %v677 = vpack.c.b16 %v665, %v663
        %v678 = vpack.c.b16 %v666, %v664
        %vm691 = vcmask 785408
        %v693 = vsel %vm691, %v627, 0
        %v696 = vsel %vm691, %v630, 0
        %698 = vmatpush.bf16.msra.mxu0 0
        %699 = vmatpush.bf16.msra.mxu0 0
        %700 = vmatpush.bf16.msra.mxu0 %v677
        %701 = vmatpush.bf16.msra.mxu0 %v675
        %702 = vmatpush.bf16.msra.mxu0 %v673
        %703 = vmatpush.bf16.msra.mxu0 %v671
        %704 = vmatpush.bf16.msra.mxu0 %v669
        %705 = vmatpush.bf16.msra.mxu0 %v667
        %706 = vmatmul.bf16.gmra.mxu0 %v693
        %v707 = vpop.f32.mrf.mxu0
        %v708 = vadd.f32 0.0, %v707
        %v709 = vpop.f32.mrf.mxu0
        %v710 = vadd.f32 0.0, %v709
        %711 = vmatmul.bf16.gmra.mxu0 %v696
        %v712 = vpop.f32.mrf.mxu0
        %v713 = vadd.f32 0.0, %v712
        %v714 = vpop.f32.mrf.mxu0
        %715 = vdwg.mxu0
        %716 = vmatpush.bf16.msra.mxu0 0
        %717 = vmatpush.bf16.msra.mxu0 0
        %718 = vmatpush.bf16.msra.mxu0 %v678
        %719 = vmatpush.bf16.msra.mxu0 %v676
        %720 = vmatpush.bf16.msra.mxu0 %v674
        %721 = vmatpush.bf16.msra.mxu0 %v672
        %722 = vmatpush.bf16.msra.mxu0 %v670
        %723 = vmatpush.bf16.msra.mxu0 %v668
        %724 = vmatmul.bf16.gmra.mxu0 %v693
        %v725 = vpop.f32.mrf.mxu0
        %v726 = vadd.f32 0.0, %v725
        %v727 = vpop.f32.mrf.mxu0
        %v728 = vadd.f32 0.0, %v727
        %729 = vmatmul.bf16.gmra.mxu0 %v696
        %v730 = vpop.f32.mrf.mxu0
        %v731 = vadd.f32 0.0, %v730
        %v732 = vpop.f32.mrf.mxu0
        %733 = vdwg.mxu0
        %v734 = vpack.c.b16 %v611, %v611
        %v747 = vunpack.c.l.b16 %v497
        %v748 = vunpack.c.h.b16 %v497
        %v749 = vunpack.c.l.b16 %v498
        %v750 = vunpack.c.h.b16 %v498
        %v751 = vunpack.c.l.b16 %v499
        %v752 = vunpack.c.h.b16 %v499
        %v753 = vunpack.c.l.b16 %v500
        %v754 = vunpack.c.h.b16 %v500
        %v755 = vunpack.c.l.b16 %v501
        %v756 = vunpack.c.h.b16 %v501
        %v757 = vunpack.c.l.b16 %v502
        %v758 = vunpack.c.h.b16 %v502
        %v759 = vunpack.c.l.b16 %v503
        %v760 = vunpack.c.h.b16 %v503
        %v761 = vunpack.c.l.b16 %v504
        %v762 = vunpack.c.h.b16 %v504
        %v763 = vunpack.c.l.b16 %v505
        %v764 = vunpack.c.h.b16 %v505
        %v765 = vunpack.c.l.b16 %v506
        %v766 = vunpack.c.h.b16 %v506
        %v767 = vunpack.c.l.b16 %v507
        %v768 = vunpack.c.h.b16 %v507
        %v769 = vunpack.c.l.b16 %v508
        %v770 = vunpack.c.h.b16 %v508
        %v771 = vpack.c.b16 %v749, %v747
        %v772 = vpack.c.b16 %v750, %v748
        %v773 = vpack.c.b16 %v753, %v751
        %v774 = vpack.c.b16 %v754, %v752
        %v775 = vpack.c.b16 %v757, %v755
        %v776 = vpack.c.b16 %v758, %v756
        %v777 = vpack.c.b16 %v761, %v759
        %v778 = vpack.c.b16 %v762, %v760
        %v779 = vpack.c.b16 %v765, %v763
        %v780 = vpack.c.b16 %v766, %v764
        %v781 = vpack.c.b16 %v769, %v767
        %v782 = vpack.c.b16 %v770, %v768
        %v795 = vsel %vm691, %v613, 0
        %v798 = vsel %vm691, %v734, 0
        %800 = vmatpush.bf16.msra.mxu0 0
        %801 = vmatpush.bf16.msra.mxu0 0
        %802 = vmatpush.bf16.msra.mxu0 %v781
        %803 = vmatpush.bf16.msra.mxu0 %v779
        %804 = vmatpush.bf16.msra.mxu0 %v777
        %805 = vmatpush.bf16.msra.mxu0 %v775
        %806 = vmatpush.bf16.msra.mxu0 %v773
        %807 = vmatpush.bf16.msra.mxu0 %v771
        %808 = vmatmul.bf16.gmra.mxu0 %v795
        %v809 = vpop.f32.mrf.mxu0
        %v810 = vadd.f32 %v708, %v809
        %v811 = vpop.f32.mrf.mxu0
        %v812 = vadd.f32 %v710, %v811
        %813 = vmatmul.bf16.gmra.mxu0 %v798
        %v814 = vpop.f32.mrf.mxu0
        %v815 = vadd.f32 %v713, %v814
        %v816 = vpop.f32.mrf.mxu0
        %817 = vdwg.mxu0
        %818 = vmatpush.bf16.msra.mxu0 0
        %819 = vmatpush.bf16.msra.mxu0 0
        %820 = vmatpush.bf16.msra.mxu0 %v782
        %821 = vmatpush.bf16.msra.mxu0 %v780
        %822 = vmatpush.bf16.msra.mxu0 %v778
        %823 = vmatpush.bf16.msra.mxu0 %v776
        %824 = vmatpush.bf16.msra.mxu0 %v774
        %825 = vmatpush.bf16.msra.mxu0 %v772
        %826 = vmatmul.bf16.gmra.mxu0 %v795
        %v827 = vpop.f32.mrf.mxu0
        %v828 = vadd.f32 %v726, %v827
        %v829 = vpop.f32.mrf.mxu0
        %v830 = vadd.f32 %v728, %v829
        %831 = vmatmul.bf16.gmra.mxu0 %v798
        %v832 = vpop.f32.mrf.mxu0
        %v833 = vadd.f32 %v731, %v832
        %v834 = vpop.f32.mrf.mxu0
        %835 = vdwg.mxu0
        %vm836 = vcmask 1046528
        %v837 = vrot.slane %v613, 1
        %v838 = vrot.slane %v614, 1
        %v839 = vsel %vm836, %v837, %v838
        %v852 = vunpack.c.l.b16 %v521
        %v853 = vunpack.c.h.b16 %v521
        %v854 = vunpack.c.l.b16 %v522
        %v855 = vunpack.c.h.b16 %v522
        %v856 = vunpack.c.l.b16 %v523
        %v857 = vunpack.c.h.b16 %v523
        %v858 = vunpack.c.l.b16 %v524
        %v859 = vunpack.c.h.b16 %v524
        %v860 = vunpack.c.l.b16 %v525
        %v861 = vunpack.c.h.b16 %v525
        %v862 = vunpack.c.l.b16 %v526
        %v863 = vunpack.c.h.b16 %v526
        %v864 = vunpack.c.l.b16 %v527
        %v865 = vunpack.c.h.b16 %v527
        %v866 = vunpack.c.l.b16 %v528
        %v867 = vunpack.c.h.b16 %v528
        %v868 = vunpack.c.l.b16 %v529
        %v869 = vunpack.c.h.b16 %v529
        %v870 = vunpack.c.l.b16 %v530
        %v871 = vunpack.c.h.b16 %v530
        %v872 = vunpack.c.l.b16 %v531
        %v873 = vunpack.c.h.b16 %v531
        %v874 = vunpack.c.l.b16 %v532
        %v875 = vunpack.c.h.b16 %v532
        %v876 = vpack.c.b16 %v854, %v852
        %v877 = vpack.c.b16 %v855, %v853
        %v878 = vpack.c.b16 %v858, %v856
        %v879 = vpack.c.b16 %v859, %v857
        %v880 = vpack.c.b16 %v862, %v860
        %v881 = vpack.c.b16 %v863, %v861
        %v882 = vpack.c.b16 %v866, %v864
        %v883 = vpack.c.b16 %v867, %v865
        %v884 = vpack.c.b16 %v870, %v868
        %v885 = vpack.c.b16 %v871, %v869
        %v886 = vpack.c.b16 %v874, %v872
        %v887 = vpack.c.b16 %v875, %v873
        %v901 = vsel %vm691, %v839, 0
        %v904 = vsel %vm691, %v838, 0
        %906 = vmatpush.bf16.msra.mxu0 0
        %907 = vmatpush.bf16.msra.mxu0 0
        %908 = vmatpush.bf16.msra.mxu0 %v886
        %909 = vmatpush.bf16.msra.mxu0 %v884
        %910 = vmatpush.bf16.msra.mxu0 %v882
        %911 = vmatpush.bf16.msra.mxu0 %v880
        %912 = vmatpush.bf16.msra.mxu0 %v878
        %913 = vmatpush.bf16.msra.mxu0 %v876
        %914 = vmatmul.bf16.gmra.mxu0 %v901
        %v915 = vpop.f32.mrf.mxu0
        %v916 = vadd.f32 0.0, %v915
        %v917 = vpop.f32.mrf.mxu0
        %v918 = vadd.f32 0.0, %v917
        %919 = vmatmul.bf16.gmra.mxu0 %v904
        %v920 = vpop.f32.mrf.mxu0
        %v921 = vadd.f32 0.0, %v920
        %v922 = vpop.f32.mrf.mxu0
        %923 = vdwg.mxu0
        %924 = vmatpush.bf16.msra.mxu0 0
        %925 = vmatpush.bf16.msra.mxu0 0
        %926 = vmatpush.bf16.msra.mxu0 %v887
        %927 = vmatpush.bf16.msra.mxu0 %v885
        %928 = vmatpush.bf16.msra.mxu0 %v883
        %929 = vmatpush.bf16.msra.mxu0 %v881
        %930 = vmatpush.bf16.msra.mxu0 %v879
        %931 = vmatpush.bf16.msra.mxu0 %v877
        %932 = vmatmul.bf16.gmra.mxu0 %v901
        %v933 = vpop.f32.mrf.mxu0
        %v934 = vadd.f32 0.0, %v933
        %v935 = vpop.f32.mrf.mxu0
        %v936 = vadd.f32 0.0, %v935
        %937 = vmatmul.bf16.gmra.mxu0 %v904
        %v938 = vpop.f32.mrf.mxu0
        %v939 = vadd.f32 0.0, %v938
        %v940 = vpop.f32.mrf.mxu0
        %941 = vdwg.mxu0
        %v942 = vadd.f32 %v810, %v916
        %v943 = vadd.f32 %v828, %v934
        %v944 = vadd.f32 %v812, %v918
        %v945 = vadd.f32 %v830, %v936
        %v946 = vadd.f32 %v815, %v921
        %v947 = vadd.f32 %v833, %v939
        %vm948 = vsmask.f32 6400
        %v949 = vrot.slane %v617, 1
        %v950 = vrot.slane %v619, 2
        %v951 = vor.u32 %v949, %v950
        %v952 = vrot.slane %v628, 1
        %v953 = vrot.slane %v624, 2
        %v954 = vor.u32 %v952, %v953
        %v955 = vsel %vm948, %v951, %v954
        %v968 = vunpack.c.l.b16 %v533
        %v969 = vunpack.c.h.b16 %v533
        %v970 = vunpack.c.l.b16 %v534
        %v971 = vunpack.c.h.b16 %v534
        %v972 = vunpack.c.l.b16 %v535
        %v973 = vunpack.c.h.b16 %v535
        %v974 = vunpack.c.l.b16 %v536
        %v975 = vunpack.c.h.b16 %v536
        %v976 = vunpack.c.l.b16 %v537
        %v977 = vunpack.c.h.b16 %v537
        %v978 = vunpack.c.l.b16 %v538
        %v979 = vunpack.c.h.b16 %v538
        %v980 = vunpack.c.l.b16 %v539
        %v981 = vunpack.c.h.b16 %v539
        %v982 = vunpack.c.l.b16 %v540
        %v983 = vunpack.c.h.b16 %v540
        %v984 = vunpack.c.l.b16 %v541
        %v985 = vunpack.c.h.b16 %v541
        %v986 = vunpack.c.l.b16 %v542
        %v987 = vunpack.c.h.b16 %v542
        %v988 = vunpack.c.l.b16 %v543
        %v989 = vunpack.c.h.b16 %v543
        %v990 = vunpack.c.l.b16 %v544
        %v991 = vunpack.c.h.b16 %v544
        %v992 = vpack.c.b16 %v970, %v968
        %v993 = vpack.c.b16 %v971, %v969
        %v994 = vpack.c.b16 %v974, %v972
        %v995 = vpack.c.b16 %v975, %v973
        %v996 = vpack.c.b16 %v978, %v976
        %v997 = vpack.c.b16 %v979, %v977
        %v998 = vpack.c.b16 %v982, %v980
        %v999 = vpack.c.b16 %v983, %v981
        %v1000 = vpack.c.b16 %v986, %v984
        %v1001 = vpack.c.b16 %v987, %v985
        %v1002 = vpack.c.b16 %v990, %v988
        %v1003 = vpack.c.b16 %v991, %v989
        %v1017 = vsel %vm691, %v955, 0
        %v1020 = vsel %vm691, %v954, 0
        %1022 = vmatpush.bf16.msra.mxu0 0
        %1023 = vmatpush.bf16.msra.mxu0 0
        %1024 = vmatpush.bf16.msra.mxu0 %v1002
        %1025 = vmatpush.bf16.msra.mxu0 %v1000
        %1026 = vmatpush.bf16.msra.mxu0 %v998
        %1027 = vmatpush.bf16.msra.mxu0 %v996
        %1028 = vmatpush.bf16.msra.mxu0 %v994
        %1029 = vmatpush.bf16.msra.mxu0 %v992
        %1030 = vmatmul.bf16.gmra.mxu0 %v1017
        %v1031 = vpop.f32.mrf.mxu0
        %v1032 = vadd.f32 0.0, %v1031
        %v1033 = vpop.f32.mrf.mxu0
        %v1034 = vadd.f32 0.0, %v1033
        %1035 = vmatmul.bf16.gmra.mxu0 %v1020
        %v1036 = vpop.f32.mrf.mxu0
        %v1037 = vadd.f32 0.0, %v1036
        %v1038 = vpop.f32.mrf.mxu0
        %1039 = vdwg.mxu0
        %1040 = vmatpush.bf16.msra.mxu0 0
        %1041 = vmatpush.bf16.msra.mxu0 0
        %1042 = vmatpush.bf16.msra.mxu0 %v1003
        %1043 = vmatpush.bf16.msra.mxu0 %v1001
        %1044 = vmatpush.bf16.msra.mxu0 %v999
        %1045 = vmatpush.bf16.msra.mxu0 %v997
        %1046 = vmatpush.bf16.msra.mxu0 %v995
        %1047 = vmatpush.bf16.msra.mxu0 %v993
        %1048 = vmatmul.bf16.gmra.mxu0 %v1017
        %v1049 = vpop.f32.mrf.mxu0
        %v1050 = vadd.f32 0.0, %v1049
        %v1051 = vpop.f32.mrf.mxu0
        %v1052 = vadd.f32 0.0, %v1051
        %1053 = vmatmul.bf16.gmra.mxu0 %v1020
        %v1054 = vpop.f32.mrf.mxu0
        %v1055 = vadd.f32 0.0, %v1054
        %v1056 = vpop.f32.mrf.mxu0
        %1057 = vdwg.mxu0
        %v1058 = vadd.f32 %v942, %v1032
        %v1059 = vadd.f32 %v943, %v1050
        %v1060 = vadd.f32 %v944, %v1034
        %v1061 = vadd.f32 %v945, %v1052
        %v1062 = vadd.f32 %v946, %v1037
        %v1063 = vadd.f32 %v947, %v1055
        %vm1064 = vcmask 1045504
        %v1065 = vrot.slane %v613, 2
        %v1066 = vrot.slane %v614, 2
        %v1067 = vsel %vm1064, %v1065, %v1066
        %v1080 = vunpack.c.l.b16 %v545
        %v1081 = vunpack.c.h.b16 %v545
        %v1082 = vunpack.c.l.b16 %v546
        %v1083 = vunpack.c.h.b16 %v546
        %v1084 = vunpack.c.l.b16 %v547
        %v1085 = vunpack.c.h.b16 %v547
        %v1086 = vunpack.c.l.b16 %v548
        %v1087 = vunpack.c.h.b16 %v548
        %v1088 = vunpack.c.l.b16 %v549
        %v1089 = vunpack.c.h.b16 %v549
        %v1090 = vunpack.c.l.b16 %v550
        %v1091 = vunpack.c.h.b16 %v550
        %v1092 = vunpack.c.l.b16 %v551
        %v1093 = vunpack.c.h.b16 %v551
        %v1094 = vunpack.c.l.b16 %v552
        %v1095 = vunpack.c.h.b16 %v552
        %v1096 = vunpack.c.l.b16 %v553
        %v1097 = vunpack.c.h.b16 %v553
        %v1098 = vunpack.c.l.b16 %v554
        %v1099 = vunpack.c.h.b16 %v554
        %v1100 = vunpack.c.l.b16 %v555
        %v1101 = vunpack.c.h.b16 %v555
        %v1102 = vunpack.c.l.b16 %v556
        %v1103 = vunpack.c.h.b16 %v556
        %v1104 = vpack.c.b16 %v1082, %v1080
        %v1105 = vpack.c.b16 %v1083, %v1081
        %v1106 = vpack.c.b16 %v1086, %v1084
        %v1107 = vpack.c.b16 %v1087, %v1085
        %v1108 = vpack.c.b16 %v1090, %v1088
        %v1109 = vpack.c.b16 %v1091, %v1089
        %v1110 = vpack.c.b16 %v1094, %v1092
        %v1111 = vpack.c.b16 %v1095, %v1093
        %v1112 = vpack.c.b16 %v1098, %v1096
        %v1113 = vpack.c.b16 %v1099, %v1097
        %v1114 = vpack.c.b16 %v1102, %v1100
        %v1115 = vpack.c.b16 %v1103, %v1101
        %v1129 = vsel %vm691, %v1067, 0
        %v1132 = vsel %vm691, %v1066, 0
        %1134 = vmatpush.bf16.msra.mxu0 0
        %1135 = vmatpush.bf16.msra.mxu0 0
        %1136 = vmatpush.bf16.msra.mxu0 %v1114
        %1137 = vmatpush.bf16.msra.mxu0 %v1112
        %1138 = vmatpush.bf16.msra.mxu0 %v1110
        %1139 = vmatpush.bf16.msra.mxu0 %v1108
        %1140 = vmatpush.bf16.msra.mxu0 %v1106
        %1141 = vmatpush.bf16.msra.mxu0 %v1104
        %1142 = vmatmul.bf16.gmra.mxu0 %v1129
        %v1143 = vpop.f32.mrf.mxu0
        %v1144 = vadd.f32 0.0, %v1143
        %v1145 = vpop.f32.mrf.mxu0
        %v1146 = vadd.f32 0.0, %v1145
        %1147 = vmatmul.bf16.gmra.mxu0 %v1132
        %v1148 = vpop.f32.mrf.mxu0
        %v1149 = vadd.f32 0.0, %v1148
        %v1150 = vpop.f32.mrf.mxu0
        %1151 = vdwg.mxu0
        %1152 = vmatpush.bf16.msra.mxu0 0
        %1153 = vmatpush.bf16.msra.mxu0 0
        %1154 = vmatpush.bf16.msra.mxu0 %v1115
        %1155 = vmatpush.bf16.msra.mxu0 %v1113
        %1156 = vmatpush.bf16.msra.mxu0 %v1111
        %1157 = vmatpush.bf16.msra.mxu0 %v1109
        %1158 = vmatpush.bf16.msra.mxu0 %v1107
        %1159 = vmatpush.bf16.msra.mxu0 %v1105
        %1160 = vmatmul.bf16.gmra.mxu0 %v1129
        %v1161 = vpop.f32.mrf.mxu0
        %v1162 = vadd.f32 0.0, %v1161
        %v1163 = vpop.f32.mrf.mxu0
        %v1164 = vadd.f32 0.0, %v1163
        %1165 = vmatmul.bf16.gmra.mxu0 %v1132
        %v1166 = vpop.f32.mrf.mxu0
        %v1167 = vadd.f32 0.0, %v1166
        %v1168 = vpop.f32.mrf.mxu0
        %1169 = vdwg.mxu0
        %v1170 = vadd.f32 %v1058, %v1144
        %v1171 = vadd.f32 %v1059, %v1162
        %v1172 = vadd.f32 %v1060, %v1146
        %v1173 = vadd.f32 %v1061, %v1164
        %v1174 = vadd.f32 %v1062, %v1149
        %v1175 = vadd.f32 %v1063, %v1167
        %vm1176 = vsmask.f32 5376
        %v1177 = vrot.slane %v617, 2
        %v1178 = vrot.slane %v619, 3
        %v1179 = vor.u32 %v1177, %v1178
        %v1180 = vrot.slane %v628, 2
        %v1181 = vrot.slane %v624, 3
        %v1182 = vor.u32 %v1180, %v1181
        %v1183 = vsel %vm1176, %v1179, %v1182
        %v1196 = vunpack.c.l.b16 %v557
        %v1197 = vunpack.c.h.b16 %v557
        %v1198 = vunpack.c.l.b16 %v558
        %v1199 = vunpack.c.h.b16 %v558
        %v1200 = vunpack.c.l.b16 %v559
        %v1201 = vunpack.c.h.b16 %v559
        %v1202 = vunpack.c.l.b16 %v560
        %v1203 = vunpack.c.h.b16 %v560
        %v1204 = vunpack.c.l.b16 %v561
        %v1205 = vunpack.c.h.b16 %v561
        %v1206 = vunpack.c.l.b16 %v562
        %v1207 = vunpack.c.h.b16 %v562
        %v1208 = vunpack.c.l.b16 %v563
        %v1209 = vunpack.c.h.b16 %v563
        %v1210 = vunpack.c.l.b16 %v564
        %v1211 = vunpack.c.h.b16 %v564
        %v1212 = vunpack.c.l.b16 %v565
        %v1213 = vunpack.c.h.b16 %v565
        %v1214 = vunpack.c.l.b16 %v566
        %v1215 = vunpack.c.h.b16 %v566
        %v1216 = vunpack.c.l.b16 %v567
        %v1217 = vunpack.c.h.b16 %v567
        %v1218 = vunpack.c.l.b16 %v568
        %v1219 = vunpack.c.h.b16 %v568
        %v1220 = vpack.c.b16 %v1198, %v1196
        %v1221 = vpack.c.b16 %v1199, %v1197
        %v1222 = vpack.c.b16 %v1202, %v1200
        %v1223 = vpack.c.b16 %v1203, %v1201
        %v1224 = vpack.c.b16 %v1206, %v1204
        %v1225 = vpack.c.b16 %v1207, %v1205
        %v1226 = vpack.c.b16 %v1210, %v1208
        %v1227 = vpack.c.b16 %v1211, %v1209
        %v1228 = vpack.c.b16 %v1214, %v1212
        %v1229 = vpack.c.b16 %v1215, %v1213
        %v1230 = vpack.c.b16 %v1218, %v1216
        %v1231 = vpack.c.b16 %v1219, %v1217
        %v1245 = vsel %vm691, %v1183, 0
        %v1248 = vsel %vm691, %v1182, 0
        %1250 = vmatpush.bf16.msra.mxu0 0
        %1251 = vmatpush.bf16.msra.mxu0 0
        %1252 = vmatpush.bf16.msra.mxu0 %v1230
        %1253 = vmatpush.bf16.msra.mxu0 %v1228
        %1254 = vmatpush.bf16.msra.mxu0 %v1226
        %1255 = vmatpush.bf16.msra.mxu0 %v1224
        %1256 = vmatpush.bf16.msra.mxu0 %v1222
        %1257 = vmatpush.bf16.msra.mxu0 %v1220
        %1258 = vmatmul.bf16.gmra.mxu0 %v1245
        %v1259 = vpop.f32.mrf.mxu0
        %v1260 = vadd.f32 0.0, %v1259
        %v1261 = vpop.f32.mrf.mxu0
        %v1262 = vadd.f32 0.0, %v1261
        %1263 = vmatmul.bf16.gmra.mxu0 %v1248
        %v1264 = vpop.f32.mrf.mxu0
        %v1265 = vadd.f32 0.0, %v1264
        %v1266 = vpop.f32.mrf.mxu0
        %1267 = vdwg.mxu0
        %1268 = vmatpush.bf16.msra.mxu0 0
        %1269 = vmatpush.bf16.msra.mxu0 0
        %1270 = vmatpush.bf16.msra.mxu0 %v1231
        %1271 = vmatpush.bf16.msra.mxu0 %v1229
        %1272 = vmatpush.bf16.msra.mxu0 %v1227
        %1273 = vmatpush.bf16.msra.mxu0 %v1225
        %1274 = vmatpush.bf16.msra.mxu0 %v1223
        %1275 = vmatpush.bf16.msra.mxu0 %v1221
        %1276 = vmatmul.bf16.gmra.mxu0 %v1245
        %v1277 = vpop.f32.mrf.mxu0
        %v1278 = vadd.f32 0.0, %v1277
        %v1279 = vpop.f32.mrf.mxu0
        %v1280 = vadd.f32 0.0, %v1279
        %1281 = vmatmul.bf16.gmra.mxu0 %v1248
        %v1282 = vpop.f32.mrf.mxu0
        %v1283 = vadd.f32 0.0, %v1282
        %v1284 = vpop.f32.mrf.mxu0
        %1285 = vdwg.mxu0
        %v1286 = vadd.f32 %v1170, %v1260
        %v1287 = vadd.f32 %v1171, %v1278
        %v1288 = vadd.f32 %v1172, %v1262
        %v1289 = vadd.f32 %v1173, %v1280
        %v1290 = vadd.f32 %v1174, %v1265
        %v1291 = vadd.f32 %v1175, %v1283
        %vm1292 = vcmask 1044480
        %v1293 = vrot.slane %v613, 3
        %v1294 = vrot.slane %v614, 3
        %v1295 = vsel %vm1292, %v1293, %v1294
        %v1308 = vunpack.c.l.b16 %v569
        %v1309 = vunpack.c.h.b16 %v569
        %v1310 = vunpack.c.l.b16 %v570
        %v1311 = vunpack.c.h.b16 %v570
        %v1312 = vunpack.c.l.b16 %v571
        %v1313 = vunpack.c.h.b16 %v571
        %v1314 = vunpack.c.l.b16 %v572
        %v1315 = vunpack.c.h.b16 %v572
        %v1316 = vunpack.c.l.b16 %v573
        %v1317 = vunpack.c.h.b16 %v573
        %v1318 = vunpack.c.l.b16 %v574
        %v1319 = vunpack.c.h.b16 %v574
        %v1320 = vunpack.c.l.b16 %v575
        %v1321 = vunpack.c.h.b16 %v575
        %v1322 = vunpack.c.l.b16 %v576
        %v1323 = vunpack.c.h.b16 %v576
        %v1324 = vunpack.c.l.b16 %v577
        %v1325 = vunpack.c.h.b16 %v577
        %v1326 = vunpack.c.l.b16 %v578
        %v1327 = vunpack.c.h.b16 %v578
        %v1328 = vunpack.c.l.b16 %v579
        %v1329 = vunpack.c.h.b16 %v579
        %v1330 = vunpack.c.l.b16 %v580
        %v1331 = vunpack.c.h.b16 %v580
        %v1332 = vpack.c.b16 %v1310, %v1308
        %v1333 = vpack.c.b16 %v1311, %v1309
        %v1334 = vpack.c.b16 %v1314, %v1312
        %v1335 = vpack.c.b16 %v1315, %v1313
        %v1336 = vpack.c.b16 %v1318, %v1316
        %v1337 = vpack.c.b16 %v1319, %v1317
        %v1338 = vpack.c.b16 %v1322, %v1320
        %v1339 = vpack.c.b16 %v1323, %v1321
        %v1340 = vpack.c.b16 %v1326, %v1324
        %v1341 = vpack.c.b16 %v1327, %v1325
        %v1342 = vpack.c.b16 %v1330, %v1328
        %v1343 = vpack.c.b16 %v1331, %v1329
        %v1357 = vsel %vm691, %v1295, 0
        %v1360 = vsel %vm691, %v1294, 0
        %1362 = vmatpush.bf16.msra.mxu0 0
        %1363 = vmatpush.bf16.msra.mxu0 0
        %1364 = vmatpush.bf16.msra.mxu0 %v1342
        %1365 = vmatpush.bf16.msra.mxu0 %v1340
        %1366 = vmatpush.bf16.msra.mxu0 %v1338
        %1367 = vmatpush.bf16.msra.mxu0 %v1336
        %1368 = vmatpush.bf16.msra.mxu0 %v1334
        %1369 = vmatpush.bf16.msra.mxu0 %v1332
        %1370 = vmatmul.bf16.gmra.mxu0 %v1357
        %v1371 = vpop.f32.mrf.mxu0
        %v1372 = vadd.f32 0.0, %v1371
        %v1373 = vpop.f32.mrf.mxu0
        %v1374 = vadd.f32 0.0, %v1373
        %1375 = vmatmul.bf16.gmra.mxu0 %v1360
        %v1376 = vpop.f32.mrf.mxu0
        %v1377 = vadd.f32 0.0, %v1376
        %v1378 = vpop.f32.mrf.mxu0
        %1379 = vdwg.mxu0
        %1380 = vmatpush.bf16.msra.mxu0 0
        %1381 = vmatpush.bf16.msra.mxu0 0
        %1382 = vmatpush.bf16.msra.mxu0 %v1343
        %1383 = vmatpush.bf16.msra.mxu0 %v1341
        %1384 = vmatpush.bf16.msra.mxu0 %v1339
        %1385 = vmatpush.bf16.msra.mxu0 %v1337
        %1386 = vmatpush.bf16.msra.mxu0 %v1335
        %1387 = vmatpush.bf16.msra.mxu0 %v1333
        %1388 = vmatmul.bf16.gmra.mxu0 %v1357
        %v1389 = vpop.f32.mrf.mxu0
        %v1390 = vadd.f32 0.0, %v1389
        %v1391 = vpop.f32.mrf.mxu0
        %v1392 = vadd.f32 0.0, %v1391
        %1393 = vmatmul.bf16.gmra.mxu0 %v1360
        %v1394 = vpop.f32.mrf.mxu0
        %v1395 = vadd.f32 0.0, %v1394
        %v1396 = vpop.f32.mrf.mxu0
        %1397 = vdwg.mxu0
        %v1398 = vadd.f32 %v1286, %v1372
        %v1399 = vadd.f32 %v1287, %v1390
        %v1400 = vadd.f32 %v1288, %v1374
        %v1401 = vadd.f32 %v1289, %v1392
        %v1402 = vadd.f32 %v1290, %v1377
        %v1403 = vadd.f32 %v1291, %v1395
        %vm1404 = vsmask.f32 4352
        %v1405 = vrot.slane %v617, 3
        %v1406 = vrot.slane %v619, 4
        %v1407 = vor.u32 %v1405, %v1406
        %v1408 = vrot.slane %v628, 3
        %v1409 = vrot.slane %v624, 4
        %v1410 = vor.u32 %v1408, %v1409
        %v1411 = vsel %vm1404, %v1407, %v1410
        %v1424 = vunpack.c.l.b16 %v581
        %v1425 = vunpack.c.h.b16 %v581
        %v1426 = vunpack.c.l.b16 %v582
        %v1427 = vunpack.c.h.b16 %v582
        %v1428 = vunpack.c.l.b16 %v583
        %v1429 = vunpack.c.h.b16 %v583
        %v1430 = vunpack.c.l.b16 %v584
        %v1431 = vunpack.c.h.b16 %v584
        %v1432 = vunpack.c.l.b16 %v585
        %v1433 = vunpack.c.h.b16 %v585
        %v1434 = vunpack.c.l.b16 %v586
        %v1435 = vunpack.c.h.b16 %v586
        %v1436 = vunpack.c.l.b16 %v587
        %v1437 = vunpack.c.h.b16 %v587
        %v1438 = vunpack.c.l.b16 %v588
        %v1439 = vunpack.c.h.b16 %v588
        %v1440 = vunpack.c.l.b16 %v589
        %v1441 = vunpack.c.h.b16 %v589
        %v1442 = vunpack.c.l.b16 %v590
        %v1443 = vunpack.c.h.b16 %v590
        %v1444 = vunpack.c.l.b16 %v591
        %v1445 = vunpack.c.h.b16 %v591
        %v1446 = vunpack.c.l.b16 %v592
        %v1447 = vunpack.c.h.b16 %v592
        %v1448 = vpack.c.b16 %v1426, %v1424
        %v1449 = vpack.c.b16 %v1427, %v1425
        %v1450 = vpack.c.b16 %v1430, %v1428
        %v1451 = vpack.c.b16 %v1431, %v1429
        %v1452 = vpack.c.b16 %v1434, %v1432
        %v1453 = vpack.c.b16 %v1435, %v1433
        %v1454 = vpack.c.b16 %v1438, %v1436
        %v1455 = vpack.c.b16 %v1439, %v1437
        %v1456 = vpack.c.b16 %v1442, %v1440
        %v1457 = vpack.c.b16 %v1443, %v1441
        %v1458 = vpack.c.b16 %v1446, %v1444
        %v1459 = vpack.c.b16 %v1447, %v1445
        %v1473 = vsel %vm691, %v1411, 0
        %v1476 = vsel %vm691, %v1410, 0
        %1478 = vmatpush.bf16.msra.mxu0 0
        %1479 = vmatpush.bf16.msra.mxu0 0
        %1480 = vmatpush.bf16.msra.mxu0 %v1458
        %1481 = vmatpush.bf16.msra.mxu0 %v1456
        %1482 = vmatpush.bf16.msra.mxu0 %v1454
        %1483 = vmatpush.bf16.msra.mxu0 %v1452
        %1484 = vmatpush.bf16.msra.mxu0 %v1450
        %1485 = vmatpush.bf16.msra.mxu0 %v1448
        %1486 = vmatmul.bf16.gmra.mxu0 %v1473
        %v1487 = vpop.f32.mrf.mxu0
        %v1488 = vadd.f32 0.0, %v1487
        %v1489 = vpop.f32.mrf.mxu0
        %v1490 = vadd.f32 0.0, %v1489
        %1491 = vmatmul.bf16.gmra.mxu0 %v1476
        %v1492 = vpop.f32.mrf.mxu0
        %v1493 = vadd.f32 0.0, %v1492
        %v1494 = vpop.f32.mrf.mxu0
        %1495 = vdwg.mxu0
        %1496 = vmatpush.bf16.msra.mxu0 0
        %1497 = vmatpush.bf16.msra.mxu0 0
        %1498 = vmatpush.bf16.msra.mxu0 %v1459
        %1499 = vmatpush.bf16.msra.mxu0 %v1457
        %1500 = vmatpush.bf16.msra.mxu0 %v1455
        %1501 = vmatpush.bf16.msra.mxu0 %v1453
        %1502 = vmatpush.bf16.msra.mxu0 %v1451
        %1503 = vmatpush.bf16.msra.mxu0 %v1449
        %1504 = vmatmul.bf16.gmra.mxu0 %v1473
        %v1505 = vpop.f32.mrf.mxu0
        %v1506 = vadd.f32 0.0, %v1505
        %v1507 = vpop.f32.mrf.mxu0
        %v1508 = vadd.f32 0.0, %v1507
        %1509 = vmatmul.bf16.gmra.mxu0 %v1476
        %v1510 = vpop.f32.mrf.mxu0
        %v1511 = vadd.f32 0.0, %v1510
        %v1512 = vpop.f32.mrf.mxu0
        %1513 = vdwg.mxu0
        %v1514 = vadd.f32 %v1398, %v1488
        %v1515 = vadd.f32 %v1399, %v1506
        %v1516 = vadd.f32 %v1400, %v1490
        %v1517 = vadd.f32 %v1401, %v1508
        %v1518 = vadd.f32 %v1402, %v1493
        %v1519 = vadd.f32 %v1403, %v1511
        %v1520 = vpack.c.b16 %v611, %v610
        %v1521 = vpack.c.b16 %v612, %v612
        %v1534 = vunpack.c.l.b16 %v593
        %v1535 = vunpack.c.h.b16 %v593
        %v1536 = vunpack.c.l.b16 %v594
        %v1537 = vunpack.c.h.b16 %v594
        %v1538 = vunpack.c.l.b16 %v595
        %v1539 = vunpack.c.h.b16 %v595
        %v1540 = vunpack.c.l.b16 %v596
        %v1541 = vunpack.c.h.b16 %v596
        %v1542 = vunpack.c.l.b16 %v597
        %v1543 = vunpack.c.h.b16 %v597
        %v1544 = vunpack.c.l.b16 %v598
        %v1545 = vunpack.c.h.b16 %v598
        %v1546 = vunpack.c.l.b16 %v599
        %v1547 = vunpack.c.h.b16 %v599
        %v1548 = vunpack.c.l.b16 %v600
        %v1549 = vunpack.c.h.b16 %v600
        %v1550 = vunpack.c.l.b16 %v601
        %v1551 = vunpack.c.h.b16 %v601
        %v1552 = vunpack.c.l.b16 %v602
        %v1553 = vunpack.c.h.b16 %v602
        %v1554 = vunpack.c.l.b16 %v603
        %v1555 = vunpack.c.h.b16 %v603
        %v1556 = vunpack.c.l.b16 %v604
        %v1557 = vunpack.c.h.b16 %v604
        %v1558 = vpack.c.b16 %v1536, %v1534
        %v1559 = vpack.c.b16 %v1537, %v1535
        %v1560 = vpack.c.b16 %v1540, %v1538
        %v1561 = vpack.c.b16 %v1541, %v1539
        %v1562 = vpack.c.b16 %v1544, %v1542
        %v1563 = vpack.c.b16 %v1545, %v1543
        %v1564 = vpack.c.b16 %v1548, %v1546
        %v1565 = vpack.c.b16 %v1549, %v1547
        %v1566 = vpack.c.b16 %v1552, %v1550
        %v1567 = vpack.c.b16 %v1553, %v1551
        %v1568 = vpack.c.b16 %v1556, %v1554
        %v1569 = vpack.c.b16 %v1557, %v1555
        %v1583 = vsel %vm691, %v1520, 0
        %v1586 = vsel %vm691, %v1521, 0
        %1588 = vmatpush.bf16.msra.mxu0 0
        %1589 = vmatpush.bf16.msra.mxu0 0
        %1590 = vmatpush.bf16.msra.mxu0 %v1568
        %1591 = vmatpush.bf16.msra.mxu0 %v1566
        %1592 = vmatpush.bf16.msra.mxu0 %v1564
        %1593 = vmatpush.bf16.msra.mxu0 %v1562
        %1594 = vmatpush.bf16.msra.mxu0 %v1560
        %1595 = vmatpush.bf16.msra.mxu0 %v1558
        %1596 = vmatmul.bf16.gmra.mxu0 %v1583
        %v1597 = vpop.f32.mrf.mxu0
        %v1598 = vadd.f32 0.0, %v1597
        %v1599 = vpop.f32.mrf.mxu0
        %v1600 = vadd.f32 0.0, %v1599
        %1601 = vmatmul.bf16.gmra.mxu0 %v1586
        %v1602 = vpop.f32.mrf.mxu0
        %v1603 = vadd.f32 0.0, %v1602
        %v1604 = vpop.f32.mrf.mxu0
        %1605 = vdwg.mxu0
        %1606 = vmatpush.bf16.msra.mxu0 0
        %1607 = vmatpush.bf16.msra.mxu0 0
        %1608 = vmatpush.bf16.msra.mxu0 %v1569
        %1609 = vmatpush.bf16.msra.mxu0 %v1567
        %1610 = vmatpush.bf16.msra.mxu0 %v1565
        %1611 = vmatpush.bf16.msra.mxu0 %v1563
        %1612 = vmatpush.bf16.msra.mxu0 %v1561
        %1613 = vmatpush.bf16.msra.mxu0 %v1559
        %1614 = vmatmul.bf16.gmra.mxu0 %v1583
        %v1615 = vpop.f32.mrf.mxu0
        %v1616 = vadd.f32 0.0, %v1615
        %v1617 = vpop.f32.mrf.mxu0
        %v1618 = vadd.f32 0.0, %v1617
        %1619 = vmatmul.bf16.gmra.mxu0 %v1586
        %v1620 = vpop.f32.mrf.mxu0
        %v1621 = vadd.f32 0.0, %v1620
        %v1622 = vpop.f32.mrf.mxu0
        %1623 = vdwg.mxu0
        %v1624 = vadd.f32 %v1514, %v1598
        %v1625 = vadd.f32 %v1515, %v1616
        %v1626 = vadd.f32 %v1516, %v1600
        %v1627 = vadd.f32 %v1517, %v1618
        %v1628 = vadd.f32 %v1518, %v1603
        %v1629 = vadd.f32 %v1519, %v1621
        %v1630 = vld [vmem:[%s2] sm:$0x3]
        %v1632 = vperm.slane %v1630, 0
        %v1633 = vperm.slane %v1630, 1
        %v1636 = vadd.f32 %v1624, %v1632
        %v1637 = vadd.f32 %v1625, %v1633
        %v1638 = vadd.f32 %v1626, %v1632
        %v1639 = vadd.f32 %v1627, %v1633
        %v1640 = vadd.f32 %v1628, %v1632
        %v1641 = vadd.f32 %v1629, %v1633
        %v1642 = vpack.c.bf16 %v1637, %v1636
        %v1643 = vpack.c.bf16 %v1639, %v1638
        %v1644 = vpack.c.bf16 %v1641, %v1640
        %v1645 = vld [vmem:[%s3] sm:$0xf]
        %v1646 = vld [vmem:[%s3 + $0x4] sm:$0xf]
        %v1647 = vld [vmem:[%s3 + $0x8] sm:$0xf]
        %v1648 = vld [vmem:[%s3 + $0xc] sm:$0xf]
        %v1649 = vld [vmem:[%s3 + $0x10] sm:$0xf]
        %v1650 = vld [vmem:[%s3 + $0x14] sm:$0xf]
        %v1651 = vld [vmem:[%s3 + $0x18] sm:$0xf]
        %v1652 = vld [vmem:[%s3 + $0x1c] sm:$0xf]
        %v1653 = vld [vmem:[%s3 + $0x20] sm:$0xf]
        %v1654 = vld [vmem:[%s3 + $0x24] sm:$0xf]
        %v1655 = vld [vmem:[%s3 + $0x28] sm:$0xf]
        %v1656 = vld [vmem:[%s3 + $0x2c] sm:$0xf]
        %v1657 = vld [vmem:[%s3 + $0x30] sm:$0xf]
        %v1658 = vld [vmem:[%s3 + $0x34] sm:$0xf]
        %v1659 = vld [vmem:[%s3 + $0x38] sm:$0xf]
        %v1660 = vld [vmem:[%s3 + $0x3c] sm:$0xf]
        %v1661 = vld [vmem:[%s3 + $0x40] sm:$0xf]
        %v1662 = vld [vmem:[%s3 + $0x44] sm:$0xf]
        %v1663 = vld [vmem:[%s3 + $0x48] sm:$0xf]
        %v1664 = vld [vmem:[%s3 + $0x4c] sm:$0xf]
        %v1665 = vld [vmem:[%s3 + $0x50] sm:$0xf]
        %v1666 = vld [vmem:[%s3 + $0x54] sm:$0xf]
        %v1667 = vld [vmem:[%s3 + $0x58] sm:$0xf]
        %v1668 = vld [vmem:[%s3 + $0x5c] sm:$0xf]
        %v1669 = vld [vmem:[%s3 + $0x60] sm:$0xf]
        %v1670 = vld [vmem:[%s3 + $0x64] sm:$0xf]
        %v1671 = vld [vmem:[%s3 + $0x68] sm:$0xf]
        %v1672 = vld [vmem:[%s3 + $0x6c] sm:$0xf]
        %v1673 = vld [vmem:[%s3 + $0x70] sm:$0xf]
        %v1674 = vld [vmem:[%s3 + $0x74] sm:$0xf]
        %v1675 = vld [vmem:[%s3 + $0x78] sm:$0xf]
        %v1676 = vld [vmem:[%s3 + $0x7c] sm:$0xf]
        %v1677 = vld [vmem:[%s3 + $0x80] sm:$0xf]
        %v1678 = vld [vmem:[%s3 + $0x84] sm:$0xf]
        %v1679 = vld [vmem:[%s3 + $0x88] sm:$0xf]
        %v1680 = vld [vmem:[%s3 + $0x8c] sm:$0xf]
        %v1681 = vld [vmem:[%s3 + $0x90] sm:$0xf]
        %v1682 = vld [vmem:[%s3 + $0x94] sm:$0xf]
        %v1683 = vld [vmem:[%s3 + $0x98] sm:$0xf]
        %v1684 = vld [vmem:[%s3 + $0x9c] sm:$0xf]
        %v1685 = vld [vmem:[%s3 + $0xa0] sm:$0xf]
        %v1686 = vld [vmem:[%s3 + $0xa4] sm:$0xf]
        %v1687 = vld [vmem:[%s3 + $0xa8] sm:$0xf]
        %v1688 = vld [vmem:[%s3 + $0xac] sm:$0xf]
        %v1689 = vld [vmem:[%s3 + $0xb0] sm:$0xf]
        %v1690 = vld [vmem:[%s3 + $0xb4] sm:$0xf]
        %v1691 = vld [vmem:[%s3 + $0xb8] sm:$0xf]
        %v1692 = vld [vmem:[%s3 + $0xbc] sm:$0xf]
        %v1693 = vld [vmem:[%s3 + $0xc0] sm:$0xf]
        %v1694 = vld [vmem:[%s3 + $0xc4] sm:$0xf]
        %v1695 = vld [vmem:[%s3 + $0xc8] sm:$0xf]
        %v1696 = vld [vmem:[%s3 + $0xcc] sm:$0xf]
        %v1697 = vld [vmem:[%s3 + $0xd0] sm:$0xf]
        %v1698 = vld [vmem:[%s3 + $0xd4] sm:$0xf]
        %v1699 = vld [vmem:[%s3 + $0xd8] sm:$0xf]
        %v1700 = vld [vmem:[%s3 + $0xdc] sm:$0xf]
        %v1701 = vld [vmem:[%s3 + $0xe0] sm:$0xf]
        %v1702 = vld [vmem:[%s3 + $0xe4] sm:$0xf]
        %v1703 = vld [vmem:[%s3 + $0xe8] sm:$0xf]
        %v1704 = vld [vmem:[%s3 + $0xec] sm:$0xf]
        %v1705 = vld [vmem:[%s3 + $0xf0] sm:$0xf]
        %v1706 = vld [vmem:[%s3 + $0xf4] sm:$0xf]
        %v1707 = vld [vmem:[%s3 + $0xf8] sm:$0xf]
        %v1708 = vld [vmem:[%s3 + $0xfc] sm:$0xf]
        %v1709 = vld [vmem:[%s3 + $0x100] sm:$0xf]
        %v1710 = vld [vmem:[%s3 + $0x104] sm:$0xf]
        %v1711 = vld [vmem:[%s3 + $0x108] sm:$0xf]
        %v1712 = vld [vmem:[%s3 + $0x10c] sm:$0xf]
        %v1713 = vld [vmem:[%s3 + $0x110] sm:$0xf]
        %v1714 = vld [vmem:[%s3 + $0x114] sm:$0xf]
        %v1715 = vld [vmem:[%s3 + $0x118] sm:$0xf]
        %v1716 = vld [vmem:[%s3 + $0x11c] sm:$0xf]
        %v1717 = vld [vmem:[%s3 + $0x120] sm:$0xf]
        %v1718 = vld [vmem:[%s3 + $0x124] sm:$0xf]
        %v1719 = vld [vmem:[%s3 + $0x128] sm:$0xf]
        %v1720 = vld [vmem:[%s3 + $0x12c] sm:$0xf]
        %v1721 = vld [vmem:[%s3 + $0x130] sm:$0xf]
        %v1722 = vld [vmem:[%s3 + $0x134] sm:$0xf]
        %v1723 = vld [vmem:[%s3 + $0x138] sm:$0xf]
        %v1724 = vld [vmem:[%s3 + $0x13c] sm:$0xf]
        %v1725 = vld [vmem:[%s3 + $0x140] sm:$0xf]
        %v1726 = vld [vmem:[%s3 + $0x144] sm:$0xf]
        %v1727 = vld [vmem:[%s3 + $0x148] sm:$0xf]
        %v1728 = vld [vmem:[%s3 + $0x14c] sm:$0xf]
        %v1729 = vld [vmem:[%s3 + $0x150] sm:$0xf]
        %v1730 = vld [vmem:[%s3 + $0x154] sm:$0xf]
        %v1731 = vld [vmem:[%s3 + $0x158] sm:$0xf]
        %v1732 = vld [vmem:[%s3 + $0x15c] sm:$0xf]
        %v1733 = vld [vmem:[%s3 + $0x160] sm:$0xf]
        %v1734 = vld [vmem:[%s3 + $0x164] sm:$0xf]
        %v1735 = vld [vmem:[%s3 + $0x168] sm:$0xf]
        %v1736 = vld [vmem:[%s3 + $0x16c] sm:$0xf]
        %v1737 = vld [vmem:[%s3 + $0x170] sm:$0xf]
        %v1738 = vld [vmem:[%s3 + $0x174] sm:$0xf]
        %v1739 = vld [vmem:[%s3 + $0x178] sm:$0xf]
        %v1740 = vld [vmem:[%s3 + $0x17c] sm:$0xf]
        %v1741 = vld [vmem:[%s3 + $0x180] sm:$0xf]
        %v1742 = vld [vmem:[%s3 + $0x184] sm:$0xf]
        %v1743 = vld [vmem:[%s3 + $0x188] sm:$0xf]
        %v1744 = vld [vmem:[%s3 + $0x18c] sm:$0xf]
        %v1745 = vld [vmem:[%s3 + $0x190] sm:$0xf]
        %v1746 = vld [vmem:[%s3 + $0x194] sm:$0xf]
        %v1747 = vld [vmem:[%s3 + $0x198] sm:$0xf]
        %v1748 = vld [vmem:[%s3 + $0x19c] sm:$0xf]
        %v1749 = vld [vmem:[%s3 + $0x1a0] sm:$0xf]
        %v1750 = vld [vmem:[%s3 + $0x1a4] sm:$0xf]
        %v1751 = vld [vmem:[%s3 + $0x1a8] sm:$0xf]
        %v1752 = vld [vmem:[%s3 + $0x1ac] sm:$0xf]
        %v1753 = vld [vmem:[%s3 + $0x1b0] sm:$0xf]
        %v1754 = vld [vmem:[%s3 + $0x1b4] sm:$0xf]
        %v1755 = vld [vmem:[%s3 + $0x1b8] sm:$0xf]
        %v1756 = vld [vmem:[%s3 + $0x1bc] sm:$0xf]
        %v1757 = vld [vmem:[%s3 + $0x1c0] sm:$0xf]
        %v1758 = vld [vmem:[%s3 + $0x1c4] sm:$0xf]
        %v1759 = vld [vmem:[%s3 + $0x1c8] sm:$0xf]
        %v1760 = vld [vmem:[%s3 + $0x1cc] sm:$0xf]
        %v1761 = vld [vmem:[%s3 + $0x1d0] sm:$0xf]
        %v1762 = vld [vmem:[%s3 + $0x1d4] sm:$0xf]
        %v1763 = vld [vmem:[%s3 + $0x1d8] sm:$0xf]
        %v1764 = vld [vmem:[%s3 + $0x1dc] sm:$0xf]
        %v1765 = vld [vmem:[%s3 + $0x1e0] sm:$0xf]
        %v1766 = vld [vmem:[%s3 + $0x1e4] sm:$0xf]
        %v1767 = vld [vmem:[%s3 + $0x1e8] sm:$0xf]
        %v1768 = vld [vmem:[%s3 + $0x1ec] sm:$0xf]
        %v1769 = vld [vmem:[%s3 + $0x1f0] sm:$0xf]
        %v1770 = vld [vmem:[%s3 + $0x1f4] sm:$0xf]
        %v1771 = vld [vmem:[%s3 + $0x1f8] sm:$0xf]
        %v1772 = vld [vmem:[%s3 + $0x1fc] sm:$0xf]
        %v1773 = vld [vmem:[%s3 + $0x200] sm:$0xf]
        %v1774 = vld [vmem:[%s3 + $0x204] sm:$0xf]
        %v1775 = vld [vmem:[%s3 + $0x208] sm:$0xf]
        %v1776 = vld [vmem:[%s3 + $0x20c] sm:$0xf]
        %v1777 = vld [vmem:[%s3 + $0x210] sm:$0xf]
        %v1778 = vld [vmem:[%s3 + $0x214] sm:$0xf]
        %v1779 = vld [vmem:[%s3 + $0x218] sm:$0xf]
        %v1780 = vld [vmem:[%s3 + $0x21c] sm:$0xf]
        %v1781 = vld [vmem:[%s3 + $0x220] sm:$0xf]
        %v1782 = vld [vmem:[%s3 + $0x224] sm:$0xf]
        %v1783 = vld [vmem:[%s3 + $0x228] sm:$0xf]
        %v1784 = vld [vmem:[%s3 + $0x22c] sm:$0xf]
        %v1785 = vld [vmem:[%s3 + $0x230] sm:$0xf]
        %v1786 = vld [vmem:[%s3 + $0x234] sm:$0xf]
        %v1787 = vld [vmem:[%s3 + $0x238] sm:$0xf]
        %v1788 = vld [vmem:[%s3 + $0x23c] sm:$0xf]
        %v1789 = vld [vmem:[%s3 + $0x240] sm:$0xf]
        %v1790 = vld [vmem:[%s3 + $0x244] sm:$0xf]
        %v1791 = vld [vmem:[%s3 + $0x248] sm:$0xf]
        %v1792 = vld [vmem:[%s3 + $0x24c] sm:$0xf]
        %v1793 = vld [vmem:[%s3 + $0x250] sm:$0xf]
        %v1794 = vld [vmem:[%s3 + $0x254] sm:$0xf]
        %v1795 = vld [vmem:[%s3 + $0x258] sm:$0xf]
        %v1796 = vld [vmem:[%s3 + $0x25c] sm:$0xf]
        %v1797 = vld [vmem:[%s3 + $0x260] sm:$0xf]
        %v1798 = vld [vmem:[%s3 + $0x264] sm:$0xf]
        %v1799 = vld [vmem:[%s3 + $0x268] sm:$0xf]
        %v1800 = vld [vmem:[%s3 + $0x26c] sm:$0xf]
        %v1801 = vld [vmem:[%s3 + $0x270] sm:$0xf]
        %v1802 = vld [vmem:[%s3 + $0x274] sm:$0xf]
        %v1803 = vld [vmem:[%s3 + $0x278] sm:$0xf]
        %v1804 = vld [vmem:[%s3 + $0x27c] sm:$0xf]
        %v1805 = vld [vmem:[%s3 + $0x280] sm:$0xf]
        %v1806 = vld [vmem:[%s3 + $0x284] sm:$0xf]
        %v1810 = vunpack.c.l.b16 %v1642
        %v1811 = vunpack.c.h.b16 %v1642
        %v1812 = vunpack.c.l.b16 %v1643
        %v1813 = vunpack.c.h.b16 %v1643
        %v1814 = vunpack.c.l.b16 %v1644
        %v1815 = vunpack.c.h.b16 %v1644
        %v1816 = vpack.c.b16 %v1812, %v1810
        %v1817 = vpack.c.b16 %v1813, %v1811
        %v1818 = vpack.c.b16 %v1814, %v1814
        %v1819 = vpack.c.b16 %v1815, %v1815
        %v1821 = vshrl.u32 %v1816, 16
        %v1823 = vshll.u32 %v1816, 16
        %v1825 = vrot.slane %v1823, 1
        %v1826 = vor.u32 %v1821, %v1825
        %v1828 = vshll.u32 %v1818, 16
        %v1830 = vrot.slane %v1828, 1
        %v1831 = vsel %vm615, %v1826, %v1830
        %v1833 = vshrl.u32 %v1817, 16
        %v1835 = vshll.u32 %v1817, 16
        %v1837 = vrot.slane %v1835, 1
        %v1838 = vor.u32 %v1833, %v1837
        %v1840 = vshll.u32 %v1819, 16
        %v1842 = vrot.slane %v1840, 1
        %v1843 = vsel %vm615, %v1838, %v1842
        %v1863 = vunpack.c.l.b16 %v1663
        %v1864 = vunpack.c.l.b16 %v1664
        %v1865 = vunpack.c.l.b16 %v1665
        %v1866 = vunpack.c.l.b16 %v1666
        %v1867 = vunpack.c.l.b16 %v1667
        %v1868 = vunpack.c.l.b16 %v1668
        %v1869 = vunpack.c.l.b16 %v1669
        %v1870 = vunpack.c.l.b16 %v1670
        %v1871 = vunpack.c.l.b16 %v1671
        %v1872 = vunpack.c.l.b16 %v1672
        %v1873 = vunpack.c.l.b16 %v1673
        %v1874 = vunpack.c.l.b16 %v1674
        %v1875 = vunpack.c.l.b16 %v1675
        %v1876 = vunpack.c.l.b16 %v1676
        %v1877 = vunpack.c.l.b16 %v1677
        %v1878 = vunpack.c.l.b16 %v1678
        %v1879 = vunpack.c.l.b16 %v1679
        %v1880 = vunpack.c.l.b16 %v1680
        %v1881 = vpack.c.b16 %v1864, %v1863
        %v1882 = vpack.c.b16 %v1866, %v1865
        %v1883 = vpack.c.b16 %v1868, %v1867
        %v1884 = vpack.c.b16 %v1870, %v1869
        %v1885 = vpack.c.b16 %v1872, %v1871
        %v1886 = vpack.c.b16 %v1874, %v1873
        %v1887 = vpack.c.b16 %v1876, %v1875
        %v1888 = vpack.c.b16 %v1878, %v1877
        %v1889 = vpack.c.b16 %v1880, %v1879
        %vm1899 = vcmask 130048
        %v1901 = vsel %vm1899, %v1843, 0
        %1903 = vmatpush.bf16.msra.mxu0 %v1888
        %1904 = vmatpush.bf16.msra.mxu0 %v1887
        %1905 = vmatpush.bf16.msra.mxu0 %v1886
        %1906 = vmatpush.bf16.msra.mxu0 %v1885
        %1907 = vmatpush.bf16.msra.mxu0 %v1884
        %1908 = vmatpush.bf16.msra.mxu0 %v1883
        %1909 = vmatpush.bf16.msra.mxu0 %v1882
        %1910 = vmatpush.bf16.msra.mxu0 %v1881
        %1911 = vmatmul.bf16.gmra.mxu0 %v1831
        %v1912 = vpop.f32.mrf.mxu0
        %v1913 = vadd.f32 0.0, %v1912
        %v1914 = vpop.f32.mrf.mxu0
        %v1915 = vadd.f32 0.0, %v1914
        %1916 = vdwg.mxu0
        %1917 = vmatpush.bf16.msra.mxu0 0
        %1918 = vmatpush.bf16.msra.mxu0 0
        %1919 = vmatpush.bf16.msra.mxu0 0
        %1920 = vmatpush.bf16.msra.mxu0 0
        %1921 = vmatpush.bf16.msra.mxu0 0
        %1922 = vmatpush.bf16.msra.mxu0 0
        %1923 = vmatpush.bf16.msra.mxu0 0
        %1924 = vmatpush.bf16.msra.mxu0 %v1889
        %1925 = vmatmul.bf16.gmra.mxu0 %v1901
        %v1926 = vpop.f32.mrf.mxu0
        %v1927 = vadd.f32 %v1913, %v1926
        %v1928 = vpop.f32.mrf.mxu0
        %v1929 = vadd.f32 %v1915, %v1928
        %1930 = vdwg.mxu0
        %v1950 = vunpack.c.l.b16 %v1645
        %v1951 = vunpack.c.l.b16 %v1646
        %v1952 = vunpack.c.l.b16 %v1647
        %v1953 = vunpack.c.l.b16 %v1648
        %v1954 = vunpack.c.l.b16 %v1649
        %v1955 = vunpack.c.l.b16 %v1650
        %v1956 = vunpack.c.l.b16 %v1651
        %v1957 = vunpack.c.l.b16 %v1652
        %v1958 = vunpack.c.l.b16 %v1653
        %v1959 = vunpack.c.l.b16 %v1654
        %v1960 = vunpack.c.l.b16 %v1655
        %v1961 = vunpack.c.l.b16 %v1656
        %v1962 = vunpack.c.l.b16 %v1657
        %v1963 = vunpack.c.l.b16 %v1658
        %v1964 = vunpack.c.l.b16 %v1659
        %v1965 = vunpack.c.l.b16 %v1660
        %v1966 = vunpack.c.l.b16 %v1661
        %v1967 = vunpack.c.l.b16 %v1662
        %v1968 = vpack.c.b16 %v1951, %v1950
        %v1969 = vpack.c.b16 %v1953, %v1952
        %v1970 = vpack.c.b16 %v1955, %v1954
        %v1971 = vpack.c.b16 %v1957, %v1956
        %v1972 = vpack.c.b16 %v1959, %v1958
        %v1973 = vpack.c.b16 %v1961, %v1960
        %v1974 = vpack.c.b16 %v1963, %v1962
        %v1975 = vpack.c.b16 %v1965, %v1964
        %v1976 = vpack.c.b16 %v1967, %v1966
        %v1986 = vsel %vm1899, %v1817, 0
        %1988 = vmatpush.bf16.msra.mxu0 %v1975
        %1989 = vmatpush.bf16.msra.mxu0 %v1974
        %1990 = vmatpush.bf16.msra.mxu0 %v1973
        %1991 = vmatpush.bf16.msra.mxu0 %v1972
        %1992 = vmatpush.bf16.msra.mxu0 %v1971
        %1993 = vmatpush.bf16.msra.mxu0 %v1970
        %1994 = vmatpush.bf16.msra.mxu0 %v1969
        %1995 = vmatpush.bf16.msra.mxu0 %v1968
        %1996 = vmatmul.bf16.gmra.mxu0 %v1816
        %v1997 = vpop.f32.mrf.mxu0
        %v1998 = vadd.f32 %v1927, %v1997
        %v1999 = vpop.f32.mrf.mxu0
        %v2000 = vadd.f32 %v1929, %v1999
        %2001 = vdwg.mxu0
        %2002 = vmatpush.bf16.msra.mxu0 0
        %2003 = vmatpush.bf16.msra.mxu0 0
        %2004 = vmatpush.bf16.msra.mxu0 0
        %2005 = vmatpush.bf16.msra.mxu0 0
        %2006 = vmatpush.bf16.msra.mxu0 0
        %2007 = vmatpush.bf16.msra.mxu0 0
        %2008 = vmatpush.bf16.msra.mxu0 0
        %2009 = vmatpush.bf16.msra.mxu0 %v1976
        %2010 = vmatmul.bf16.gmra.mxu0 %v1986
        %v2011 = vpop.f32.mrf.mxu0
        %v2012 = vadd.f32 %v1998, %v2011
        %v2013 = vpop.f32.mrf.mxu0
        %v2014 = vadd.f32 %v2000, %v2013
        %2015 = vdwg.mxu0
        %v2016 = vrot.slane %v1816, 1
        %v2017 = vrot.slane %v1818, 1
        %v2018 = vsel %vm836, %v2016, %v2017
        %v2019 = vrot.slane %v1817, 1
        %v2020 = vrot.slane %v1819, 1
        %v2021 = vsel %vm836, %v2019, %v2020
        %v2041 = vunpack.c.l.b16 %v1681
        %v2042 = vunpack.c.l.b16 %v1682
        %v2043 = vunpack.c.l.b16 %v1683
        %v2044 = vunpack.c.l.b16 %v1684
        %v2045 = vunpack.c.l.b16 %v1685
        %v2046 = vunpack.c.l.b16 %v1686
        %v2047 = vunpack.c.l.b16 %v1687
        %v2048 = vunpack.c.l.b16 %v1688
        %v2049 = vunpack.c.l.b16 %v1689
        %v2050 = vunpack.c.l.b16 %v1690
        %v2051 = vunpack.c.l.b16 %v1691
        %v2052 = vunpack.c.l.b16 %v1692
        %v2053 = vunpack.c.l.b16 %v1693
        %v2054 = vunpack.c.l.b16 %v1694
        %v2055 = vunpack.c.l.b16 %v1695
        %v2056 = vunpack.c.l.b16 %v1696
        %v2057 = vunpack.c.l.b16 %v1697
        %v2058 = vunpack.c.l.b16 %v1698
        %v2059 = vpack.c.b16 %v2042, %v2041
        %v2060 = vpack.c.b16 %v2044, %v2043
        %v2061 = vpack.c.b16 %v2046, %v2045
        %v2062 = vpack.c.b16 %v2048, %v2047
        %v2063 = vpack.c.b16 %v2050, %v2049
        %v2064 = vpack.c.b16 %v2052, %v2051
        %v2065 = vpack.c.b16 %v2054, %v2053
        %v2066 = vpack.c.b16 %v2056, %v2055
        %v2067 = vpack.c.b16 %v2058, %v2057
        %v2078 = vsel %vm1899, %v2021, 0
        %2080 = vmatpush.bf16.msra.mxu0 %v2066
        %2081 = vmatpush.bf16.msra.mxu0 %v2065
        %2082 = vmatpush.bf16.msra.mxu0 %v2064
        %2083 = vmatpush.bf16.msra.mxu0 %v2063
        %2084 = vmatpush.bf16.msra.mxu0 %v2062
        %2085 = vmatpush.bf16.msra.mxu0 %v2061
        %2086 = vmatpush.bf16.msra.mxu0 %v2060
        %2087 = vmatpush.bf16.msra.mxu0 %v2059
        %2088 = vmatmul.bf16.gmra.mxu0 %v2018
        %v2089 = vpop.f32.mrf.mxu0
        %v2090 = vadd.f32 0.0, %v2089
        %v2091 = vpop.f32.mrf.mxu0
        %v2092 = vadd.f32 0.0, %v2091
        %2093 = vdwg.mxu0
        %2094 = vmatpush.bf16.msra.mxu0 0
        %2095 = vmatpush.bf16.msra.mxu0 0
        %2096 = vmatpush.bf16.msra.mxu0 0
        %2097 = vmatpush.bf16.msra.mxu0 0
        %2098 = vmatpush.bf16.msra.mxu0 0
        %2099 = vmatpush.bf16.msra.mxu0 0
        %2100 = vmatpush.bf16.msra.mxu0 0
        %2101 = vmatpush.bf16.msra.mxu0 %v2067
        %2102 = vmatmul.bf16.gmra.mxu0 %v2078
        %v2103 = vpop.f32.mrf.mxu0
        %v2104 = vadd.f32 %v2090, %v2103
        %v2105 = vpop.f32.mrf.mxu0
        %v2106 = vadd.f32 %v2092, %v2105
        %2107 = vdwg.mxu0
        %v2108 = vadd.f32 %v2012, %v2104
        %v2109 = vadd.f32 %v2014, %v2106
        %v2110 = vrot.slane %v1821, 1
        %v2111 = vrot.slane %v1823, 2
        %v2112 = vor.u32 %v2110, %v2111
        %v2113 = vshrl.u32 %v1818, 16
        %v2115 = vrot.slane %v2113, 1
        %v2116 = vrot.slane %v1828, 2
        %v2117 = vor.u32 %v2115, %v2116
        %v2118 = vsel %vm948, %v2112, %v2117
        %v2119 = vrot.slane %v1833, 1
        %v2120 = vrot.slane %v1835, 2
        %v2121 = vor.u32 %v2119, %v2120
        %v2122 = vshrl.u32 %v1819, 16
        %v2124 = vrot.slane %v2122, 1
        %v2125 = vrot.slane %v1840, 2
        %v2126 = vor.u32 %v2124, %v2125
        %v2127 = vsel %vm948, %v2121, %v2126
        %v2147 = vunpack.c.l.b16 %v1699
        %v2148 = vunpack.c.l.b16 %v1700
        %v2149 = vunpack.c.l.b16 %v1701
        %v2150 = vunpack.c.l.b16 %v1702
        %v2151 = vunpack.c.l.b16 %v1703
        %v2152 = vunpack.c.l.b16 %v1704
        %v2153 = vunpack.c.l.b16 %v1705
        %v2154 = vunpack.c.l.b16 %v1706
        %v2155 = vunpack.c.l.b16 %v1707
        %v2156 = vunpack.c.l.b16 %v1708
        %v2157 = vunpack.c.l.b16 %v1709
        %v2158 = vunpack.c.l.b16 %v1710
        %v2159 = vunpack.c.l.b16 %v1711
        %v2160 = vunpack.c.l.b16 %v1712
        %v2161 = vunpack.c.l.b16 %v1713
        %v2162 = vunpack.c.l.b16 %v1714
        %v2163 = vunpack.c.l.b16 %v1715
        %v2164 = vunpack.c.l.b16 %v1716
        %v2165 = vpack.c.b16 %v2148, %v2147
        %v2166 = vpack.c.b16 %v2150, %v2149
        %v2167 = vpack.c.b16 %v2152, %v2151
        %v2168 = vpack.c.b16 %v2154, %v2153
        %v2169 = vpack.c.b16 %v2156, %v2155
        %v2170 = vpack.c.b16 %v2158, %v2157
        %v2171 = vpack.c.b16 %v2160, %v2159
        %v2172 = vpack.c.b16 %v2162, %v2161
        %v2173 = vpack.c.b16 %v2164, %v2163
        %v2184 = vsel %vm1899, %v2127, 0
        %2186 = vmatpush.bf16.msra.mxu0 %v2172
        %2187 = vmatpush.bf16.msra.mxu0 %v2171
        %2188 = vmatpush.bf16.msra.mxu0 %v2170
        %2189 = vmatpush.bf16.msra.mxu0 %v2169
        %2190 = vmatpush.bf16.msra.mxu0 %v2168
        %2191 = vmatpush.bf16.msra.mxu0 %v2167
        %2192 = vmatpush.bf16.msra.mxu0 %v2166
        %2193 = vmatpush.bf16.msra.mxu0 %v2165
        %2194 = vmatmul.bf16.gmra.mxu0 %v2118
        %v2195 = vpop.f32.mrf.mxu0
        %v2196 = vadd.f32 0.0, %v2195
        %v2197 = vpop.f32.mrf.mxu0
        %v2198 = vadd.f32 0.0, %v2197
        %2199 = vdwg.mxu0
        %2200 = vmatpush.bf16.msra.mxu0 0
        %2201 = vmatpush.bf16.msra.mxu0 0
        %2202 = vmatpush.bf16.msra.mxu0 0
        %2203 = vmatpush.bf16.msra.mxu0 0
        %2204 = vmatpush.bf16.msra.mxu0 0
        %2205 = vmatpush.bf16.msra.mxu0 0
        %2206 = vmatpush.bf16.msra.mxu0 0
        %2207 = vmatpush.bf16.msra.mxu0 %v2173
        %2208 = vmatmul.bf16.gmra.mxu0 %v2184
        %v2209 = vpop.f32.mrf.mxu0
        %v2210 = vadd.f32 %v2196, %v2209
        %v2211 = vpop.f32.mrf.mxu0
        %v2212 = vadd.f32 %v2198, %v2211
        %2213 = vdwg.mxu0
        %v2214 = vadd.f32 %v2108, %v2210
        %v2215 = vadd.f32 %v2109, %v2212
        %v2216 = vrot.slane %v1816, 2
        %v2217 = vrot.slane %v1818, 2
        %v2218 = vsel %vm1064, %v2216, %v2217
        %v2219 = vrot.slane %v1817, 2
        %v2220 = vrot.slane %v1819, 2
        %v2221 = vsel %vm1064, %v2219, %v2220
        %v2241 = vunpack.c.l.b16 %v1717
        %v2242 = vunpack.c.l.b16 %v1718
        %v2243 = vunpack.c.l.b16 %v1719
        %v2244 = vunpack.c.l.b16 %v1720
        %v2245 = vunpack.c.l.b16 %v1721
        %v2246 = vunpack.c.l.b16 %v1722
        %v2247 = vunpack.c.l.b16 %v1723
        %v2248 = vunpack.c.l.b16 %v1724
        %v2249 = vunpack.c.l.b16 %v1725
        %v2250 = vunpack.c.l.b16 %v1726
        %v2251 = vunpack.c.l.b16 %v1727
        %v2252 = vunpack.c.l.b16 %v1728
        %v2253 = vunpack.c.l.b16 %v1729
        %v2254 = vunpack.c.l.b16 %v1730
        %v2255 = vunpack.c.l.b16 %v1731
        %v2256 = vunpack.c.l.b16 %v1732
        %v2257 = vunpack.c.l.b16 %v1733
        %v2258 = vunpack.c.l.b16 %v1734
        %v2259 = vpack.c.b16 %v2242, %v2241
        %v2260 = vpack.c.b16 %v2244, %v2243
        %v2261 = vpack.c.b16 %v2246, %v2245
        %v2262 = vpack.c.b16 %v2248, %v2247
        %v2263 = vpack.c.b16 %v2250, %v2249
        %v2264 = vpack.c.b16 %v2252, %v2251
        %v2265 = vpack.c.b16 %v2254, %v2253
        %v2266 = vpack.c.b16 %v2256, %v2255
        %v2267 = vpack.c.b16 %v2258, %v2257
        %v2278 = vsel %vm1899, %v2221, 0
        %2280 = vmatpush.bf16.msra.mxu0 %v2266
        %2281 = vmatpush.bf16.msra.mxu0 %v2265
        %2282 = vmatpush.bf16.msra.mxu0 %v2264
        %2283 = vmatpush.bf16.msra.mxu0 %v2263
        %2284 = vmatpush.bf16.msra.mxu0 %v2262
        %2285 = vmatpush.bf16.msra.mxu0 %v2261
        %2286 = vmatpush.bf16.msra.mxu0 %v2260
        %2287 = vmatpush.bf16.msra.mxu0 %v2259
        %2288 = vmatmul.bf16.gmra.mxu0 %v2218
        %v2289 = vpop.f32.mrf.mxu0
        %v2290 = vadd.f32 0.0, %v2289
        %v2291 = vpop.f32.mrf.mxu0
        %v2292 = vadd.f32 0.0, %v2291
        %2293 = vdwg.mxu0
        %2294 = vmatpush.bf16.msra.mxu0 0
        %2295 = vmatpush.bf16.msra.mxu0 0
        %2296 = vmatpush.bf16.msra.mxu0 0
        %2297 = vmatpush.bf16.msra.mxu0 0
        %2298 = vmatpush.bf16.msra.mxu0 0
        %2299 = vmatpush.bf16.msra.mxu0 0
        %2300 = vmatpush.bf16.msra.mxu0 0
        %2301 = vmatpush.bf16.msra.mxu0 %v2267
        %2302 = vmatmul.bf16.gmra.mxu0 %v2278
        %v2303 = vpop.f32.mrf.mxu0
        %v2304 = vadd.f32 %v2290, %v2303
        %v2305 = vpop.f32.mrf.mxu0
        %v2306 = vadd.f32 %v2292, %v2305
        %2307 = vdwg.mxu0
        %v2308 = vadd.f32 %v2214, %v2304
        %v2309 = vadd.f32 %v2215, %v2306
        %v2310 = vrot.slane %v1821, 2
        %v2311 = vrot.slane %v1823, 3
        %v2312 = vor.u32 %v2310, %v2311
        %v2313 = vrot.slane %v2113, 2
        %v2314 = vrot.slane %v1828, 3
        %v2315 = vor.u32 %v2313, %v2314
        %v2316 = vsel %vm1176, %v2312, %v2315
        %v2317 = vrot.slane %v1833, 2
        %v2318 = vrot.slane %v1835, 3
        %v2319 = vor.u32 %v2317, %v2318
        %v2320 = vrot.slane %v2122, 2
        %v2321 = vrot.slane %v1840, 3
        %v2322 = vor.u32 %v2320, %v2321
        %v2323 = vsel %vm1176, %v2319, %v2322
        %v2343 = vunpack.c.l.b16 %v1735
        %v2344 = vunpack.c.l.b16 %v1736
        %v2345 = vunpack.c.l.b16 %v1737
        %v2346 = vunpack.c.l.b16 %v1738
        %v2347 = vunpack.c.l.b16 %v1739
        %v2348 = vunpack.c.l.b16 %v1740
        %v2349 = vunpack.c.l.b16 %v1741
        %v2350 = vunpack.c.l.b16 %v1742
        %v2351 = vunpack.c.l.b16 %v1743
        %v2352 = vunpack.c.l.b16 %v1744
        %v2353 = vunpack.c.l.b16 %v1745
        %v2354 = vunpack.c.l.b16 %v1746
        %v2355 = vunpack.c.l.b16 %v1747
        %v2356 = vunpack.c.l.b16 %v1748
        %v2357 = vunpack.c.l.b16 %v1749
        %v2358 = vunpack.c.l.b16 %v1750
        %v2359 = vunpack.c.l.b16 %v1751
        %v2360 = vunpack.c.l.b16 %v1752
        %v2361 = vpack.c.b16 %v2344, %v2343
        %v2362 = vpack.c.b16 %v2346, %v2345
        %v2363 = vpack.c.b16 %v2348, %v2347
        %v2364 = vpack.c.b16 %v2350, %v2349
        %v2365 = vpack.c.b16 %v2352, %v2351
        %v2366 = vpack.c.b16 %v2354, %v2353
        %v2367 = vpack.c.b16 %v2356, %v2355
        %v2368 = vpack.c.b16 %v2358, %v2357
        %v2369 = vpack.c.b16 %v2360, %v2359
        %v2380 = vsel %vm1899, %v2323, 0
        %2382 = vmatpush.bf16.msra.mxu0 %v2368
        %2383 = vmatpush.bf16.msra.mxu0 %v2367
        %2384 = vmatpush.bf16.msra.mxu0 %v2366
        %2385 = vmatpush.bf16.msra.mxu0 %v2365
        %2386 = vmatpush.bf16.msra.mxu0 %v2364
        %2387 = vmatpush.bf16.msra.mxu0 %v2363
        %2388 = vmatpush.bf16.msra.mxu0 %v2362
        %2389 = vmatpush.bf16.msra.mxu0 %v2361
        %2390 = vmatmul.bf16.gmra.mxu0 %v2316
        %v2391 = vpop.f32.mrf.mxu0
        %v2392 = vadd.f32 0.0, %v2391
        %v2393 = vpop.f32.mrf.mxu0
        %v2394 = vadd.f32 0.0, %v2393
        %2395 = vdwg.mxu0
        %2396 = vmatpush.bf16.msra.mxu0 0
        %2397 = vmatpush.bf16.msra.mxu0 0
        %2398 = vmatpush.bf16.msra.mxu0 0
        %2399 = vmatpush.bf16.msra.mxu0 0
        %2400 = vmatpush.bf16.msra.mxu0 0
        %2401 = vmatpush.bf16.msra.mxu0 0
        %2402 = vmatpush.bf16.msra.mxu0 0
        %2403 = vmatpush.bf16.msra.mxu0 %v2369
        %2404 = vmatmul.bf16.gmra.mxu0 %v2380
        %v2405 = vpop.f32.mrf.mxu0
        %v2406 = vadd.f32 %v2392, %v2405
        %v2407 = vpop.f32.mrf.mxu0
        %v2408 = vadd.f32 %v2394, %v2407
        %2409 = vdwg.mxu0
        %v2410 = vadd.f32 %v2308, %v2406
        %v2411 = vadd.f32 %v2309, %v2408
        %v2412 = vrot.slane %v1816, 3
        %v2413 = vrot.slane %v1818, 3
        %v2414 = vsel %vm1292, %v2412, %v2413
        %v2415 = vrot.slane %v1817, 3
        %v2416 = vrot.slane %v1819, 3
        %v2417 = vsel %vm1292, %v2415, %v2416
        %v2437 = vunpack.c.l.b16 %v1753
        %v2438 = vunpack.c.l.b16 %v1754
        %v2439 = vunpack.c.l.b16 %v1755
        %v2440 = vunpack.c.l.b16 %v1756
        %v2441 = vunpack.c.l.b16 %v1757
        %v2442 = vunpack.c.l.b16 %v1758
        %v2443 = vunpack.c.l.b16 %v1759
        %v2444 = vunpack.c.l.b16 %v1760
        %v2445 = vunpack.c.l.b16 %v1761
        %v2446 = vunpack.c.l.b16 %v1762
        %v2447 = vunpack.c.l.b16 %v1763
        %v2448 = vunpack.c.l.b16 %v1764
        %v2449 = vunpack.c.l.b16 %v1765
        %v2450 = vunpack.c.l.b16 %v1766
        %v2451 = vunpack.c.l.b16 %v1767
        %v2452 = vunpack.c.l.b16 %v1768
        %v2453 = vunpack.c.l.b16 %v1769
        %v2454 = vunpack.c.l.b16 %v1770
        %v2455 = vpack.c.b16 %v2438, %v2437
        %v2456 = vpack.c.b16 %v2440, %v2439
        %v2457 = vpack.c.b16 %v2442, %v2441
        %v2458 = vpack.c.b16 %v2444, %v2443
        %v2459 = vpack.c.b16 %v2446, %v2445
        %v2460 = vpack.c.b16 %v2448, %v2447
        %v2461 = vpack.c.b16 %v2450, %v2449
        %v2462 = vpack.c.b16 %v2452, %v2451
        %v2463 = vpack.c.b16 %v2454, %v2453
        %v2474 = vsel %vm1899, %v2417, 0
        %2476 = vmatpush.bf16.msra.mxu0 %v2462
        %2477 = vmatpush.bf16.msra.mxu0 %v2461
        %2478 = vmatpush.bf16.msra.mxu0 %v2460
        %2479 = vmatpush.bf16.msra.mxu0 %v2459
        %2480 = vmatpush.bf16.msra.mxu0 %v2458
        %2481 = vmatpush.bf16.msra.mxu0 %v2457
        %2482 = vmatpush.bf16.msra.mxu0 %v2456
        %2483 = vmatpush.bf16.msra.mxu0 %v2455
        %2484 = vmatmul.bf16.gmra.mxu0 %v2414
        %v2485 = vpop.f32.mrf.mxu0
        %v2486 = vadd.f32 0.0, %v2485
        %v2487 = vpop.f32.mrf.mxu0
        %v2488 = vadd.f32 0.0, %v2487
        %2489 = vdwg.mxu0
        %2490 = vmatpush.bf16.msra.mxu0 0
        %2491 = vmatpush.bf16.msra.mxu0 0
        %2492 = vmatpush.bf16.msra.mxu0 0
        %2493 = vmatpush.bf16.msra.mxu0 0
        %2494 = vmatpush.bf16.msra.mxu0 0
        %2495 = vmatpush.bf16.msra.mxu0 0
        %2496 = vmatpush.bf16.msra.mxu0 0
        %2497 = vmatpush.bf16.msra.mxu0 %v2463
        %2498 = vmatmul.bf16.gmra.mxu0 %v2474
        %v2499 = vpop.f32.mrf.mxu0
        %v2500 = vadd.f32 %v2486, %v2499
        %v2501 = vpop.f32.mrf.mxu0
        %v2502 = vadd.f32 %v2488, %v2501
        %2503 = vdwg.mxu0
        %v2504 = vadd.f32 %v2410, %v2500
        %v2505 = vadd.f32 %v2411, %v2502
        %v2506 = vrot.slane %v1821, 3
        %v2507 = vrot.slane %v1823, 4
        %v2508 = vor.u32 %v2506, %v2507
        %v2509 = vrot.slane %v2113, 3
        %v2510 = vrot.slane %v1828, 4
        %v2511 = vor.u32 %v2509, %v2510
        %v2512 = vsel %vm1404, %v2508, %v2511
        %v2513 = vrot.slane %v1833, 3
        %v2514 = vrot.slane %v1835, 4
        %v2515 = vor.u32 %v2513, %v2514
        %v2516 = vrot.slane %v2122, 3
        %v2517 = vrot.slane %v1840, 4
        %v2518 = vor.u32 %v2516, %v2517
        %v2519 = vsel %vm1404, %v2515, %v2518
        %v2539 = vunpack.c.l.b16 %v1771
        %v2540 = vunpack.c.l.b16 %v1772
        %v2541 = vunpack.c.l.b16 %v1773
        %v2542 = vunpack.c.l.b16 %v1774
        %v2543 = vunpack.c.l.b16 %v1775
        %v2544 = vunpack.c.l.b16 %v1776
        %v2545 = vunpack.c.l.b16 %v1777
        %v2546 = vunpack.c.l.b16 %v1778
        %v2547 = vunpack.c.l.b16 %v1779
        %v2548 = vunpack.c.l.b16 %v1780
        %v2549 = vunpack.c.l.b16 %v1781
        %v2550 = vunpack.c.l.b16 %v1782
        %v2551 = vunpack.c.l.b16 %v1783
        %v2552 = vunpack.c.l.b16 %v1784
        %v2553 = vunpack.c.l.b16 %v1785
        %v2554 = vunpack.c.l.b16 %v1786
        %v2555 = vunpack.c.l.b16 %v1787
        %v2556 = vunpack.c.l.b16 %v1788
        %v2557 = vpack.c.b16 %v2540, %v2539
        %v2558 = vpack.c.b16 %v2542, %v2541
        %v2559 = vpack.c.b16 %v2544, %v2543
        %v2560 = vpack.c.b16 %v2546, %v2545
        %v2561 = vpack.c.b16 %v2548, %v2547
        %v2562 = vpack.c.b16 %v2550, %v2549
        %v2563 = vpack.c.b16 %v2552, %v2551
        %v2564 = vpack.c.b16 %v2554, %v2553
        %v2565 = vpack.c.b16 %v2556, %v2555
        %v2576 = vsel %vm1899, %v2519, 0
        %2578 = vmatpush.bf16.msra.mxu0 %v2564
        %2579 = vmatpush.bf16.msra.mxu0 %v2563
        %2580 = vmatpush.bf16.msra.mxu0 %v2562
        %2581 = vmatpush.bf16.msra.mxu0 %v2561
        %2582 = vmatpush.bf16.msra.mxu0 %v2560
        %2583 = vmatpush.bf16.msra.mxu0 %v2559
        %2584 = vmatpush.bf16.msra.mxu0 %v2558
        %2585 = vmatpush.bf16.msra.mxu0 %v2557
        %2586 = vmatmul.bf16.gmra.mxu0 %v2512
        %v2587 = vpop.f32.mrf.mxu0
        %v2588 = vadd.f32 0.0, %v2587
        %v2589 = vpop.f32.mrf.mxu0
        %v2590 = vadd.f32 0.0, %v2589
        %2591 = vdwg.mxu0
        %2592 = vmatpush.bf16.msra.mxu0 0
        %2593 = vmatpush.bf16.msra.mxu0 0
        %2594 = vmatpush.bf16.msra.mxu0 0
        %2595 = vmatpush.bf16.msra.mxu0 0
        %2596 = vmatpush.bf16.msra.mxu0 0
        %2597 = vmatpush.bf16.msra.mxu0 0
        %2598 = vmatpush.bf16.msra.mxu0 0
        %2599 = vmatpush.bf16.msra.mxu0 %v2565
        %2600 = vmatmul.bf16.gmra.mxu0 %v2576
        %v2601 = vpop.f32.mrf.mxu0
        %v2602 = vadd.f32 %v2588, %v2601
        %v2603 = vpop.f32.mrf.mxu0
        %v2604 = vadd.f32 %v2590, %v2603
        %2605 = vdwg.mxu0
        %v2606 = vadd.f32 %v2504, %v2602
        %v2607 = vadd.f32 %v2505, %v2604
        %v2608 = vpack.c.b16 %v1814, %v1812
        %v2609 = vpack.c.b16 %v1815, %v1813
        %v2629 = vunpack.c.l.b16 %v1789
        %v2630 = vunpack.c.l.b16 %v1790
        %v2631 = vunpack.c.l.b16 %v1791
        %v2632 = vunpack.c.l.b16 %v1792
        %v2633 = vunpack.c.l.b16 %v1793
        %v2634 = vunpack.c.l.b16 %v1794
        %v2635 = vunpack.c.l.b16 %v1795
        %v2636 = vunpack.c.l.b16 %v1796
        %v2637 = vunpack.c.l.b16 %v1797
        %v2638 = vunpack.c.l.b16 %v1798
        %v2639 = vunpack.c.l.b16 %v1799
        %v2640 = vunpack.c.l.b16 %v1800
        %v2641 = vunpack.c.l.b16 %v1801
        %v2642 = vunpack.c.l.b16 %v1802
        %v2643 = vunpack.c.l.b16 %v1803
        %v2644 = vunpack.c.l.b16 %v1804
        %v2645 = vunpack.c.l.b16 %v1805
        %v2646 = vunpack.c.l.b16 %v1806
        %v2647 = vpack.c.b16 %v2630, %v2629
        %v2648 = vpack.c.b16 %v2632, %v2631
        %v2649 = vpack.c.b16 %v2634, %v2633
        %v2650 = vpack.c.b16 %v2636, %v2635
        %v2651 = vpack.c.b16 %v2638, %v2637
        %v2652 = vpack.c.b16 %v2640, %v2639
        %v2653 = vpack.c.b16 %v2642, %v2641
        %v2654 = vpack.c.b16 %v2644, %v2643
        %v2655 = vpack.c.b16 %v2646, %v2645
        %v2666 = vsel %vm1899, %v2609, 0
        %2668 = vmatpush.bf16.msra.mxu0 %v2654
        %2669 = vmatpush.bf16.msra.mxu0 %v2653
        %2670 = vmatpush.bf16.msra.mxu0 %v2652
        %2671 = vmatpush.bf16.msra.mxu0 %v2651
        %2672 = vmatpush.bf16.msra.mxu0 %v2650
        %2673 = vmatpush.bf16.msra.mxu0 %v2649
        %2674 = vmatpush.bf16.msra.mxu0 %v2648
        %2675 = vmatpush.bf16.msra.mxu0 %v2647
        %2676 = vmatmul.bf16.gmra.mxu0 %v2608
        %v2677 = vpop.f32.mrf.mxu0
        %v2678 = vadd.f32 0.0, %v2677
        %v2679 = vpop.f32.mrf.mxu0
        %v2680 = vadd.f32 0.0, %v2679
        %2681 = vdwg.mxu0
        %2682 = vmatpush.bf16.msra.mxu0 0
        %2683 = vmatpush.bf16.msra.mxu0 0
        %2684 = vmatpush.bf16.msra.mxu0 0
        %2685 = vmatpush.bf16.msra.mxu0 0
        %2686 = vmatpush.bf16.msra.mxu0 0
        %2687 = vmatpush.bf16.msra.mxu0 0
        %2688 = vmatpush.bf16.msra.mxu0 0
        %2689 = vmatpush.bf16.msra.mxu0 %v2655
        %2690 = vmatmul.bf16.gmra.mxu0 %v2666
        %v2691 = vpop.f32.mrf.mxu0
        %v2692 = vadd.f32 %v2678, %v2691
        %v2693 = vpop.f32.mrf.mxu0
        %v2694 = vadd.f32 %v2680, %v2693
        %2695 = vdwg.mxu0
        %v2696 = vadd.f32 %v2606, %v2692
        %v2697 = vadd.f32 %v2607, %v2694
        %v2698 = vld [vmem:[%s4] sm:$0x1]
        %v2700 = vperm.slane %v2698, 0
        %v2702 = vadd.f32 %v2696, %v2700
        %v2703 = vadd.f32 %v2697, %v2700
        %v2704 = vmax.f32 %v2702, 0.0
        %v2705 = vmax.f32 %v2703, 0.0
        %v2706 = vpack.c.bf16 %v2704, %v2704
        %v2707 = vpack.c.bf16 %v2705, %v2705
        %v2708 = vld [vmem:[%s5] sm:$0xff]
        %v2709 = vld [vmem:[%s5 + $0x8] sm:$0xff]
        %v2710 = vld [vmem:[%s5 + $0x10] sm:$0xff]
        %v2711 = vld [vmem:[%s5 + $0x18] sm:$0xff]
        %v2712 = vld [vmem:[%s5 + $0x20] sm:$0xff]
        %v2713 = vld [vmem:[%s5 + $0x28] sm:$0xff]
        %v2714 = vld [vmem:[%s5 + $0x30] sm:$0xff]
        %v2715 = vld [vmem:[%s5 + $0x38] sm:$0xff]
        %v2716 = vld [vmem:[%s5 + $0x40] sm:$0xff]
        %v2717 = vld [vmem:[%s5 + $0x48] sm:$0xff]
        %v2718 = vld [vmem:[%s5 + $0x50] sm:$0xff]
        %v2719 = vld [vmem:[%s5 + $0x58] sm:$0xff]
        %v2720 = vld [vmem:[%s5 + $0x60] sm:$0xff]
        %v2721 = vld [vmem:[%s5 + $0x68] sm:$0xff]
        %v2722 = vld [vmem:[%s5 + $0x70] sm:$0xff]
        %v2723 = vld [vmem:[%s5 + $0x78] sm:$0xff]
        %v2724 = vld [vmem:[%s5 + $0x80] sm:$0xff]
        %v2725 = vld [vmem:[%s5 + $0x88] sm:$0xff]
        %v2726 = vld [vmem:[%s5 + $0x90] sm:$0xff]
        %v2727 = vld [vmem:[%s5 + $0x98] sm:$0xff]
        %v2728 = vld [vmem:[%s5 + $0xa0] sm:$0xff]
        %v2729 = vld [vmem:[%s5 + $0xa8] sm:$0xff]
        %v2730 = vld [vmem:[%s5 + $0xb0] sm:$0xff]
        %v2731 = vld [vmem:[%s5 + $0xb8] sm:$0xff]
        %v2732 = vld [vmem:[%s5 + $0xc0] sm:$0xff]
        %v2733 = vld [vmem:[%s5 + $0xc8] sm:$0xff]
        %v2734 = vld [vmem:[%s5 + $0xd0] sm:$0xff]
        %v2735 = vld [vmem:[%s5 + $0xd8] sm:$0xff]
        %v2736 = vld [vmem:[%s5 + $0xe0] sm:$0xff]
        %v2737 = vld [vmem:[%s5 + $0xe8] sm:$0xff]
        %v2738 = vld [vmem:[%s5 + $0xf0] sm:$0xff]
        %v2739 = vld [vmem:[%s5 + $0xf8] sm:$0xff]
        %v2740 = vld [vmem:[%s5 + $0x100] sm:$0xff]
        %v2741 = vld [vmem:[%s5 + $0x108] sm:$0xff]
        %v2742 = vld [vmem:[%s5 + $0x110] sm:$0xff]
        %v2743 = vld [vmem:[%s5 + $0x118] sm:$0xff]
        %v2744 = vld [vmem:[%s5 + $0x120] sm:$0xff]
        %v2745 = vld [vmem:[%s5 + $0x128] sm:$0xff]
        %v2746 = vld [vmem:[%s5 + $0x130] sm:$0xff]
        %v2747 = vld [vmem:[%s5 + $0x138] sm:$0xff]
        %v2748 = vld [vmem:[%s5 + $0x140] sm:$0xff]
        %v2749 = vld [vmem:[%s5 + $0x148] sm:$0xff]
        %v2750 = vld [vmem:[%s5 + $0x150] sm:$0xff]
        %v2751 = vld [vmem:[%s5 + $0x158] sm:$0xff]
        %v2752 = vld [vmem:[%s5 + $0x160] sm:$0xff]
        %v2753 = vld [vmem:[%s5 + $0x168] sm:$0xff]
        %v2754 = vld [vmem:[%s5 + $0x170] sm:$0xff]
        %v2755 = vld [vmem:[%s5 + $0x178] sm:$0xff]
        %v2756 = vld [vmem:[%s5 + $0x180] sm:$0xff]
        %v2757 = vld [vmem:[%s5 + $0x188] sm:$0xff]
        %v2758 = vld [vmem:[%s5 + $0x190] sm:$0xff]
        %v2759 = vld [vmem:[%s5 + $0x198] sm:$0xff]
        %v2760 = vld [vmem:[%s5 + $0x1a0] sm:$0xff]
        %v2761 = vld [vmem:[%s5 + $0x1a8] sm:$0xff]
        %v2762 = vld [vmem:[%s5 + $0x1b0] sm:$0xff]
        %v2763 = vld [vmem:[%s5 + $0x1b8] sm:$0xff]
        %v2764 = vld [vmem:[%s5 + $0x1c0] sm:$0xff]
        %v2765 = vld [vmem:[%s5 + $0x1c8] sm:$0xff]
        %v2766 = vld [vmem:[%s5 + $0x1d0] sm:$0xff]
        %v2767 = vld [vmem:[%s5 + $0x1d8] sm:$0xff]
        %v2768 = vld [vmem:[%s5 + $0x1e0] sm:$0xff]
        %v2769 = vld [vmem:[%s5 + $0x1e8] sm:$0xff]
        %v2770 = vld [vmem:[%s5 + $0x1f0] sm:$0xff]
        %v2771 = vld [vmem:[%s5 + $0x1f8] sm:$0xff]
        %v2772 = vld [vmem:[%s5 + $0x200] sm:$0xff]
        %v2773 = vld [vmem:[%s5 + $0x208] sm:$0xff]
        %v2774 = vld [vmem:[%s5 + $0x210] sm:$0xff]
        %v2775 = vld [vmem:[%s5 + $0x218] sm:$0xff]
        %v2776 = vld [vmem:[%s5 + $0x220] sm:$0xff]
        %v2777 = vld [vmem:[%s5 + $0x228] sm:$0xff]
        %v2778 = vld [vmem:[%s5 + $0x230] sm:$0xff]
        %v2779 = vld [vmem:[%s5 + $0x238] sm:$0xff]
        %v2780 = vld [vmem:[%s5 + $0x240] sm:$0xff]
        %v2781 = vld [vmem:[%s5 + $0x248] sm:$0xff]
        %v2782 = vld [vmem:[%s5 + $0x250] sm:$0xff]
        %v2783 = vld [vmem:[%s5 + $0x258] sm:$0xff]
        %v2784 = vld [vmem:[%s5 + $0x260] sm:$0xff]
        %v2785 = vld [vmem:[%s5 + $0x268] sm:$0xff]
        %v2786 = vld [vmem:[%s5 + $0x270] sm:$0xff]
        %v2787 = vld [vmem:[%s5 + $0x278] sm:$0xff]
        %v2788 = vld [vmem:[%s5 + $0x280] sm:$0xff]
        %v2789 = vld [vmem:[%s5 + $0x288] sm:$0xff]
        %v2790 = vld [vmem:[%s5 + $0x290] sm:$0xff]
        %v2791 = vld [vmem:[%s5 + $0x298] sm:$0xff]
        %v2794 = vunpack.c.l.b16 %v2706
        %v2795 = vunpack.c.l.b16 %v2707
        %v2796 = vpack.c.b16 %v2795, %v2794
        %v2798 = vshrl.u32 %v2796, 16
        %v2800 = vshll.u32 %v2796, 16
        %v2802 = vrot.slane %v2800, 1
        %v2803 = vor.u32 %v2798, %v2802
        %v2816 = vunpack.c.l.b16 %v2720
        %v2817 = vunpack.c.h.b16 %v2720
        %v2818 = vunpack.c.l.b16 %v2721
        %v2819 = vunpack.c.h.b16 %v2721
        %v2820 = vunpack.c.l.b16 %v2722
        %v2821 = vunpack.c.h.b16 %v2722
        %v2822 = vunpack.c.l.b16 %v2723
        %v2823 = vunpack.c.h.b16 %v2723
        %v2824 = vunpack.c.l.b16 %v2724
        %v2825 = vunpack.c.h.b16 %v2724
        %v2826 = vunpack.c.l.b16 %v2725
        %v2827 = vunpack.c.h.b16 %v2725
        %v2828 = vunpack.c.l.b16 %v2726
        %v2829 = vunpack.c.h.b16 %v2726
        %v2830 = vunpack.c.l.b16 %v2727
        %v2831 = vunpack.c.h.b16 %v2727
        %v2832 = vunpack.c.l.b16 %v2728
        %v2833 = vunpack.c.h.b16 %v2728
        %v2834 = vunpack.c.l.b16 %v2729
        %v2835 = vunpack.c.h.b16 %v2729
        %v2836 = vunpack.c.l.b16 %v2730
        %v2837 = vunpack.c.h.b16 %v2730
        %v2838 = vunpack.c.l.b16 %v2731
        %v2839 = vunpack.c.h.b16 %v2731
        %v2840 = vpack.c.b16 %v2818, %v2816
        %v2841 = vpack.c.b16 %v2819, %v2817
        %v2842 = vpack.c.b16 %v2822, %v2820
        %v2843 = vpack.c.b16 %v2823, %v2821
        %v2844 = vpack.c.b16 %v2826, %v2824
        %v2845 = vpack.c.b16 %v2827, %v2825
        %v2846 = vpack.c.b16 %v2830, %v2828
        %v2847 = vpack.c.b16 %v2831, %v2829
        %v2848 = vpack.c.b16 %v2834, %v2832
        %v2849 = vpack.c.b16 %v2835, %v2833
        %v2850 = vpack.c.b16 %v2838, %v2836
        %v2851 = vpack.c.b16 %v2839, %v2837
        %v2865 = vsel %vm691, %v2803, 0
        %2867 = vmatpush.bf16.msra.mxu0 0
        %2868 = vmatpush.bf16.msra.mxu0 0
        %2869 = vmatpush.bf16.msra.mxu0 %v2850
        %2870 = vmatpush.bf16.msra.mxu0 %v2848
        %2871 = vmatpush.bf16.msra.mxu0 %v2846
        %2872 = vmatpush.bf16.msra.mxu0 %v2844
        %2873 = vmatpush.bf16.msra.mxu0 %v2842
        %2874 = vmatpush.bf16.msra.mxu0 %v2840
        %2875 = vmatmul.bf16.gmra.mxu0 %v2865
        %v2876 = vpop.f32.mrf.mxu0
        %v2877 = vadd.f32 0.0, %v2876
        %v2878 = vpop.f32.mrf.mxu0
        %v2879 = vadd.f32 0.0, %v2878
        %2880 = vdwg.mxu0
        %2881 = vmatpush.bf16.msra.mxu0 0
        %2882 = vmatpush.bf16.msra.mxu0 0
        %2883 = vmatpush.bf16.msra.mxu0 %v2851
        %2884 = vmatpush.bf16.msra.mxu0 %v2849
        %2885 = vmatpush.bf16.msra.mxu0 %v2847
        %2886 = vmatpush.bf16.msra.mxu0 %v2845
        %2887 = vmatpush.bf16.msra.mxu0 %v2843
        %2888 = vmatpush.bf16.msra.mxu0 %v2841
        %2889 = vmatmul.bf16.gmra.mxu0 %v2865
        %v2890 = vpop.f32.mrf.mxu0
        %v2891 = vadd.f32 0.0, %v2890
        %v2892 = vpop.f32.mrf.mxu0
        %v2893 = vadd.f32 0.0, %v2892
        %2894 = vdwg.mxu0
        %v2907 = vunpack.c.l.b16 %v2708
        %v2908 = vunpack.c.h.b16 %v2708
        %v2909 = vunpack.c.l.b16 %v2709
        %v2910 = vunpack.c.h.b16 %v2709
        %v2911 = vunpack.c.l.b16 %v2710
        %v2912 = vunpack.c.h.b16 %v2710
        %v2913 = vunpack.c.l.b16 %v2711
        %v2914 = vunpack.c.h.b16 %v2711
        %v2915 = vunpack.c.l.b16 %v2712
        %v2916 = vunpack.c.h.b16 %v2712
        %v2917 = vunpack.c.l.b16 %v2713
        %v2918 = vunpack.c.h.b16 %v2713
        %v2919 = vunpack.c.l.b16 %v2714
        %v2920 = vunpack.c.h.b16 %v2714
        %v2921 = vunpack.c.l.b16 %v2715
        %v2922 = vunpack.c.h.b16 %v2715
        %v2923 = vunpack.c.l.b16 %v2716
        %v2924 = vunpack.c.h.b16 %v2716
        %v2925 = vunpack.c.l.b16 %v2717
        %v2926 = vunpack.c.h.b16 %v2717
        %v2927 = vunpack.c.l.b16 %v2718
        %v2928 = vunpack.c.h.b16 %v2718
        %v2929 = vunpack.c.l.b16 %v2719
        %v2930 = vunpack.c.h.b16 %v2719
        %v2931 = vpack.c.b16 %v2909, %v2907
        %v2932 = vpack.c.b16 %v2910, %v2908
        %v2933 = vpack.c.b16 %v2913, %v2911
        %v2934 = vpack.c.b16 %v2914, %v2912
        %v2935 = vpack.c.b16 %v2917, %v2915
        %v2936 = vpack.c.b16 %v2918, %v2916
        %v2937 = vpack.c.b16 %v2921, %v2919
        %v2938 = vpack.c.b16 %v2922, %v2920
        %v2939 = vpack.c.b16 %v2925, %v2923
        %v2940 = vpack.c.b16 %v2926, %v2924
        %v2941 = vpack.c.b16 %v2929, %v2927
        %v2942 = vpack.c.b16 %v2930, %v2928
        %v2955 = vsel %vm691, %v2796, 0
        %2957 = vmatpush.bf16.msra.mxu0 0
        %2958 = vmatpush.bf16.msra.mxu0 0
        %2959 = vmatpush.bf16.msra.mxu0 %v2941
        %2960 = vmatpush.bf16.msra.mxu0 %v2939
        %2961 = vmatpush.bf16.msra.mxu0 %v2937
        %2962 = vmatpush.bf16.msra.mxu0 %v2935
        %2963 = vmatpush.bf16.msra.mxu0 %v2933
        %2964 = vmatpush.bf16.msra.mxu0 %v2931
        %2965 = vmatmul.bf16.gmra.mxu0 %v2955
        %v2966 = vpop.f32.mrf.mxu0
        %v2967 = vadd.f32 %v2877, %v2966
        %v2968 = vpop.f32.mrf.mxu0
        %v2969 = vadd.f32 %v2879, %v2968
        %2970 = vdwg.mxu0
        %2971 = vmatpush.bf16.msra.mxu0 0
        %2972 = vmatpush.bf16.msra.mxu0 0
        %2973 = vmatpush.bf16.msra.mxu0 %v2942
        %2974 = vmatpush.bf16.msra.mxu0 %v2940
        %2975 = vmatpush.bf16.msra.mxu0 %v2938
        %2976 = vmatpush.bf16.msra.mxu0 %v2936
        %2977 = vmatpush.bf16.msra.mxu0 %v2934
        %2978 = vmatpush.bf16.msra.mxu0 %v2932
        %2979 = vmatmul.bf16.gmra.mxu0 %v2955
        %v2980 = vpop.f32.mrf.mxu0
        %v2981 = vadd.f32 %v2891, %v2980
        %v2982 = vpop.f32.mrf.mxu0
        %v2983 = vadd.f32 %v2893, %v2982
        %2984 = vdwg.mxu0
        %v2985 = vrot.slane %v2796, 1
        %v2998 = vunpack.c.l.b16 %v2732
        %v2999 = vunpack.c.h.b16 %v2732
        %v3000 = vunpack.c.l.b16 %v2733
        %v3001 = vunpack.c.h.b16 %v2733
        %v3002 = vunpack.c.l.b16 %v2734
        %v3003 = vunpack.c.h.b16 %v2734
        %v3004 = vunpack.c.l.b16 %v2735
        %v3005 = vunpack.c.h.b16 %v2735
        %v3006 = vunpack.c.l.b16 %v2736
        %v3007 = vunpack.c.h.b16 %v2736
        %v3008 = vunpack.c.l.b16 %v2737
        %v3009 = vunpack.c.h.b16 %v2737
        %v3010 = vunpack.c.l.b16 %v2738
        %v3011 = vunpack.c.h.b16 %v2738
        %v3012 = vunpack.c.l.b16 %v2739
        %v3013 = vunpack.c.h.b16 %v2739
        %v3014 = vunpack.c.l.b16 %v2740
        %v3015 = vunpack.c.h.b16 %v2740
        %v3016 = vunpack.c.l.b16 %v2741
        %v3017 = vunpack.c.h.b16 %v2741
        %v3018 = vunpack.c.l.b16 %v2742
        %v3019 = vunpack.c.h.b16 %v2742
        %v3020 = vunpack.c.l.b16 %v2743
        %v3021 = vunpack.c.h.b16 %v2743
        %v3022 = vpack.c.b16 %v3000, %v2998
        %v3023 = vpack.c.b16 %v3001, %v2999
        %v3024 = vpack.c.b16 %v3004, %v3002
        %v3025 = vpack.c.b16 %v3005, %v3003
        %v3026 = vpack.c.b16 %v3008, %v3006
        %v3027 = vpack.c.b16 %v3009, %v3007
        %v3028 = vpack.c.b16 %v3012, %v3010
        %v3029 = vpack.c.b16 %v3013, %v3011
        %v3030 = vpack.c.b16 %v3016, %v3014
        %v3031 = vpack.c.b16 %v3017, %v3015
        %v3032 = vpack.c.b16 %v3020, %v3018
        %v3033 = vpack.c.b16 %v3021, %v3019
        %v3047 = vsel %vm691, %v2985, 0
        %3049 = vmatpush.bf16.msra.mxu0 0
        %3050 = vmatpush.bf16.msra.mxu0 0
        %3051 = vmatpush.bf16.msra.mxu0 %v3032
        %3052 = vmatpush.bf16.msra.mxu0 %v3030
        %3053 = vmatpush.bf16.msra.mxu0 %v3028
        %3054 = vmatpush.bf16.msra.mxu0 %v3026
        %3055 = vmatpush.bf16.msra.mxu0 %v3024
        %3056 = vmatpush.bf16.msra.mxu0 %v3022
        %3057 = vmatmul.bf16.gmra.mxu0 %v3047
        %v3058 = vpop.f32.mrf.mxu0
        %v3059 = vadd.f32 0.0, %v3058
        %v3060 = vpop.f32.mrf.mxu0
        %v3061 = vadd.f32 0.0, %v3060
        %3062 = vdwg.mxu0
        %3063 = vmatpush.bf16.msra.mxu0 0
        %3064 = vmatpush.bf16.msra.mxu0 0
        %3065 = vmatpush.bf16.msra.mxu0 %v3033
        %3066 = vmatpush.bf16.msra.mxu0 %v3031
        %3067 = vmatpush.bf16.msra.mxu0 %v3029
        %3068 = vmatpush.bf16.msra.mxu0 %v3027
        %3069 = vmatpush.bf16.msra.mxu0 %v3025
        %3070 = vmatpush.bf16.msra.mxu0 %v3023
        %3071 = vmatmul.bf16.gmra.mxu0 %v3047
        %v3072 = vpop.f32.mrf.mxu0
        %v3073 = vadd.f32 0.0, %v3072
        %v3074 = vpop.f32.mrf.mxu0
        %v3075 = vadd.f32 0.0, %v3074
        %3076 = vdwg.mxu0
        %v3077 = vadd.f32 %v2967, %v3059
        %v3078 = vadd.f32 %v2981, %v3073
        %v3079 = vadd.f32 %v2969, %v3061
        %v3080 = vadd.f32 %v2983, %v3075
        %v3081 = vrot.slane %v2798, 1
        %v3082 = vrot.slane %v2800, 2
        %v3083 = vor.u32 %v3081, %v3082
        %v3096 = vunpack.c.l.b16 %v2744
        %v3097 = vunpack.c.h.b16 %v2744
        %v3098 = vunpack.c.l.b16 %v2745
        %v3099 = vunpack.c.h.b16 %v2745
        %v3100 = vunpack.c.l.b16 %v2746
        %v3101 = vunpack.c.h.b16 %v2746
        %v3102 = vunpack.c.l.b16 %v2747
        %v3103 = vunpack.c.h.b16 %v2747
        %v3104 = vunpack.c.l.b16 %v2748
        %v3105 = vunpack.c.h.b16 %v2748
        %v3106 = vunpack.c.l.b16 %v2749
        %v3107 = vunpack.c.h.b16 %v2749
        %v3108 = vunpack.c.l.b16 %v2750
        %v3109 = vunpack.c.h.b16 %v2750
        %v3110 = vunpack.c.l.b16 %v2751
        %v3111 = vunpack.c.h.b16 %v2751
        %v3112 = vunpack.c.l.b16 %v2752
        %v3113 = vunpack.c.h.b16 %v2752
        %v3114 = vunpack.c.l.b16 %v2753
        %v3115 = vunpack.c.h.b16 %v2753
        %v3116 = vunpack.c.l.b16 %v2754
        %v3117 = vunpack.c.h.b16 %v2754
        %v3118 = vunpack.c.l.b16 %v2755
        %v3119 = vunpack.c.h.b16 %v2755
        %v3120 = vpack.c.b16 %v3098, %v3096
        %v3121 = vpack.c.b16 %v3099, %v3097
        %v3122 = vpack.c.b16 %v3102, %v3100
        %v3123 = vpack.c.b16 %v3103, %v3101
        %v3124 = vpack.c.b16 %v3106, %v3104
        %v3125 = vpack.c.b16 %v3107, %v3105
        %v3126 = vpack.c.b16 %v3110, %v3108
        %v3127 = vpack.c.b16 %v3111, %v3109
        %v3128 = vpack.c.b16 %v3114, %v3112
        %v3129 = vpack.c.b16 %v3115, %v3113
        %v3130 = vpack.c.b16 %v3118, %v3116
        %v3131 = vpack.c.b16 %v3119, %v3117
        %v3145 = vsel %vm691, %v3083, 0
        %3147 = vmatpush.bf16.msra.mxu0 0
        %3148 = vmatpush.bf16.msra.mxu0 0
        %3149 = vmatpush.bf16.msra.mxu0 %v3130
        %3150 = vmatpush.bf16.msra.mxu0 %v3128
        %3151 = vmatpush.bf16.msra.mxu0 %v3126
        %3152 = vmatpush.bf16.msra.mxu0 %v3124
        %3153 = vmatpush.bf16.msra.mxu0 %v3122
        %3154 = vmatpush.bf16.msra.mxu0 %v3120
        %3155 = vmatmul.bf16.gmra.mxu0 %v3145
        %v3156 = vpop.f32.mrf.mxu0
        %v3157 = vadd.f32 0.0, %v3156
        %v3158 = vpop.f32.mrf.mxu0
        %v3159 = vadd.f32 0.0, %v3158
        %3160 = vdwg.mxu0
        %3161 = vmatpush.bf16.msra.mxu0 0
        %3162 = vmatpush.bf16.msra.mxu0 0
        %3163 = vmatpush.bf16.msra.mxu0 %v3131
        %3164 = vmatpush.bf16.msra.mxu0 %v3129
        %3165 = vmatpush.bf16.msra.mxu0 %v3127
        %3166 = vmatpush.bf16.msra.mxu0 %v3125
        %3167 = vmatpush.bf16.msra.mxu0 %v3123
        %3168 = vmatpush.bf16.msra.mxu0 %v3121
        %3169 = vmatmul.bf16.gmra.mxu0 %v3145
        %v3170 = vpop.f32.mrf.mxu0
        %v3171 = vadd.f32 0.0, %v3170
        %v3172 = vpop.f32.mrf.mxu0
        %v3173 = vadd.f32 0.0, %v3172
        %3174 = vdwg.mxu0
        %v3175 = vadd.f32 %v3077, %v3157
        %v3176 = vadd.f32 %v3078, %v3171
        %v3177 = vadd.f32 %v3079, %v3159
        %v3178 = vadd.f32 %v3080, %v3173
        %v3179 = vrot.slane %v2796, 2
        %v3192 = vunpack.c.l.b16 %v2756
        %v3193 = vunpack.c.h.b16 %v2756
        %v3194 = vunpack.c.l.b16 %v2757
        %v3195 = vunpack.c.h.b16 %v2757
        %v3196 = vunpack.c.l.b16 %v2758
        %v3197 = vunpack.c.h.b16 %v2758
        %v3198 = vunpack.c.l.b16 %v2759
        %v3199 = vunpack.c.h.b16 %v2759
        %v3200 = vunpack.c.l.b16 %v2760
        %v3201 = vunpack.c.h.b16 %v2760
        %v3202 = vunpack.c.l.b16 %v2761
        %v3203 = vunpack.c.h.b16 %v2761
        %v3204 = vunpack.c.l.b16 %v2762
        %v3205 = vunpack.c.h.b16 %v2762
        %v3206 = vunpack.c.l.b16 %v2763
        %v3207 = vunpack.c.h.b16 %v2763
        %v3208 = vunpack.c.l.b16 %v2764
        %v3209 = vunpack.c.h.b16 %v2764
        %v3210 = vunpack.c.l.b16 %v2765
        %v3211 = vunpack.c.h.b16 %v2765
        %v3212 = vunpack.c.l.b16 %v2766
        %v3213 = vunpack.c.h.b16 %v2766
        %v3214 = vunpack.c.l.b16 %v2767
        %v3215 = vunpack.c.h.b16 %v2767
        %v3216 = vpack.c.b16 %v3194, %v3192
        %v3217 = vpack.c.b16 %v3195, %v3193
        %v3218 = vpack.c.b16 %v3198, %v3196
        %v3219 = vpack.c.b16 %v3199, %v3197
        %v3220 = vpack.c.b16 %v3202, %v3200
        %v3221 = vpack.c.b16 %v3203, %v3201
        %v3222 = vpack.c.b16 %v3206, %v3204
        %v3223 = vpack.c.b16 %v3207, %v3205
        %v3224 = vpack.c.b16 %v3210, %v3208
        %v3225 = vpack.c.b16 %v3211, %v3209
        %v3226 = vpack.c.b16 %v3214, %v3212
        %v3227 = vpack.c.b16 %v3215, %v3213
        %v3241 = vsel %vm691, %v3179, 0
        %3243 = vmatpush.bf16.msra.mxu0 0
        %3244 = vmatpush.bf16.msra.mxu0 0
        %3245 = vmatpush.bf16.msra.mxu0 %v3226
        %3246 = vmatpush.bf16.msra.mxu0 %v3224
        %3247 = vmatpush.bf16.msra.mxu0 %v3222
        %3248 = vmatpush.bf16.msra.mxu0 %v3220
        %3249 = vmatpush.bf16.msra.mxu0 %v3218
        %3250 = vmatpush.bf16.msra.mxu0 %v3216
        %3251 = vmatmul.bf16.gmra.mxu0 %v3241
        %v3252 = vpop.f32.mrf.mxu0
        %v3253 = vadd.f32 0.0, %v3252
        %v3254 = vpop.f32.mrf.mxu0
        %v3255 = vadd.f32 0.0, %v3254
        %3256 = vdwg.mxu0
        %3257 = vmatpush.bf16.msra.mxu0 0
        %3258 = vmatpush.bf16.msra.mxu0 0
        %3259 = vmatpush.bf16.msra.mxu0 %v3227
        %3260 = vmatpush.bf16.msra.mxu0 %v3225
        %3261 = vmatpush.bf16.msra.mxu0 %v3223
        %3262 = vmatpush.bf16.msra.mxu0 %v3221
        %3263 = vmatpush.bf16.msra.mxu0 %v3219
        %3264 = vmatpush.bf16.msra.mxu0 %v3217
        %3265 = vmatmul.bf16.gmra.mxu0 %v3241
        %v3266 = vpop.f32.mrf.mxu0
        %v3267 = vadd.f32 0.0, %v3266
        %v3268 = vpop.f32.mrf.mxu0
        %v3269 = vadd.f32 0.0, %v3268
        %3270 = vdwg.mxu0
        %v3271 = vadd.f32 %v3175, %v3253
        %v3272 = vadd.f32 %v3176, %v3267
        %v3273 = vadd.f32 %v3177, %v3255
        %v3274 = vadd.f32 %v3178, %v3269
        %v3275 = vrot.slane %v2798, 2
        %v3276 = vrot.slane %v2800, 3
        %v3277 = vor.u32 %v3275, %v3276
        %v3290 = vunpack.c.l.b16 %v2768
        %v3291 = vunpack.c.h.b16 %v2768
        %v3292 = vunpack.c.l.b16 %v2769
        %v3293 = vunpack.c.h.b16 %v2769
        %v3294 = vunpack.c.l.b16 %v2770
        %v3295 = vunpack.c.h.b16 %v2770
        %v3296 = vunpack.c.l.b16 %v2771
        %v3297 = vunpack.c.h.b16 %v2771
        %v3298 = vunpack.c.l.b16 %v2772
        %v3299 = vunpack.c.h.b16 %v2772
        %v3300 = vunpack.c.l.b16 %v2773
        %v3301 = vunpack.c.h.b16 %v2773
        %v3302 = vunpack.c.l.b16 %v2774
        %v3303 = vunpack.c.h.b16 %v2774
        %v3304 = vunpack.c.l.b16 %v2775
        %v3305 = vunpack.c.h.b16 %v2775
        %v3306 = vunpack.c.l.b16 %v2776
        %v3307 = vunpack.c.h.b16 %v2776
        %v3308 = vunpack.c.l.b16 %v2777
        %v3309 = vunpack.c.h.b16 %v2777
        %v3310 = vunpack.c.l.b16 %v2778
        %v3311 = vunpack.c.h.b16 %v2778
        %v3312 = vunpack.c.l.b16 %v2779
        %v3313 = vunpack.c.h.b16 %v2779
        %v3314 = vpack.c.b16 %v3292, %v3290
        %v3315 = vpack.c.b16 %v3293, %v3291
        %v3316 = vpack.c.b16 %v3296, %v3294
        %v3317 = vpack.c.b16 %v3297, %v3295
        %v3318 = vpack.c.b16 %v3300, %v3298
        %v3319 = vpack.c.b16 %v3301, %v3299
        %v3320 = vpack.c.b16 %v3304, %v3302
        %v3321 = vpack.c.b16 %v3305, %v3303
        %v3322 = vpack.c.b16 %v3308, %v3306
        %v3323 = vpack.c.b16 %v3309, %v3307
        %v3324 = vpack.c.b16 %v3312, %v3310
        %v3325 = vpack.c.b16 %v3313, %v3311
        %v3339 = vsel %vm691, %v3277, 0
        %3341 = vmatpush.bf16.msra.mxu0 0
        %3342 = vmatpush.bf16.msra.mxu0 0
        %3343 = vmatpush.bf16.msra.mxu0 %v3324
        %3344 = vmatpush.bf16.msra.mxu0 %v3322
        %3345 = vmatpush.bf16.msra.mxu0 %v3320
        %3346 = vmatpush.bf16.msra.mxu0 %v3318
        %3347 = vmatpush.bf16.msra.mxu0 %v3316
        %3348 = vmatpush.bf16.msra.mxu0 %v3314
        %3349 = vmatmul.bf16.gmra.mxu0 %v3339
        %v3350 = vpop.f32.mrf.mxu0
        %v3351 = vadd.f32 0.0, %v3350
        %v3352 = vpop.f32.mrf.mxu0
        %v3353 = vadd.f32 0.0, %v3352
        %3354 = vdwg.mxu0
        %3355 = vmatpush.bf16.msra.mxu0 0
        %3356 = vmatpush.bf16.msra.mxu0 0
        %3357 = vmatpush.bf16.msra.mxu0 %v3325
        %3358 = vmatpush.bf16.msra.mxu0 %v3323
        %3359 = vmatpush.bf16.msra.mxu0 %v3321
        %3360 = vmatpush.bf16.msra.mxu0 %v3319
        %3361 = vmatpush.bf16.msra.mxu0 %v3317
        %3362 = vmatpush.bf16.msra.mxu0 %v3315
        %3363 = vmatmul.bf16.gmra.mxu0 %v3339
        %v3364 = vpop.f32.mrf.mxu0
        %v3365 = vadd.f32 0.0, %v3364
        %v3366 = vpop.f32.mrf.mxu0
        %v3367 = vadd.f32 0.0, %v3366
        %3368 = vdwg.mxu0
        %v3369 = vadd.f32 %v3271, %v3351
        %v3370 = vadd.f32 %v3272, %v3365
        %v3371 = vadd.f32 %v3273, %v3353
        %v3372 = vadd.f32 %v3274, %v3367
        %v3373 = vrot.slane %v2796, 3
        %v3386 = vunpack.c.l.b16 %v2780
        %v3387 = vunpack.c.h.b16 %v2780
        %v3388 = vunpack.c.l.b16 %v2781
        %v3389 = vunpack.c.h.b16 %v2781
        %v3390 = vunpack.c.l.b16 %v2782
        %v3391 = vunpack.c.h.b16 %v2782
        %v3392 = vunpack.c.l.b16 %v2783
        %v3393 = vunpack.c.h.b16 %v2783
        %v3394 = vunpack.c.l.b16 %v2784
        %v3395 = vunpack.c.h.b16 %v2784
        %v3396 = vunpack.c.l.b16 %v2785
        %v3397 = vunpack.c.h.b16 %v2785
        %v3398 = vunpack.c.l.b16 %v2786
        %v3399 = vunpack.c.h.b16 %v2786
        %v3400 = vunpack.c.l.b16 %v2787
        %v3401 = vunpack.c.h.b16 %v2787
        %v3402 = vunpack.c.l.b16 %v2788
        %v3403 = vunpack.c.h.b16 %v2788
        %v3404 = vunpack.c.l.b16 %v2789
        %v3405 = vunpack.c.h.b16 %v2789
        %v3406 = vunpack.c.l.b16 %v2790
        %v3407 = vunpack.c.h.b16 %v2790
        %v3408 = vunpack.c.l.b16 %v2791
        %v3409 = vunpack.c.h.b16 %v2791
        %v3410 = vpack.c.b16 %v3388, %v3386
        %v3411 = vpack.c.b16 %v3389, %v3387
        %v3412 = vpack.c.b16 %v3392, %v3390
        %v3413 = vpack.c.b16 %v3393, %v3391
        %v3414 = vpack.c.b16 %v3396, %v3394
        %v3415 = vpack.c.b16 %v3397, %v3395
        %v3416 = vpack.c.b16 %v3400, %v3398
        %v3417 = vpack.c.b16 %v3401, %v3399
        %v3418 = vpack.c.b16 %v3404, %v3402
        %v3419 = vpack.c.b16 %v3405, %v3403
        %v3420 = vpack.c.b16 %v3408, %v3406
        %v3421 = vpack.c.b16 %v3409, %v3407
        %v3435 = vsel %vm691, %v3373, 0
        %3437 = vmatpush.bf16.msra.mxu0 0
        %3438 = vmatpush.bf16.msra.mxu0 0
        %3439 = vmatpush.bf16.msra.mxu0 %v3420
        %3440 = vmatpush.bf16.msra.mxu0 %v3418
        %3441 = vmatpush.bf16.msra.mxu0 %v3416
        %3442 = vmatpush.bf16.msra.mxu0 %v3414
        %3443 = vmatpush.bf16.msra.mxu0 %v3412
        %3444 = vmatpush.bf16.msra.mxu0 %v3410
        %3445 = vmatmul.bf16.gmra.mxu0 %v3435
        %v3446 = vpop.f32.mrf.mxu0
        %v3447 = vadd.f32 0.0, %v3446
        %v3448 = vpop.f32.mrf.mxu0
        %v3449 = vadd.f32 0.0, %v3448
        %3450 = vdwg.mxu0
        %3451 = vmatpush.bf16.msra.mxu0 0
        %3452 = vmatpush.bf16.msra.mxu0 0
        %3453 = vmatpush.bf16.msra.mxu0 %v3421
        %3454 = vmatpush.bf16.msra.mxu0 %v3419
        %3455 = vmatpush.bf16.msra.mxu0 %v3417
        %3456 = vmatpush.bf16.msra.mxu0 %v3415
        %3457 = vmatpush.bf16.msra.mxu0 %v3413
        %3458 = vmatpush.bf16.msra.mxu0 %v3411
        %3459 = vmatmul.bf16.gmra.mxu0 %v3435
        %v3460 = vpop.f32.mrf.mxu0
        %v3461 = vadd.f32 0.0, %v3460
        %v3462 = vpop.f32.mrf.mxu0
        %v3463 = vadd.f32 0.0, %v3462
        %3464 = vdwg.mxu0
        %v3465 = vadd.f32 %v3369, %v3447
        %v3466 = vadd.f32 %v3370, %v3461
        %v3467 = vadd.f32 %v3371, %v3449
        %v3468 = vadd.f32 %v3372, %v3463
        %v3469 = vld [vmem:[%s6] sm:$0x3]
        %v3471 = vperm.slane %v3469, 0
        %v3472 = vperm.slane %v3469, 1
        %v3475 = vadd.f32 %v3465, %v3471
        %v3476 = vadd.f32 %v3466, %v3472
        %v3477 = vadd.f32 %v3467, %v3471
        %v3478 = vadd.f32 %v3468, %v3472
        %v3479 = vpack.c.bf16 %v3476, %v3475
        %v3480 = vpack.c.bf16 %v3478, %v3477
        %v3481 = vld [vmem:[%s7] sm:$0xf]
        %v3482 = vld [vmem:[%s7 + $0x4] sm:$0xf]
        %v3483 = vld [vmem:[%s7 + $0x8] sm:$0xf]
        %v3484 = vld [vmem:[%s7 + $0xc] sm:$0xf]
        %v3485 = vld [vmem:[%s7 + $0x10] sm:$0xf]
        %v3486 = vld [vmem:[%s7 + $0x14] sm:$0xf]
        %v3487 = vld [vmem:[%s7 + $0x18] sm:$0xf]
        %v3488 = vld [vmem:[%s7 + $0x1c] sm:$0xf]
        %v3489 = vld [vmem:[%s7 + $0x20] sm:$0xf]
        %v3490 = vld [vmem:[%s7 + $0x24] sm:$0xf]
        %v3491 = vld [vmem:[%s7 + $0x28] sm:$0xf]
        %v3492 = vld [vmem:[%s7 + $0x2c] sm:$0xf]
        %v3493 = vld [vmem:[%s7 + $0x30] sm:$0xf]
        %v3494 = vld [vmem:[%s7 + $0x34] sm:$0xf]
        %v3495 = vld [vmem:[%s7 + $0x38] sm:$0xf]
        %v3496 = vld [vmem:[%s7 + $0x3c] sm:$0xf]
        %v3497 = vld [vmem:[%s7 + $0x40] sm:$0xf]
        %v3498 = vld [vmem:[%s7 + $0x44] sm:$0xf]
        %v3499 = vld [vmem:[%s7 + $0x48] sm:$0xf]
        %v3500 = vld [vmem:[%s7 + $0x4c] sm:$0xf]
        %v3501 = vld [vmem:[%s7 + $0x50] sm:$0xf]
        %v3502 = vld [vmem:[%s7 + $0x54] sm:$0xf]
        %v3503 = vld [vmem:[%s7 + $0x58] sm:$0xf]
        %v3504 = vld [vmem:[%s7 + $0x5c] sm:$0xf]
        %v3505 = vld [vmem:[%s7 + $0x60] sm:$0xf]
        %v3506 = vld [vmem:[%s7 + $0x64] sm:$0xf]
        %v3507 = vld [vmem:[%s7 + $0x68] sm:$0xf]
        %v3508 = vld [vmem:[%s7 + $0x6c] sm:$0xf]
        %v3509 = vld [vmem:[%s7 + $0x70] sm:$0xf]
        %v3510 = vld [vmem:[%s7 + $0x74] sm:$0xf]
        %v3511 = vld [vmem:[%s7 + $0x78] sm:$0xf]
        %v3512 = vld [vmem:[%s7 + $0x7c] sm:$0xf]
        %v3513 = vld [vmem:[%s7 + $0x80] sm:$0xf]
        %v3514 = vld [vmem:[%s7 + $0x84] sm:$0xf]
        %v3515 = vld [vmem:[%s7 + $0x88] sm:$0xf]
        %v3516 = vld [vmem:[%s7 + $0x8c] sm:$0xf]
        %v3517 = vld [vmem:[%s7 + $0x90] sm:$0xf]
        %v3518 = vld [vmem:[%s7 + $0x94] sm:$0xf]
        %v3519 = vld [vmem:[%s7 + $0x98] sm:$0xf]
        %v3520 = vld [vmem:[%s7 + $0x9c] sm:$0xf]
        %v3521 = vld [vmem:[%s7 + $0xa0] sm:$0xf]
        %v3522 = vld [vmem:[%s7 + $0xa4] sm:$0xf]
        %v3523 = vld [vmem:[%s7 + $0xa8] sm:$0xf]
        %v3524 = vld [vmem:[%s7 + $0xac] sm:$0xf]
        %v3525 = vld [vmem:[%s7 + $0xb0] sm:$0xf]
        %v3526 = vld [vmem:[%s7 + $0xb4] sm:$0xf]
        %v3527 = vld [vmem:[%s7 + $0xb8] sm:$0xf]
        %v3528 = vld [vmem:[%s7 + $0xbc] sm:$0xf]
        %v3529 = vld [vmem:[%s7 + $0xc0] sm:$0xf]
        %v3530 = vld [vmem:[%s7 + $0xc4] sm:$0xf]
        %v3531 = vld [vmem:[%s7 + $0xc8] sm:$0xf]
        %v3532 = vld [vmem:[%s7 + $0xcc] sm:$0xf]
        %v3533 = vld [vmem:[%s7 + $0xd0] sm:$0xf]
        %v3534 = vld [vmem:[%s7 + $0xd4] sm:$0xf]
        %v3535 = vld [vmem:[%s7 + $0xd8] sm:$0xf]
        %v3536 = vld [vmem:[%s7 + $0xdc] sm:$0xf]
        %v3537 = vld [vmem:[%s7 + $0xe0] sm:$0xf]
        %v3538 = vld [vmem:[%s7 + $0xe4] sm:$0xf]
        %v3539 = vld [vmem:[%s7 + $0xe8] sm:$0xf]
        %v3540 = vld [vmem:[%s7 + $0xec] sm:$0xf]
        %v3541 = vld [vmem:[%s7 + $0xf0] sm:$0xf]
        %v3542 = vld [vmem:[%s7 + $0xf4] sm:$0xf]
        %v3543 = vld [vmem:[%s7 + $0xf8] sm:$0xf]
        %v3544 = vld [vmem:[%s7 + $0xfc] sm:$0xf]
        %v3545 = vld [vmem:[%s7 + $0x100] sm:$0xf]
        %v3546 = vld [vmem:[%s7 + $0x104] sm:$0xf]
        %v3547 = vld [vmem:[%s7 + $0x108] sm:$0xf]
        %v3548 = vld [vmem:[%s7 + $0x10c] sm:$0xf]
        %v3549 = vld [vmem:[%s7 + $0x110] sm:$0xf]
        %v3550 = vld [vmem:[%s7 + $0x114] sm:$0xf]
        %v3551 = vld [vmem:[%s7 + $0x118] sm:$0xf]
        %v3552 = vld [vmem:[%s7 + $0x11c] sm:$0xf]
        %v3553 = vld [vmem:[%s7 + $0x120] sm:$0xf]
        %v3554 = vld [vmem:[%s7 + $0x124] sm:$0xf]
        %v3555 = vld [vmem:[%s7 + $0x128] sm:$0xf]
        %v3556 = vld [vmem:[%s7 + $0x12c] sm:$0xf]
        %v3557 = vld [vmem:[%s7 + $0x130] sm:$0xf]
        %v3558 = vld [vmem:[%s7 + $0x134] sm:$0xf]
        %v3559 = vld [vmem:[%s7 + $0x138] sm:$0xf]
        %v3560 = vld [vmem:[%s7 + $0x13c] sm:$0xf]
        %v3561 = vld [vmem:[%s7 + $0x140] sm:$0xf]
        %v3562 = vld [vmem:[%s7 + $0x144] sm:$0xf]
        %v3563 = vld [vmem:[%s7 + $0x148] sm:$0xf]
        %v3564 = vld [vmem:[%s7 + $0x14c] sm:$0xf]
        %v3565 = vld [vmem:[%s7 + $0x150] sm:$0xf]
        %v3566 = vld [vmem:[%s7 + $0x154] sm:$0xf]
        %v3567 = vld [vmem:[%s7 + $0x158] sm:$0xf]
        %v3568 = vld [vmem:[%s7 + $0x15c] sm:$0xf]
        %v3569 = vld [vmem:[%s7 + $0x160] sm:$0xf]
        %v3570 = vld [vmem:[%s7 + $0x164] sm:$0xf]
        %v3571 = vld [vmem:[%s7 + $0x168] sm:$0xf]
        %v3572 = vld [vmem:[%s7 + $0x16c] sm:$0xf]
        %v3573 = vld [vmem:[%s7 + $0x170] sm:$0xf]
        %v3574 = vld [vmem:[%s7 + $0x174] sm:$0xf]
        %v3575 = vld [vmem:[%s7 + $0x178] sm:$0xf]
        %v3576 = vld [vmem:[%s7 + $0x17c] sm:$0xf]
        %v3577 = vld [vmem:[%s7 + $0x180] sm:$0xf]
        %v3578 = vld [vmem:[%s7 + $0x184] sm:$0xf]
        %v3579 = vld [vmem:[%s7 + $0x188] sm:$0xf]
        %v3580 = vld [vmem:[%s7 + $0x18c] sm:$0xf]
        %v3581 = vld [vmem:[%s7 + $0x190] sm:$0xf]
        %v3582 = vld [vmem:[%s7 + $0x194] sm:$0xf]
        %v3583 = vld [vmem:[%s7 + $0x198] sm:$0xf]
        %v3584 = vld [vmem:[%s7 + $0x19c] sm:$0xf]
        %v3585 = vld [vmem:[%s7 + $0x1a0] sm:$0xf]
        %v3586 = vld [vmem:[%s7 + $0x1a4] sm:$0xf]
        %v3587 = vld [vmem:[%s7 + $0x1a8] sm:$0xf]
        %v3588 = vld [vmem:[%s7 + $0x1ac] sm:$0xf]
        %v3589 = vld [vmem:[%s7 + $0x1b0] sm:$0xf]
        %v3590 = vld [vmem:[%s7 + $0x1b4] sm:$0xf]
        %v3591 = vld [vmem:[%s7 + $0x1b8] sm:$0xf]
        %v3592 = vld [vmem:[%s7 + $0x1bc] sm:$0xf]
        %v3593 = vld [vmem:[%s7 + $0x1c0] sm:$0xf]
        %v3594 = vld [vmem:[%s7 + $0x1c4] sm:$0xf]
        %v3595 = vld [vmem:[%s7 + $0x1c8] sm:$0xf]
        %v3596 = vld [vmem:[%s7 + $0x1cc] sm:$0xf]
        %v3597 = vld [vmem:[%s7 + $0x1d0] sm:$0xf]
        %v3598 = vld [vmem:[%s7 + $0x1d4] sm:$0xf]
        %v3599 = vld [vmem:[%s7 + $0x1d8] sm:$0xf]
        %v3600 = vld [vmem:[%s7 + $0x1dc] sm:$0xf]
        %v3601 = vld [vmem:[%s7 + $0x1e0] sm:$0xf]
        %v3602 = vld [vmem:[%s7 + $0x1e4] sm:$0xf]
        %v3603 = vld [vmem:[%s7 + $0x1e8] sm:$0xf]
        %v3604 = vld [vmem:[%s7 + $0x1ec] sm:$0xf]
        %v3605 = vld [vmem:[%s7 + $0x1f0] sm:$0xf]
        %v3606 = vld [vmem:[%s7 + $0x1f4] sm:$0xf]
        %v3607 = vld [vmem:[%s7 + $0x1f8] sm:$0xf]
        %v3608 = vld [vmem:[%s7 + $0x1fc] sm:$0xf]
        %v3609 = vld [vmem:[%s7 + $0x200] sm:$0xf]
        %v3610 = vld [vmem:[%s7 + $0x204] sm:$0xf]
        %v3611 = vld [vmem:[%s7 + $0x208] sm:$0xf]
        %v3612 = vld [vmem:[%s7 + $0x20c] sm:$0xf]
        %v3613 = vld [vmem:[%s7 + $0x210] sm:$0xf]
        %v3614 = vld [vmem:[%s7 + $0x214] sm:$0xf]
        %v3615 = vld [vmem:[%s7 + $0x218] sm:$0xf]
        %v3616 = vld [vmem:[%s7 + $0x21c] sm:$0xf]
        %v3617 = vld [vmem:[%s7 + $0x220] sm:$0xf]
        %v3618 = vld [vmem:[%s7 + $0x224] sm:$0xf]
        %v3619 = vld [vmem:[%s7 + $0x228] sm:$0xf]
        %v3620 = vld [vmem:[%s7 + $0x22c] sm:$0xf]
        %v3622 = vunpack.c.l.b16 %v3479
        %v3623 = vunpack.c.h.b16 %v3479
        %v3624 = vpack.c.b16 %v3622, %v3622
        %v3625 = vpack.c.b16 %v3623, %v3623
        %v3627 = vshrl.u32 %v3624, 16
        %v3629 = vshll.u32 %v3624, 16
        %v3631 = vrot.slane %v3629, 1
        %v3632 = vor.u32 %v3627, %v3631
        %v3634 = vshrl.u32 %v3625, 16
        %v3636 = vshll.u32 %v3625, 16
        %v3638 = vrot.slane %v3636, 1
        %v3639 = vor.u32 %v3634, %v3638
        %v3661 = vunpack.c.l.b16 %v3501
        %v3662 = vunpack.c.l.b16 %v3502
        %v3663 = vunpack.c.l.b16 %v3503
        %v3664 = vunpack.c.l.b16 %v3504
        %v3665 = vunpack.c.l.b16 %v3505
        %v3666 = vunpack.c.l.b16 %v3506
        %v3667 = vunpack.c.l.b16 %v3507
        %v3668 = vunpack.c.l.b16 %v3508
        %v3669 = vunpack.c.l.b16 %v3509
        %v3670 = vunpack.c.l.b16 %v3510
        %v3671 = vunpack.c.l.b16 %v3511
        %v3672 = vunpack.c.l.b16 %v3512
        %v3673 = vunpack.c.l.b16 %v3513
        %v3674 = vunpack.c.l.b16 %v3514
        %v3675 = vunpack.c.l.b16 %v3515
        %v3676 = vunpack.c.l.b16 %v3516
        %v3677 = vunpack.c.l.b16 %v3517
        %v3678 = vunpack.c.l.b16 %v3518
        %v3679 = vunpack.c.l.b16 %v3519
        %v3680 = vunpack.c.l.b16 %v3520
        %v3681 = vpack.c.b16 %v3662, %v3661
        %v3682 = vpack.c.b16 %v3664, %v3663
        %v3683 = vpack.c.b16 %v3666, %v3665
        %v3684 = vpack.c.b16 %v3668, %v3667
        %v3685 = vpack.c.b16 %v3670, %v3669
        %v3686 = vpack.c.b16 %v3672, %v3671
        %v3687 = vpack.c.b16 %v3674, %v3673
        %v3688 = vpack.c.b16 %v3676, %v3675
        %v3689 = vpack.c.b16 %v3678, %v3677
        %v3690 = vpack.c.b16 %v3680, %v3679
        %vm3701 = vcmask 261120
        %v3703 = vsel %vm3701, %v3639, 0
        %3705 = vmatpush.bf16.msra.mxu0 %v3688
        %3706 = vmatpush.bf16.msra.mxu0 %v3687
        %3707 = vmatpush.bf16.msra.mxu0 %v3686
        %3708 = vmatpush.bf16.msra.mxu0 %v3685
        %3709 = vmatpush.bf16.msra.mxu0 %v3684
        %3710 = vmatpush.bf16.msra.mxu0 %v3683
        %3711 = vmatpush.bf16.msra.mxu0 %v3682
        %3712 = vmatpush.bf16.msra.mxu0 %v3681
        %3713 = vmatmul.bf16.gmra.mxu0 %v3632
        %v3714 = vpop.f32.mrf.mxu0
        %v3715 = vadd.f32 0.0, %v3714
        %v3716 = vpop.f32.mrf.mxu0
        %3717 = vdwg.mxu0
        %3718 = vmatpush.bf16.msra.mxu0 0
        %3719 = vmatpush.bf16.msra.mxu0 0
        %3720 = vmatpush.bf16.msra.mxu0 0
        %3721 = vmatpush.bf16.msra.mxu0 0
        %3722 = vmatpush.bf16.msra.mxu0 0
        %3723 = vmatpush.bf16.msra.mxu0 0
        %3724 = vmatpush.bf16.msra.mxu0 %v3690
        %3725 = vmatpush.bf16.msra.mxu0 %v3689
        %3726 = vmatmul.bf16.gmra.mxu0 %v3703
        %v3727 = vpop.f32.mrf.mxu0
        %v3728 = vadd.f32 %v3715, %v3727
        %v3729 = vpop.f32.mrf.mxu0
        %3730 = vdwg.mxu0
        %v3752 = vunpack.c.l.b16 %v3481
        %v3753 = vunpack.c.l.b16 %v3482
        %v3754 = vunpack.c.l.b16 %v3483
        %v3755 = vunpack.c.l.b16 %v3484
        %v3756 = vunpack.c.l.b16 %v3485
        %v3757 = vunpack.c.l.b16 %v3486
        %v3758 = vunpack.c.l.b16 %v3487
        %v3759 = vunpack.c.l.b16 %v3488
        %v3760 = vunpack.c.l.b16 %v3489
        %v3761 = vunpack.c.l.b16 %v3490
        %v3762 = vunpack.c.l.b16 %v3491
        %v3763 = vunpack.c.l.b16 %v3492
        %v3764 = vunpack.c.l.b16 %v3493
        %v3765 = vunpack.c.l.b16 %v3494
        %v3766 = vunpack.c.l.b16 %v3495
        %v3767 = vunpack.c.l.b16 %v3496
        %v3768 = vunpack.c.l.b16 %v3497
        %v3769 = vunpack.c.l.b16 %v3498
        %v3770 = vunpack.c.l.b16 %v3499
        %v3771 = vunpack.c.l.b16 %v3500
        %v3772 = vpack.c.b16 %v3753, %v3752
        %v3773 = vpack.c.b16 %v3755, %v3754
        %v3774 = vpack.c.b16 %v3757, %v3756
        %v3775 = vpack.c.b16 %v3759, %v3758
        %v3776 = vpack.c.b16 %v3761, %v3760
        %v3777 = vpack.c.b16 %v3763, %v3762
        %v3778 = vpack.c.b16 %v3765, %v3764
        %v3779 = vpack.c.b16 %v3767, %v3766
        %v3780 = vpack.c.b16 %v3769, %v3768
        %v3781 = vpack.c.b16 %v3771, %v3770
        %v3792 = vsel %vm3701, %v3625, 0
        %3794 = vmatpush.bf16.msra.mxu0 %v3779
        %3795 = vmatpush.bf16.msra.mxu0 %v3778
        %3796 = vmatpush.bf16.msra.mxu0 %v3777
        %3797 = vmatpush.bf16.msra.mxu0 %v3776
        %3798 = vmatpush.bf16.msra.mxu0 %v3775
        %3799 = vmatpush.bf16.msra.mxu0 %v3774
        %3800 = vmatpush.bf16.msra.mxu0 %v3773
        %3801 = vmatpush.bf16.msra.mxu0 %v3772
        %3802 = vmatmul.bf16.gmra.mxu0 %v3624
        %v3803 = vpop.f32.mrf.mxu0
        %v3804 = vadd.f32 %v3728, %v3803
        %v3805 = vpop.f32.mrf.mxu0
        %3806 = vdwg.mxu0
        %3807 = vmatpush.bf16.msra.mxu0 0
        %3808 = vmatpush.bf16.msra.mxu0 0
        %3809 = vmatpush.bf16.msra.mxu0 0
        %3810 = vmatpush.bf16.msra.mxu0 0
        %3811 = vmatpush.bf16.msra.mxu0 0
        %3812 = vmatpush.bf16.msra.mxu0 0
        %3813 = vmatpush.bf16.msra.mxu0 %v3781
        %3814 = vmatpush.bf16.msra.mxu0 %v3780
        %3815 = vmatmul.bf16.gmra.mxu0 %v3792
        %v3816 = vpop.f32.mrf.mxu0
        %v3817 = vadd.f32 %v3804, %v3816
        %v3818 = vpop.f32.mrf.mxu0
        %3819 = vdwg.mxu0
        %v3820 = vrot.slane %v3624, 1
        %v3821 = vrot.slane %v3625, 1
        %v3843 = vunpack.c.l.b16 %v3521
        %v3844 = vunpack.c.l.b16 %v3522
        %v3845 = vunpack.c.l.b16 %v3523
        %v3846 = vunpack.c.l.b16 %v3524
        %v3847 = vunpack.c.l.b16 %v3525
        %v3848 = vunpack.c.l.b16 %v3526
        %v3849 = vunpack.c.l.b16 %v3527
        %v3850 = vunpack.c.l.b16 %v3528
        %v3851 = vunpack.c.l.b16 %v3529
        %v3852 = vunpack.c.l.b16 %v3530
        %v3853 = vunpack.c.l.b16 %v3531
        %v3854 = vunpack.c.l.b16 %v3532
        %v3855 = vunpack.c.l.b16 %v3533
        %v3856 = vunpack.c.l.b16 %v3534
        %v3857 = vunpack.c.l.b16 %v3535
        %v3858 = vunpack.c.l.b16 %v3536
        %v3859 = vunpack.c.l.b16 %v3537
        %v3860 = vunpack.c.l.b16 %v3538
        %v3861 = vunpack.c.l.b16 %v3539
        %v3862 = vunpack.c.l.b16 %v3540
        %v3863 = vpack.c.b16 %v3844, %v3843
        %v3864 = vpack.c.b16 %v3846, %v3845
        %v3865 = vpack.c.b16 %v3848, %v3847
        %v3866 = vpack.c.b16 %v3850, %v3849
        %v3867 = vpack.c.b16 %v3852, %v3851
        %v3868 = vpack.c.b16 %v3854, %v3853
        %v3869 = vpack.c.b16 %v3856, %v3855
        %v3870 = vpack.c.b16 %v3858, %v3857
        %v3871 = vpack.c.b16 %v3860, %v3859
        %v3872 = vpack.c.b16 %v3862, %v3861
        %v3884 = vsel %vm3701, %v3821, 0
        %3886 = vmatpush.bf16.msra.mxu0 %v3870
        %3887 = vmatpush.bf16.msra.mxu0 %v3869
        %3888 = vmatpush.bf16.msra.mxu0 %v3868
        %3889 = vmatpush.bf16.msra.mxu0 %v3867
        %3890 = vmatpush.bf16.msra.mxu0 %v3866
        %3891 = vmatpush.bf16.msra.mxu0 %v3865
        %3892 = vmatpush.bf16.msra.mxu0 %v3864
        %3893 = vmatpush.bf16.msra.mxu0 %v3863
        %3894 = vmatmul.bf16.gmra.mxu0 %v3820
        %v3895 = vpop.f32.mrf.mxu0
        %v3896 = vadd.f32 0.0, %v3895
        %v3897 = vpop.f32.mrf.mxu0
        %3898 = vdwg.mxu0
        %3899 = vmatpush.bf16.msra.mxu0 0
        %3900 = vmatpush.bf16.msra.mxu0 0
        %3901 = vmatpush.bf16.msra.mxu0 0
        %3902 = vmatpush.bf16.msra.mxu0 0
        %3903 = vmatpush.bf16.msra.mxu0 0
        %3904 = vmatpush.bf16.msra.mxu0 0
        %3905 = vmatpush.bf16.msra.mxu0 %v3872
        %3906 = vmatpush.bf16.msra.mxu0 %v3871
        %3907 = vmatmul.bf16.gmra.mxu0 %v3884
        %v3908 = vpop.f32.mrf.mxu0
        %v3909 = vadd.f32 %v3896, %v3908
        %v3910 = vpop.f32.mrf.mxu0
        %3911 = vdwg.mxu0
        %v3912 = vadd.f32 %v3817, %v3909
        %v3913 = vrot.slane %v3627, 1
        %v3914 = vrot.slane %v3629, 2
        %v3915 = vor.u32 %v3913, %v3914
        %v3916 = vrot.slane %v3634, 1
        %v3917 = vrot.slane %v3636, 2
        %v3918 = vor.u32 %v3916, %v3917
        %v3940 = vunpack.c.l.b16 %v3541
        %v3941 = vunpack.c.l.b16 %v3542
        %v3942 = vunpack.c.l.b16 %v3543
        %v3943 = vunpack.c.l.b16 %v3544
        %v3944 = vunpack.c.l.b16 %v3545
        %v3945 = vunpack.c.l.b16 %v3546
        %v3946 = vunpack.c.l.b16 %v3547
        %v3947 = vunpack.c.l.b16 %v3548
        %v3948 = vunpack.c.l.b16 %v3549
        %v3949 = vunpack.c.l.b16 %v3550
        %v3950 = vunpack.c.l.b16 %v3551
        %v3951 = vunpack.c.l.b16 %v3552
        %v3952 = vunpack.c.l.b16 %v3553
        %v3953 = vunpack.c.l.b16 %v3554
        %v3954 = vunpack.c.l.b16 %v3555
        %v3955 = vunpack.c.l.b16 %v3556
        %v3956 = vunpack.c.l.b16 %v3557
        %v3957 = vunpack.c.l.b16 %v3558
        %v3958 = vunpack.c.l.b16 %v3559
        %v3959 = vunpack.c.l.b16 %v3560
        %v3960 = vpack.c.b16 %v3941, %v3940
        %v3961 = vpack.c.b16 %v3943, %v3942
        %v3962 = vpack.c.b16 %v3945, %v3944
        %v3963 = vpack.c.b16 %v3947, %v3946
        %v3964 = vpack.c.b16 %v3949, %v3948
        %v3965 = vpack.c.b16 %v3951, %v3950
        %v3966 = vpack.c.b16 %v3953, %v3952
        %v3967 = vpack.c.b16 %v3955, %v3954
        %v3968 = vpack.c.b16 %v3957, %v3956
        %v3969 = vpack.c.b16 %v3959, %v3958
        %v3981 = vsel %vm3701, %v3918, 0
        %3983 = vmatpush.bf16.msra.mxu0 %v3967
        %3984 = vmatpush.bf16.msra.mxu0 %v3966
        %3985 = vmatpush.bf16.msra.mxu0 %v3965
        %3986 = vmatpush.bf16.msra.mxu0 %v3964
        %3987 = vmatpush.bf16.msra.mxu0 %v3963
        %3988 = vmatpush.bf16.msra.mxu0 %v3962
        %3989 = vmatpush.bf16.msra.mxu0 %v3961
        %3990 = vmatpush.bf16.msra.mxu0 %v3960
        %3991 = vmatmul.bf16.gmra.mxu0 %v3915
        %v3992 = vpop.f32.mrf.mxu0
        %v3993 = vadd.f32 0.0, %v3992
        %v3994 = vpop.f32.mrf.mxu0
        %3995 = vdwg.mxu0
        %3996 = vmatpush.bf16.msra.mxu0 0
        %3997 = vmatpush.bf16.msra.mxu0 0
        %3998 = vmatpush.bf16.msra.mxu0 0
        %3999 = vmatpush.bf16.msra.mxu0 0
        %4000 = vmatpush.bf16.msra.mxu0 0
        %4001 = vmatpush.bf16.msra.mxu0 0
        %4002 = vmatpush.bf16.msra.mxu0 %v3969
        %4003 = vmatpush.bf16.msra.mxu0 %v3968
        %4004 = vmatmul.bf16.gmra.mxu0 %v3981
        %v4005 = vpop.f32.mrf.mxu0
        %v4006 = vadd.f32 %v3993, %v4005
        %v4007 = vpop.f32.mrf.mxu0
        %4008 = vdwg.mxu0
        %v4009 = vadd.f32 %v3912, %v4006
        %v4010 = vrot.slane %v3624, 2
        %v4011 = vrot.slane %v3625, 2
        %v4033 = vunpack.c.l.b16 %v3561
        %v4034 = vunpack.c.l.b16 %v3562
        %v4035 = vunpack.c.l.b16 %v3563
        %v4036 = vunpack.c.l.b16 %v3564
        %v4037 = vunpack.c.l.b16 %v3565
        %v4038 = vunpack.c.l.b16 %v3566
        %v4039 = vunpack.c.l.b16 %v3567
        %v4040 = vunpack.c.l.b16 %v3568
        %v4041 = vunpack.c.l.b16 %v3569
        %v4042 = vunpack.c.l.b16 %v3570
        %v4043 = vunpack.c.l.b16 %v3571
        %v4044 = vunpack.c.l.b16 %v3572
        %v4045 = vunpack.c.l.b16 %v3573
        %v4046 = vunpack.c.l.b16 %v3574
        %v4047 = vunpack.c.l.b16 %v3575
        %v4048 = vunpack.c.l.b16 %v3576
        %v4049 = vunpack.c.l.b16 %v3577
        %v4050 = vunpack.c.l.b16 %v3578
        %v4051 = vunpack.c.l.b16 %v3579
        %v4052 = vunpack.c.l.b16 %v3580
        %v4053 = vpack.c.b16 %v4034, %v4033
        %v4054 = vpack.c.b16 %v4036, %v4035
        %v4055 = vpack.c.b16 %v4038, %v4037
        %v4056 = vpack.c.b16 %v4040, %v4039
        %v4057 = vpack.c.b16 %v4042, %v4041
        %v4058 = vpack.c.b16 %v4044, %v4043
        %v4059 = vpack.c.b16 %v4046, %v4045
        %v4060 = vpack.c.b16 %v4048, %v4047
        %v4061 = vpack.c.b16 %v4050, %v4049
        %v4062 = vpack.c.b16 %v4052, %v4051
        %v4074 = vsel %vm3701, %v4011, 0
        %4076 = vmatpush.bf16.msra.mxu0 %v4060
        %4077 = vmatpush.bf16.msra.mxu0 %v4059
        %4078 = vmatpush.bf16.msra.mxu0 %v4058
        %4079 = vmatpush.bf16.msra.mxu0 %v4057
        %4080 = vmatpush.bf16.msra.mxu0 %v4056
        %4081 = vmatpush.bf16.msra.mxu0 %v4055
        %4082 = vmatpush.bf16.msra.mxu0 %v4054
        %4083 = vmatpush.bf16.msra.mxu0 %v4053
        %4084 = vmatmul.bf16.gmra.mxu0 %v4010
        %v4085 = vpop.f32.mrf.mxu0
        %v4086 = vadd.f32 0.0, %v4085
        %v4087 = vpop.f32.mrf.mxu0
        %4088 = vdwg.mxu0
        %4089 = vmatpush.bf16.msra.mxu0 0
        %4090 = vmatpush.bf16.msra.mxu0 0
        %4091 = vmatpush.bf16.msra.mxu0 0
        %4092 = vmatpush.bf16.msra.mxu0 0
        %4093 = vmatpush.bf16.msra.mxu0 0
        %4094 = vmatpush.bf16.msra.mxu0 0
        %4095 = vmatpush.bf16.msra.mxu0 %v4062
        %4096 = vmatpush.bf16.msra.mxu0 %v4061
        %4097 = vmatmul.bf16.gmra.mxu0 %v4074
        %v4098 = vpop.f32.mrf.mxu0
        %v4099 = vadd.f32 %v4086, %v4098
        %v4100 = vpop.f32.mrf.mxu0
        %4101 = vdwg.mxu0
        %v4102 = vadd.f32 %v4009, %v4099
        %v4104 = vunpack.c.l.b16 %v3480
        %v4105 = vunpack.c.h.b16 %v3480
        %v4106 = vpack.c.b16 %v4104, %v3622
        %v4107 = vpack.c.b16 %v4105, %v3623
        %v4109 = vshrl.u32 %v4106, 16
        %v4111 = vrot.slane %v4109, 2
        %v4112 = vshll.u32 %v4106, 16
        %v4114 = vrot.slane %v4112, 3
        %v4115 = vor.u32 %v4111, %v4114
        %v4117 = vshrl.u32 %v4107, 16
        %v4119 = vrot.slane %v4117, 2
        %v4120 = vshll.u32 %v4107, 16
        %v4122 = vrot.slane %v4120, 3
        %v4123 = vor.u32 %v4119, %v4122
        %v4145 = vunpack.c.l.b16 %v3581
        %v4146 = vunpack.c.l.b16 %v3582
        %v4147 = vunpack.c.l.b16 %v3583
        %v4148 = vunpack.c.l.b16 %v3584
        %v4149 = vunpack.c.l.b16 %v3585
        %v4150 = vunpack.c.l.b16 %v3586
        %v4151 = vunpack.c.l.b16 %v3587
        %v4152 = vunpack.c.l.b16 %v3588
        %v4153 = vunpack.c.l.b16 %v3589
        %v4154 = vunpack.c.l.b16 %v3590
        %v4155 = vunpack.c.l.b16 %v3591
        %v4156 = vunpack.c.l.b16 %v3592
        %v4157 = vunpack.c.l.b16 %v3593
        %v4158 = vunpack.c.l.b16 %v3594
        %v4159 = vunpack.c.l.b16 %v3595
        %v4160 = vunpack.c.l.b16 %v3596
        %v4161 = vunpack.c.l.b16 %v3597
        %v4162 = vunpack.c.l.b16 %v3598
        %v4163 = vunpack.c.l.b16 %v3599
        %v4164 = vunpack.c.l.b16 %v3600
        %v4165 = vpack.c.b16 %v4146, %v4145
        %v4166 = vpack.c.b16 %v4148, %v4147
        %v4167 = vpack.c.b16 %v4150, %v4149
        %v4168 = vpack.c.b16 %v4152, %v4151
        %v4169 = vpack.c.b16 %v4154, %v4153
        %v4170 = vpack.c.b16 %v4156, %v4155
        %v4171 = vpack.c.b16 %v4158, %v4157
        %v4172 = vpack.c.b16 %v4160, %v4159
        %v4173 = vpack.c.b16 %v4162, %v4161
        %v4174 = vpack.c.b16 %v4164, %v4163
        %v4186 = vsel %vm3701, %v4123, 0
        %4188 = vmatpush.bf16.msra.mxu0 %v4172
        %4189 = vmatpush.bf16.msra.mxu0 %v4171
        %4190 = vmatpush.bf16.msra.mxu0 %v4170
        %4191 = vmatpush.bf16.msra.mxu0 %v4169
        %4192 = vmatpush.bf16.msra.mxu0 %v4168
        %4193 = vmatpush.bf16.msra.mxu0 %v4167
        %4194 = vmatpush.bf16.msra.mxu0 %v4166
        %4195 = vmatpush.bf16.msra.mxu0 %v4165
        %4196 = vmatmul.bf16.gmra.mxu0 %v4115
        %v4197 = vpop.f32.mrf.mxu0
        %v4198 = vadd.f32 0.0, %v4197
        %v4199 = vpop.f32.mrf.mxu0
        %4200 = vdwg.mxu0
        %4201 = vmatpush.bf16.msra.mxu0 0
        %4202 = vmatpush.bf16.msra.mxu0 0
        %4203 = vmatpush.bf16.msra.mxu0 0
        %4204 = vmatpush.bf16.msra.mxu0 0
        %4205 = vmatpush.bf16.msra.mxu0 0
        %4206 = vmatpush.bf16.msra.mxu0 0
        %4207 = vmatpush.bf16.msra.mxu0 %v4174
        %4208 = vmatpush.bf16.msra.mxu0 %v4173
        %4209 = vmatmul.bf16.gmra.mxu0 %v4186
        %v4210 = vpop.f32.mrf.mxu0
        %v4211 = vadd.f32 %v4198, %v4210
        %v4212 = vpop.f32.mrf.mxu0
        %4213 = vdwg.mxu0
        %v4214 = vadd.f32 %v4102, %v4211
        %v4215 = vrot.slane %v4106, 3
        %v4216 = vrot.slane %v4107, 3
        %v4238 = vunpack.c.l.b16 %v3601
        %v4239 = vunpack.c.l.b16 %v3602
        %v4240 = vunpack.c.l.b16 %v3603
        %v4241 = vunpack.c.l.b16 %v3604
        %v4242 = vunpack.c.l.b16 %v3605
        %v4243 = vunpack.c.l.b16 %v3606
        %v4244 = vunpack.c.l.b16 %v3607
        %v4245 = vunpack.c.l.b16 %v3608
        %v4246 = vunpack.c.l.b16 %v3609
        %v4247 = vunpack.c.l.b16 %v3610
        %v4248 = vunpack.c.l.b16 %v3611
        %v4249 = vunpack.c.l.b16 %v3612
        %v4250 = vunpack.c.l.b16 %v3613
        %v4251 = vunpack.c.l.b16 %v3614
        %v4252 = vunpack.c.l.b16 %v3615
        %v4253 = vunpack.c.l.b16 %v3616
        %v4254 = vunpack.c.l.b16 %v3617
        %v4255 = vunpack.c.l.b16 %v3618
        %v4256 = vunpack.c.l.b16 %v3619
        %v4257 = vunpack.c.l.b16 %v3620
        %v4258 = vpack.c.b16 %v4239, %v4238
        %v4259 = vpack.c.b16 %v4241, %v4240
        %v4260 = vpack.c.b16 %v4243, %v4242
        %v4261 = vpack.c.b16 %v4245, %v4244
        %v4262 = vpack.c.b16 %v4247, %v4246
        %v4263 = vpack.c.b16 %v4249, %v4248
        %v4264 = vpack.c.b16 %v4251, %v4250
        %v4265 = vpack.c.b16 %v4253, %v4252
        %v4266 = vpack.c.b16 %v4255, %v4254
        %v4267 = vpack.c.b16 %v4257, %v4256
        %v4279 = vsel %vm3701, %v4216, 0
        %4281 = vmatpush.bf16.msra.mxu0 %v4265
        %4282 = vmatpush.bf16.msra.mxu0 %v4264
        %4283 = vmatpush.bf16.msra.mxu0 %v4263
        %4284 = vmatpush.bf16.msra.mxu0 %v4262
        %4285 = vmatpush.bf16.msra.mxu0 %v4261
        %4286 = vmatpush.bf16.msra.mxu0 %v4260
        %4287 = vmatpush.bf16.msra.mxu0 %v4259
        %4288 = vmatpush.bf16.msra.mxu0 %v4258
        %4289 = vmatmul.bf16.gmra.mxu0 %v4215
        %v4290 = vpop.f32.mrf.mxu0
        %v4291 = vadd.f32 0.0, %v4290
        %v4292 = vpop.f32.mrf.mxu0
        %4293 = vdwg.mxu0
        %4294 = vmatpush.bf16.msra.mxu0 0
        %4295 = vmatpush.bf16.msra.mxu0 0
        %4296 = vmatpush.bf16.msra.mxu0 0
        %4297 = vmatpush.bf16.msra.mxu0 0
        %4298 = vmatpush.bf16.msra.mxu0 0
        %4299 = vmatpush.bf16.msra.mxu0 0
        %4300 = vmatpush.bf16.msra.mxu0 %v4267
        %4301 = vmatpush.bf16.msra.mxu0 %v4266
        %4302 = vmatmul.bf16.gmra.mxu0 %v4279
        %v4303 = vpop.f32.mrf.mxu0
        %v4304 = vadd.f32 %v4291, %v4303
        %v4305 = vpop.f32.mrf.mxu0
        %4306 = vdwg.mxu0
        %v4307 = vadd.f32 %v4214, %v4304
        %v4308 = vld [vmem:[%s8] sm:$0x1]
        %v4310 = vperm.slane %v4308, 0
        %v4312 = vadd.f32 %v4307, %v4310
        %v4313 = vmax.f32 %v4312, 0.0
        %v4314 = vpack.c.bf16 %v4313, %v4313
        %v4315 = vld [vmem:[%s9] sm:$0xf]
        %v4316 = vld [vmem:[%s9 + $0x4] sm:$0xf]
        %v4317 = vld [vmem:[%s9 + $0x8] sm:$0xf]
        %v4318 = vld [vmem:[%s9 + $0xc] sm:$0xf]
        %v4319 = vld [vmem:[%s9 + $0x10] sm:$0xf]
        %v4320 = vld [vmem:[%s9 + $0x14] sm:$0xf]
        %v4321 = vld [vmem:[%s9 + $0x18] sm:$0xf]
        %v4322 = vld [vmem:[%s9 + $0x1c] sm:$0xf]
        %v4323 = vld [vmem:[%s9 + $0x20] sm:$0xf]
        %v4324 = vld [vmem:[%s9 + $0x24] sm:$0xf]
        %v4325 = vld [vmem:[%s9 + $0x28] sm:$0xf]
        %v4326 = vld [vmem:[%s9 + $0x2c] sm:$0xf]
        %v4327 = vld [vmem:[%s9 + $0x30] sm:$0xf]
        %v4328 = vld [vmem:[%s9 + $0x34] sm:$0xf]
        %v4329 = vld [vmem:[%s9 + $0x38] sm:$0xf]
        %v4330 = vld [vmem:[%s9 + $0x3c] sm:$0xf]
        %v4331 = vld [vmem:[%s9 + $0x40] sm:$0xf]
        %v4332 = vld [vmem:[%s9 + $0x44] sm:$0xf]
        %v4333 = vld [vmem:[%s9 + $0x48] sm:$0xf]
        %v4334 = vld [vmem:[%s9 + $0x4c] sm:$0xf]
        %v4335 = vld [vmem:[%s9 + $0x50] sm:$0xf]
        %v4336 = vld [vmem:[%s9 + $0x54] sm:$0xf]
        %v4337 = vld [vmem:[%s9 + $0x58] sm:$0xf]
        %v4338 = vld [vmem:[%s9 + $0x5c] sm:$0xf]
        %v4339 = vld [vmem:[%s9 + $0x60] sm:$0xf]
        %v4340 = vld [vmem:[%s9 + $0x64] sm:$0xf]
        %v4341 = vld [vmem:[%s9 + $0x68] sm:$0xf]
        %v4342 = vld [vmem:[%s9 + $0x6c] sm:$0xf]
        %v4343 = vld [vmem:[%s9 + $0x70] sm:$0xf]
        %v4344 = vld [vmem:[%s9 + $0x74] sm:$0xf]
        %v4345 = vld [vmem:[%s9 + $0x78] sm:$0xf]
        %v4346 = vld [vmem:[%s9 + $0x7c] sm:$0xf]
        %v4348 = vunpack.c.l.b16 %v4314
        %v4349 = vpack.c.b16 %v4348, %v4348
        %v4351 = vshrl.u32 %v4349, 16
        %v4361 = vunpack.c.l.b16 %v4323
        %v4362 = vunpack.c.l.b16 %v4324
        %v4363 = vunpack.c.l.b16 %v4325
        %v4364 = vunpack.c.l.b16 %v4326
        %v4365 = vunpack.c.l.b16 %v4327
        %v4366 = vunpack.c.l.b16 %v4328
        %v4367 = vunpack.c.l.b16 %v4329
        %v4368 = vunpack.c.l.b16 %v4330
        %v4369 = vpack.c.b16 %v4362, %v4361
        %v4370 = vpack.c.b16 %v4364, %v4363
        %v4371 = vpack.c.b16 %v4366, %v4365
        %v4372 = vpack.c.b16 %v4368, %v4367
        %vm4377 = vcmask 523264
        %v4379 = vsel %vm4377, %v4351, 0
        %4381 = vmatpush.bf16.msra.mxu0 0
        %4382 = vmatpush.bf16.msra.mxu0 0
        %4383 = vmatpush.bf16.msra.mxu0 0
        %4384 = vmatpush.bf16.msra.mxu0 0
        %4385 = vmatpush.bf16.msra.mxu0 %v4372
        %4386 = vmatpush.bf16.msra.mxu0 %v4371
        %4387 = vmatpush.bf16.msra.mxu0 %v4370
        %4388 = vmatpush.bf16.msra.mxu0 %v4369
        %4389 = vmatmul.bf16.gmra.mxu0 %v4379
        %v4390 = vpop.f32.mrf.mxu0
        %v4391 = vadd.f32 0.0, %v4390
        %v4392 = vpop.f32.mrf.mxu0
        %4393 = vdwg.mxu0
        %v4402 = vunpack.c.l.b16 %v4315
        %v4403 = vunpack.c.l.b16 %v4316
        %v4404 = vunpack.c.l.b16 %v4317
        %v4405 = vunpack.c.l.b16 %v4318
        %v4406 = vunpack.c.l.b16 %v4319
        %v4407 = vunpack.c.l.b16 %v4320
        %v4408 = vunpack.c.l.b16 %v4321
        %v4409 = vunpack.c.l.b16 %v4322
        %v4410 = vpack.c.b16 %v4403, %v4402
        %v4411 = vpack.c.b16 %v4405, %v4404
        %v4412 = vpack.c.b16 %v4407, %v4406
        %v4413 = vpack.c.b16 %v4409, %v4408
        %v4419 = vsel %vm4377, %v4314, 0
        %4421 = vmatpush.bf16.msra.mxu0 0
        %4422 = vmatpush.bf16.msra.mxu0 0
        %4423 = vmatpush.bf16.msra.mxu0 0
        %4424 = vmatpush.bf16.msra.mxu0 0
        %4425 = vmatpush.bf16.msra.mxu0 %v4413
        %4426 = vmatpush.bf16.msra.mxu0 %v4412
        %4427 = vmatpush.bf16.msra.mxu0 %v4411
        %4428 = vmatpush.bf16.msra.mxu0 %v4410
        %4429 = vmatmul.bf16.gmra.mxu0 %v4419
        %v4430 = vpop.f32.mrf.mxu0
        %v4431 = vadd.f32 %v4391, %v4430
        %v4432 = vpop.f32.mrf.mxu0
        %4433 = vdwg.mxu0
        %v4434 = vrot.slane %v4349, 1
        %v4443 = vunpack.c.l.b16 %v4331
        %v4444 = vunpack.c.l.b16 %v4332
        %v4445 = vunpack.c.l.b16 %v4333
        %v4446 = vunpack.c.l.b16 %v4334
        %v4447 = vunpack.c.l.b16 %v4335
        %v4448 = vunpack.c.l.b16 %v4336
        %v4449 = vunpack.c.l.b16 %v4337
        %v4450 = vunpack.c.l.b16 %v4338
        %v4451 = vpack.c.b16 %v4444, %v4443
        %v4452 = vpack.c.b16 %v4446, %v4445
        %v4453 = vpack.c.b16 %v4448, %v4447
        %v4454 = vpack.c.b16 %v4450, %v4449
        %v4460 = vsel %vm4377, %v4434, 0
        %4462 = vmatpush.bf16.msra.mxu0 0
        %4463 = vmatpush.bf16.msra.mxu0 0
        %4464 = vmatpush.bf16.msra.mxu0 0
        %4465 = vmatpush.bf16.msra.mxu0 0
        %4466 = vmatpush.bf16.msra.mxu0 %v4454
        %4467 = vmatpush.bf16.msra.mxu0 %v4453
        %4468 = vmatpush.bf16.msra.mxu0 %v4452
        %4469 = vmatpush.bf16.msra.mxu0 %v4451
        %4470 = vmatmul.bf16.gmra.mxu0 %v4460
        %v4471 = vpop.f32.mrf.mxu0
        %v4472 = vadd.f32 0.0, %v4471
        %v4473 = vpop.f32.mrf.mxu0
        %4474 = vdwg.mxu0
        %v4475 = vadd.f32 %v4431, %v4472
        %v4476 = vrot.slane %v4351, 1
        %v4485 = vunpack.c.l.b16 %v4339
        %v4486 = vunpack.c.l.b16 %v4340
        %v4487 = vunpack.c.l.b16 %v4341
        %v4488 = vunpack.c.l.b16 %v4342
        %v4489 = vunpack.c.l.b16 %v4343
        %v4490 = vunpack.c.l.b16 %v4344
        %v4491 = vunpack.c.l.b16 %v4345
        %v4492 = vunpack.c.l.b16 %v4346
        %v4493 = vpack.c.b16 %v4486, %v4485
        %v4494 = vpack.c.b16 %v4488, %v4487
        %v4495 = vpack.c.b16 %v4490, %v4489
        %v4496 = vpack.c.b16 %v4492, %v4491
        %v4502 = vsel %vm4377, %v4476, 0
        %4504 = vmatpush.bf16.msra.mxu0 0
        %4505 = vmatpush.bf16.msra.mxu0 0
        %4506 = vmatpush.bf16.msra.mxu0 0
        %4507 = vmatpush.bf16.msra.mxu0 0
        %4508 = vmatpush.bf16.msra.mxu0 %v4496
        %4509 = vmatpush.bf16.msra.mxu0 %v4495
        %4510 = vmatpush.bf16.msra.mxu0 %v4494
        %4511 = vmatpush.bf16.msra.mxu0 %v4493
        %4512 = vmatmul.bf16.gmra.mxu0 %v4502
        %v4513 = vpop.f32.mrf.mxu0
        %v4514 = vadd.f32 0.0, %v4513
        %v4515 = vpop.f32.mrf.mxu0
        %4516 = vdwg.mxu0
        %v4517 = vadd.f32 %v4475, %v4514
        %v4518 = vld [vmem:[%s10] sm:$0x1]
        %v4519 = vadd.f32 %v4517, %v4518
        %v4520 = vmax.f32 %v4519, 0.0
        %v4521 = vpack.c.bf16 %v4520, %v4520
        %v4522 = vld [vmem:[%s11] sm:$0xf]
        %v4523 = vld [vmem:[%s11 + $0x4] sm:$0xf]
        %v4524 = vld [vmem:[%s11 + $0x8] sm:$0xf]
        %v4525 = vld [vmem:[%s11 + $0xc] sm:$0xf]
        %v4526 = vld [vmem:[%s11 + $0x10] sm:$0xf]
        %v4527 = vld [vmem:[%s11 + $0x14] sm:$0xf]
        %v4528 = vld [vmem:[%s11 + $0x18] sm:$0xf]
        %v4529 = vld [vmem:[%s11 + $0x1c] sm:$0xf]
        %v4530 = vld [vmem:[%s11 + $0x20] sm:$0xf]
        %v4531 = vld [vmem:[%s11 + $0x24] sm:$0xf]
        %v4532 = vld [vmem:[%s11 + $0x28] sm:$0xf]
        %v4533 = vld [vmem:[%s11 + $0x2c] sm:$0xf]
        %v4534 = vld [vmem:[%s11 + $0x30] sm:$0xf]
        %v4535 = vld [vmem:[%s11 + $0x34] sm:$0xf]
        %v4536 = vld [vmem:[%s11 + $0x38] sm:$0xf]
        %v4537 = vld [vmem:[%s12] sm:$0x1]
        %v4553 = vunpack.c.l.b16 %v4522
        %v4554 = vunpack.c.l.b16 %v4523
        %v4555 = vunpack.c.l.b16 %v4524
        %v4556 = vunpack.c.l.b16 %v4525
        %v4557 = vunpack.c.l.b16 %v4526
        %v4558 = vunpack.c.l.b16 %v4527
        %v4559 = vunpack.c.l.b16 %v4528
        %v4560 = vunpack.c.l.b16 %v4529
        %v4561 = vunpack.c.l.b16 %v4530
        %v4562 = vunpack.c.l.b16 %v4531
        %v4563 = vunpack.c.l.b16 %v4532
        %v4564 = vunpack.c.l.b16 %v4533
        %v4565 = vunpack.c.l.b16 %v4534
        %v4566 = vunpack.c.l.b16 %v4535
        %v4567 = vunpack.c.l.b16 %v4536
        %v4568 = vpack.c.b16 %v4554, %v4553
        %v4569 = vpack.c.b16 %v4556, %v4555
        %v4570 = vpack.c.b16 %v4558, %v4557
        %v4571 = vpack.c.b16 %v4560, %v4559
        %v4572 = vpack.c.b16 %v4562, %v4561
        %v4573 = vpack.c.b16 %v4564, %v4563
        %v4574 = vpack.c.b16 %v4566, %v4565
        %v4575 = vpack.c.b16 %v4567, %v4567
        %vm4583 = vcmask 982016
        %v4585 = vsel %vm4583, %v4521, 0
        %vm4587 = vcmask 1043456
        %v4589 = vsel %vm4587, %v4575, 0
        %4591 = vmatpush.bf16.msra.mxu0 %v4589
        %4592 = vmatpush.bf16.msra.mxu0 %v4574
        %4593 = vmatpush.bf16.msra.mxu0 %v4573
        %4594 = vmatpush.bf16.msra.mxu0 %v4572
        %4595 = vmatpush.bf16.msra.mxu0 %v4571
        %4596 = vmatpush.bf16.msra.mxu0 %v4570
        %4597 = vmatpush.bf16.msra.mxu0 %v4569
        %4598 = vmatpush.bf16.msra.mxu0 %v4568
        %4599 = vmatmul.bf16.gmra.mxu0 %v4585
        %v4600 = vpop.f32.mrf.mxu0
        %v4601 = vadd.f32 %v4537, %v4600
        %v4602 = vpop.f32.mrf.mxu0
        %4603 = vdwg.mxu0
        %v4604 = vmax.f32 %v4601, 0.0
        %v4605 = vpack.c.bf16 %v4604, %v4604
        %v4606 = vld [vmem:[%s13] sm:$0xf]
        %v4607 = vld [vmem:[%s13 + $0x4] sm:$0xf]
        %v4608 = vld [vmem:[%s13 + $0x8] sm:$0xf]
        %v4609 = vld [vmem:[%s13 + $0xc] sm:$0xf]
        %v4610 = vld [vmem:[%s13 + $0x10] sm:$0xf]
        %v4611 = vld [vmem:[%s13 + $0x14] sm:$0xf]
        %v4612 = vld [vmem:[%s13 + $0x18] sm:$0xf]
        %v4613 = vld [vmem:[%s13 + $0x1c] sm:$0xf]
        %v4614 = vld [vmem:[%s13 + $0x20] sm:$0xf]
        %v4615 = vld [vmem:[%s13 + $0x24] sm:$0xf]
        %v4616 = vld [vmem:[%s13 + $0x28] sm:$0x3]
        %v4617 = vld [vmem:[%s14] sm:$0x1]
        %v4629 = vunpack.c.l.b16 %v4606
        %v4630 = vunpack.c.l.b16 %v4607
        %v4631 = vunpack.c.l.b16 %v4608
        %v4632 = vunpack.c.l.b16 %v4609
        %v4633 = vunpack.c.l.b16 %v4610
        %v4634 = vunpack.c.l.b16 %v4611
        %v4635 = vunpack.c.l.b16 %v4612
        %v4636 = vunpack.c.l.b16 %v4613
        %v4637 = vunpack.c.l.b16 %v4614
        %v4638 = vunpack.c.l.b16 %v4615
        %v4639 = vunpack.c.l.b16 %v4616
        %v4640 = vpack.c.b16 %v4630, %v4629
        %v4641 = vpack.c.b16 %v4632, %v4631
        %v4642 = vpack.c.b16 %v4634, %v4633
        %v4643 = vpack.c.b16 %v4636, %v4635
        %v4644 = vpack.c.b16 %v4638, %v4637
        %v4645 = vpack.c.b16 %v4639, %v4639
        %vm4651 = vcmask 687104
        %v4653 = vsel %vm4651, %v4605, 0
        %vm4655 = vcmask 1041408
        %v4657 = vsel %vm4655, %v4645, 0
        %4659 = vmatpush.bf16.msra.mxu0 0
        %4660 = vmatpush.bf16.msra.mxu0 0
        %4661 = vmatpush.bf16.msra.mxu0 %v4657
        %4662 = vmatpush.bf16.msra.mxu0 %v4644
        %4663 = vmatpush.bf16.msra.mxu0 %v4643
        %4664 = vmatpush.bf16.msra.mxu0 %v4642
        %4665 = vmatpush.bf16.msra.mxu0 %v4641
        %4666 = vmatpush.bf16.msra.mxu0 %v4640
        %4667 = vmatmul.bf16.gmra.mxu0 %v4653
        %v4668 = vpop.f32.mrf.mxu0
        %v4669 = vadd.f32 %v4617, %v4668
        %v4670 = vpop.f32.mrf.mxu0
        %4671 = vdwg.mxu0
        %vm4672 = vcmask 73728
        %4673 = vst.msk [vmem:[%s486] sm:$0x1] %vm4672, %v4669
        %s4674 = sand.u32 %s357, 1
        %s4675 = scalar_lea.sflag [#allocation3], %s4674
        %s4676 = sand.u32 %s357, 1
        %s4677 = scalar_lea.vmem [#allocation2], %s4676
        // Predicated region
        $region81: #{cifar_cnn_nopool_forward.1} parent=79 // pred_check
          %p4678 = pneg %p367
        $region82: #{cifar_cnn_nopool_forward.1} parent=79 // pred_check_branch
          %4680 = sbr.rel (%p4678) target = $region84
        $region83: #{cifar_cnn_nopool_forward.1} parent=79 // pred_region
          %4682 = vsyncadd %s4675, 0
          %s4683 = scalar_lea.hbm %s15, %s29
          %s4685 = sshll.u32 %s4677, 4
          %s4686 = int_to_ptr.vmem [resolvable:$true] %s4685
          %s4687 = sshll.u32 %s4683, 4
          %s4688 = int_to_ptr.hbm [resolvable:$true] %s4687
          %4690 = dma.vmem_to_hbm [thread:$0]  %s4686, 16, %s4688, %s4675
        $region84: #{cifar_cnn_nopool_forward.1} parent=79 // pred_fallthru
          _
      $region80: #{cifar_cnn_nopool_forward.1} parent=5 // pred_fallthru
        _
      %p4691 = scmp.le.s32.totalorder 2, %s24
      // Predicated region
      $region85: #{cifar_cnn_nopool_forward.1} parent=5 // pred_check
        %p4692 = pneg %p4691
      $region86: #{cifar_cnn_nopool_forward.1} parent=5 // pred_check_branch
        %4694 = sbr.rel (%p4692) target = $region88
      $region87: #{cifar_cnn_nopool_forward.1} parent=5 // pred_region
        %s4695 = ssub.s32 %s24, 2
        // Predicated region
        $region89: #{cifar_cnn_nopool_forward.1} parent=87 // pred_check
          %p4696 = pneg %p373
        $region90: #{cifar_cnn_nopool_forward.1} parent=87 // pred_check_branch
          %4698 = sbr.rel (%p4696) target = $region92
        $region91: #{cifar_cnn_nopool_forward.1} parent=87 // pred_region
          %s4699 = sand.u32 %s358, 1
          %s4700 = scalar_lea.sflag [#allocation3], %s4699
          %s4701 = sand.u32 %s358, 1
          %s4702 = scalar_lea.vmem [#allocation2], %s4701
          %4704 = dma.done %s4700, 16
        $region92: #{cifar_cnn_nopool_forward.1} parent=87 // pred_fallthru
          _
      $region88: #{cifar_cnn_nopool_forward.1} parent=5 // pred_fallthru
        _
    $region6: #{cifar_cnn_nopool_forward.1} parent=1 // loop_footer
      %s28 = sadd.s32 1, %s24
    $region7: #{cifar_cnn_nopool_forward.1} parent=1 // loop_footer_branch
      %23 = sbr.rel target = $region3
    $region8: #{cifar_cnn_nopool_forward.1} parent=1 // loop_exit
      _
    %4705 = vsyncpa [#allocation3], 1
    %s4706 = scalar_lea.sflag [#allocation3], 1
    %4707 = vsyncpa %s4706, 1

</llo_original>
